<compile_context>
chip_gen: v6e
topology: v6e:2x2x1
jax: 0.10.0
libtpu: 0.0.40
codegen_flags: <defaults>
</compile_context>

<pallas_src>
import jax
import jax.numpy as jnp
from jax import lax
from jax.experimental import pallas as pl
from jax.experimental.pallas import tpu as pltpu


def _elu_plus_one(x):
    # F.elu(x) + 1 (alpha = 1). jnp.where is a true select: the exp branch cannot
    # poison the x > 0 lanes (would only matter if rewritten as a mask-multiply).
    return jnp.where(x > 0, x + 1.0, jnp.exp(x))


def _make_kernel(Bt, L, S, HDk, HDv, mxu_dtype, fuse_num_den):
    f32 = jnp.float32

    def kernel(q_ref, k_ref, v_ref,
               wq_ref, bq_ref, wk_ref, bk_ref, wv_ref, bv_ref,
               wo_ref, bo_ref, mask_ref, o_ref):
        # ---- projections: full-width (rows, Dm) @ (Dm, H*D) MXU matmuls ----
        # inputs/weights arrive pre-cast (bf16 in production); accumulate in f32,
        # add the f32 bias after the matmul.
        Q = jnp.dot(q_ref[...], wq_ref[...], preferred_element_type=f32) + bq_ref[...]
        K = jnp.dot(k_ref[...], wk_ref[...], preferred_element_type=f32) + bk_ref[...]
        V = jnp.dot(v_ref[...], wv_ref[...], preferred_element_type=f32) + bv_ref[...]

        # ---- feature map in f32: elu(x) + 1 ----
        Q_lin = _elu_plus_one(Q)                              # (Bt*L, HDk)
        K_lin = _elu_plus_one(K)                              # (Bt*S, HDk)

        # Batched views for the attention contractions (values, not refs; L and S
        # multiples of 8 keep these reshapes relayout-free).
        Q3 = Q_lin.astype(mxu_dtype).reshape(Bt, L, HDk)
        K3 = K_lin.astype(mxu_dtype).reshape(Bt, S, HDk)
        V3 = V.astype(mxu_dtype).reshape(Bt, S, HDv)

        # ---- K^T V contracted over S (no explicit transpose), batched over Bt ----
        KV = lax.dot_general(K3, V3,
                             dimension_numbers=(((1,), (1,)), ((0,), (0,))),
                             preferred_element_type=f32)      # (Bt, HDk, HDv)

        # Per-head K row-sums stay in f32 (denominator accuracy).
        Ksum = jnp.sum(K_lin.reshape(Bt, S, HDk), axis=1)     # (Bt, HDk)

        mask = mask_ref[...]                                  # (HDk, HDv) block-diag 0/1
        KVm = KV * mask[None]                                 # zero cross-head blocks
        Mden = Ksum[:, :, None] * mask[None]                  # (Bt, HDk, HDv)

        if fuse_num_den:
            # One MXU pass with 2*HDv output lanes: [numerator | denominator].
            rhs = jnp.concatenate([KVm, Mden], axis=-1).astype(mxu_dtype)
            nd = lax.dot_general(Q3, rhs,
                                 dimension_numbers=(((2,), (1,)), ((0,), (0,))),
                                 preferred_element_type=f32)  # (Bt, L, 2*HDv)
            num = nd[..., :HDv]
            den = nd[..., HDv:]
        else:
            num = lax.dot_general(Q3, KVm.astype(mxu_dtype),
                                  dimension_numbers=(((2,), (1,)), ((0,), (0,))),
                                  preferred_element_type=f32)  # (Bt, L, HDv)
            den = lax.dot_general(Q3, Mden.astype(mxu_dtype),
                                  dimension_numbers=(((2,), (1,)), ((0,), (0,))),
                                  preferred_element_type=f32)  # (Bt, L, HDv)

        # EUP approximate reciprocal (frees VALU slots); ~2^-12 relative error.
        V_lin = num * pl.reciprocal(den + 1e-10, approx=True)  # (Bt, L, HDv) f32

        # ---- output projection: one full-width matmul over the batch tile ----
        nv = V_lin.reshape(Bt * L, HDv).astype(mxu_dtype)
        out = jnp.dot(nv, wo_ref[...], preferred_element_type=f32) + bo_ref[...]
        # TODO(synk): for production Dm < 128 lanes, present a lane-dense output
        # (fold (L, Dm) -> L*Dm lanes wrapper-side) to avoid masked partial stores
        # on v5e's single vector-store slot.
        o_ref[...] = out.astype(o_ref.dtype)

    return kernel


def _vmem_plan(N, L, S, Dm, Dmk, Dmv, HDk, HDv, mxu_bytes, out_bytes,
               vmem_budget_bytes, max_rows):
    """Pick the largest batch tile that fits an explicit VMEM budget."""
    f32 = 4
    # Grid-invariant slab (weights + biases + mask); single-buffered when supported.
    const_bytes = ((Dm * HDk + Dmk * HDk + Dmv * HDv + HDv * Dm) * mxu_bytes
                   + (2 * HDk + HDv + Dm) * f32 + HDk * HDv * f32)

    def tile_bytes(bt):
        # Double-buffered pipelined q/k/v/out tiles.
        io = 2 * bt * ((L * Dm + S * Dmk + S * Dmv) * mxu_bytes + L * Dm * out_bytes)
        # f32 intermediates: Q, K, V, Q_lin, K_lin, KV, rhs, num/den, V_lin, out.
        inter = bt * (2 * L * HDk + 2 * S * HDk + S * HDv
                      + 3 * HDk * HDv + 3 * L * HDv + L * Dm) * f32
        return io + 2 * inter   # 2x slack for dtype copies / tile padding / spill

    # Keep >= 2 grid steps so ('parallel',) can shard across v7x's two TensorCores.
    cap = 1 if N < 2 else N // 2
    best = 1
    for bt in range(1, cap + 1):
        if (N % bt == 0 and bt * max(L, S) <= max_rows
                and const_bytes + tile_bytes(bt) <= vmem_budget_bytes):
            best = bt
    est = const_bytes + tile_bytes(best)
    # Never go below the 32 MiB default scoped limit; cap at v7x's 64 MiB physical VMEM.
    vmem_limit = int(min(64 * 2**20, max(32 * 2**20, 2 * est)))
    return best, est, const_bytes, vmem_limit


def linear_attention_layer(queries, keys, values, params, n_heads,
                           batch_tile=None, mxu_dtype=jnp.bfloat16,
                           vmem_budget_bytes=40 * 2**20, max_tile_rows=2048):
    """Non-causal LinearAttentionLayer forward (causal=False, return_QK=False).

    params: dict of pre-transposed weights (in_features, out_features) and (1, out) biases.
    mxu_dtype: dtype MXU operands are cast to (bf16 for production, f32 for exact checks).
    """
    N, L, Dm = queries.shape
    _, S, Dmk = keys.shape
    _, _, Dmv = values.shape
    out_dtype = queries.dtype
    H = n_heads
    HDk = params["wq"].shape[1]
    HDv = params["wv"].shape[1]
    Dk, Dv = HDk // H, HDv // H

    # TODO(synk): if per-head Dk ever reaches the MXU tile (128 on v5e, 256 on
    # v6e/v7x), switch the masked full-width KV/num/den contractions to
    # head-batched dot_generals to avoid H x redundant MACs.

    mxu_bytes = jnp.dtype(mxu_dtype).itemsize
    out_bytes = jnp.dtype(out_dtype).itemsize
    auto_bt, _est, const_bytes, vmem_limit = _vmem_plan(
        N, L, S, Dm, Dmk, Dmv, HDk, HDv, mxu_bytes, out_bytes,
        vmem_budget_bytes, max_tile_rows)
    Bt = batch_tile or auto_bt
    assert N % Bt == 0, "batch tile must divide N"

    # Block-diagonal 0/1 mask selecting same-head (d, m) pairs.
    d_head = jnp.arange(HDk) // Dk
    m_head = jnp.arange(HDv) // Dv
    kv_mask = (d_head[:, None] == m_head[None, :]).astype(jnp.float32)   # (HDk, HDv)

    # Wrapper-side flatten (no in-kernel relayout) + MXU dtype cast (halves q/k/v
    # DMA bytes and the resident weight slab when bf16). Biases stay f32.
    q2 = queries.reshape(N * L, Dm).astype(mxu_dtype)
    k2 = keys.reshape(N * S, Dmk).astype(mxu_dtype)
    v2 = values.reshape(N * S, Dmv).astype(mxu_dtype)
    wq = params["wq"].astype(mxu_dtype)
    wk = params["wk"].astype(mxu_dtype)
    wv = params["wv"].astype(mxu_dtype)
    wo = params["wo"].astype(mxu_dtype)
    bq = params["bq"].astype(jnp.float32)
    bk = params["bk"].astype(jnp.float32)
    bv = params["bv"].astype(jnp.float32)
    bo = params["bo"].astype(jnp.float32)

    # Advisory cost hint so XLA can schedule surrounding ops around the custom call.
    rows_q, rows_k = N * L, N * S
    flops = 2 * (rows_q * Dm * HDk + rows_k * Dmk * HDk + rows_k * Dmv * HDv
                 + N * S * HDk * HDv + N * L * HDk * 2 * HDv + rows_q * HDv * Dm)
    transcendentals = rows_q * HDk + rows_k * HDk + rows_q * HDv
    bytes_accessed = ((rows_q * Dm + rows_k * Dmk + rows_k * Dmv) * mxu_bytes
                      + rows_q * Dm * out_bytes + const_bytes)
    cost = pl.CostEstimate(flops=int(flops), transcendentals=int(transcendentals),
                           bytes_accessed=int(bytes_accessed))

    def build_and_run(single_buffer_weights, fuse_num_den):
        kernel = _make_kernel(Bt, L, S, HDk, HDv, mxu_dtype, fuse_num_den)

        def const_spec(a):
            nd = a.ndim
            idx = lambda n: (0,) * nd
            if single_buffer_weights:
                # Grid-invariant operand: one VMEM buffer instead of two.
                return pl.BlockSpec(a.shape, idx, pipeline_mode=pl.Buffered(1))
            return pl.BlockSpec(a.shape, idx)

        return pl.pallas_call(
            kernel,
            out_shape=jax.ShapeDtypeStruct((N * L, Dm), out_dtype),
            grid_spec=pltpu.PrefetchScalarGridSpec(
                num_scalar_prefetch=0,
                grid=(N // Bt,),
                in_specs=[
                    pl.BlockSpec((Bt * L, Dm), lambda n: (n, 0)),     # queries (2-D)
                    pl.BlockSpec((Bt * S, Dmk), lambda n: (n, 0)),    # keys    (2-D)
                    pl.BlockSpec((Bt * S, Dmv), lambda n: (n, 0)),    # values  (2-D)
                    const_spec(wq), const_spec(bq),
                    const_spec(wk), const_spec(bk),
                    const_spec(wv), const_spec(bv),
                    const_spec(wo), const_spec(bo),
                    const_spec(kv_mask),
                ],
                out_specs=pl.BlockSpec((Bt * L, Dm), lambda n: (n, 0)),
            ),
            compiler_params=pltpu.CompilerParams(
                dimension_semantics=("parallel",),
                vmem_limit_bytes=vmem_limit),
            cost_estimate=cost,
        )(q2, k2, v2, wq, bq, wk, bk, wv, bv, wo, bo, kv_mask)

    try:
        out2 = build_and_run(single_buffer_weights=True, fuse_num_den=True)
    except Exception:
        # Fallback for JAX/Mosaic versions without single-buffered pipeline_mode or
        # unaligned minor-dim concatenation: conservative (still bf16-capable) path.
        out2 = build_and_run(single_buffer_weights=False, fuse_num_den=False)

    return out2.reshape(N, L, Dm)


def reference_forward(queries, keys, values, params, n_heads):
    """Pure-JAX reference mirroring the PyTorch forward (causal=False, return_QK=False)."""
    N, L, Dm = queries.shape
    _, S, _ = keys.shape
    H = n_heads
    Q = queries @ params["wq"] + params["bq"]
    K = keys @ params["wk"] + params["bk"]
    V = values @ params["wv"] + params["bv"]
    Dk = Q.shape[-1] // H
    Dv = V.shape[-1] // H
    Q = Q.reshape(N, L, H, Dk)
    K = K.reshape(N, S, H, Dk)
    V = V.reshape(N, S, H, Dv)
    Q_lin = _elu_plus_one(Q)
    K_lin = _elu_plus_one(K)
    Z = 1.0 / (jnp.einsum('nlhd,nhd->nlh', Q_lin, K_lin.sum(axis=1)) + 1e-10)
    KV = jnp.einsum('nshd,nshm->nhmd', K_lin, V)
    V_lin = jnp.einsum('nlhd,nhmd,nlh->nlhm', Q_lin, KV, Z)
    new_values = V_lin.reshape(N, L, H * Dv)
    return new_values @ params["wo"] + params["bo"]


if __name__ == "__main__":
    # Small, module-consistent shapes: d_model=32, n_heads=4 -> d_keys=d_values=8.
    # N=4 with the auto-chosen batch tile (2) exercises a 2-step parallel grid.
    N, L, S, d_model, n_heads = 4, 8, 8, 32, 4
    d_keys = d_model // n_heads
    d_values = d_model // n_heads

    key = jax.random.PRNGKey(0)
    ks = jax.random.split(key, 16)

    def init_linear(kw, kb, fan_in, fan_out):
        bound = 1.0 / jnp.sqrt(fan_in)
        w = jax.random.uniform(kw, (fan_in, fan_out), jnp.float32, -bound, bound)
        b = jax.random.uniform(kb, (1, fan_out), jnp.float32, -bound, bound)
        return w, b

    wq, bq = init_linear(ks[0], ks[1], d_model, d_keys * n_heads)
    wk, bk = init_linear(ks[2], ks[3], d_model, d_keys * n_heads)
    wv, bv = init_linear(ks[4], ks[5], d_model, d_values * n_heads)
    wo, bo = init_linear(ks[6], ks[7], d_model, d_model)
    params = dict(wq=wq, bq=bq, wk=wk, bk=bk, wv=wv, bv=bv, wo=wo, bo=bo)

    queries = jax.random.normal(ks[8], (N, L, d_model), jnp.float32)
    keys_in = jax.random.normal(ks[9], (N, S, d_model), jnp.float32)
    values = jax.random.normal(ks[10], (N, S, d_model), jnp.float32)

    ref = reference_forward(queries, keys_in, values, params, n_heads)

    # 1) f32-MXU path: tight numerical check against the PyTorch-equivalent reference
    #    (only the approx reciprocal, ~2^-12 relative, separates them).
    out_f32 = linear_attention_layer(queries, keys_in, values, params, n_heads,
                                     mxu_dtype=jnp.float32)
    out_f32 = jax.block_until_ready(out_f32)
    assert out_f32.shape == (N, L, d_model)
    assert jnp.allclose(out_f32, ref, rtol=2e-3, atol=2e-3), "f32 path mismatch vs reference"

    # 2) Production bf16-MXU path (default): relaxed tolerance for bf16 operand rounding.
    out_bf16 = linear_attention_layer(queries, keys_in, values, params, n_heads)
    out_bf16 = jax.block_until_ready(out_bf16)
    assert out_bf16.shape == (N, L, d_model)
    assert jnp.allclose(out_bf16, ref, rtol=3e-2, atol=3e-2), "bf16 path mismatch vs reference"

    print("KERNEL_OK")
</pallas_src>

<mosaic_0001>
module attributes {stable_mosaic.version = 11 : i64} {
  func.func @kernel(%arg0: i32, %arg1: memref<16x32xf32, #tpu.memory_space<vmem>>, %arg2: memref<16x32xf32, #tpu.memory_space<vmem>>, %arg3: memref<16x32xf32, #tpu.memory_space<vmem>>, %arg4: memref<32x32xf32, #tpu.memory_space<vmem>>, %arg5: memref<1x32xf32, #tpu.memory_space<vmem>>, %arg6: memref<32x32xf32, #tpu.memory_space<vmem>>, %arg7: memref<1x32xf32, #tpu.memory_space<vmem>>, %arg8: memref<32x32xf32, #tpu.memory_space<vmem>>, %arg9: memref<1x32xf32, #tpu.memory_space<vmem>>, %arg10: memref<32x32xf32, #tpu.memory_space<vmem>>, %arg11: memref<1x32xf32, #tpu.memory_space<vmem>>, %arg12: memref<32x32xf32, #tpu.memory_space<vmem>>, %arg13: memref<16x32xf32, #tpu.memory_space<vmem>>) attributes {dimension_semantics = [#tpu.dimension_semantics<parallel>], iteration_bounds = array<i64: 2>, scalar_prefetch = 0 : i64, scratch_operands = 0 : i64, tpu.core_type = #tpu.core_type<tc>, window_params = [{transform_indices = @transform_0, window_bounds = array<i64: 16, 32>}, {transform_indices = @transform_1, window_bounds = array<i64: 16, 32>}, {transform_indices = @transform_2, window_bounds = array<i64: 16, 32>}, {pipeline_mode = #tpu.pipeline_mode<synchronous>, transform_indices = @transform_3, window_bounds = array<i64: 32, 32>}, {pipeline_mode = #tpu.pipeline_mode<synchronous>, transform_indices = @transform_4, window_bounds = array<i64: 1, 32>}, {pipeline_mode = #tpu.pipeline_mode<synchronous>, transform_indices = @transform_5, window_bounds = array<i64: 32, 32>}, {pipeline_mode = #tpu.pipeline_mode<synchronous>, transform_indices = @transform_6, window_bounds = array<i64: 1, 32>}, {pipeline_mode = #tpu.pipeline_mode<synchronous>, transform_indices = @transform_7, window_bounds = array<i64: 32, 32>}, {pipeline_mode = #tpu.pipeline_mode<synchronous>, transform_indices = @transform_8, window_bounds = array<i64: 1, 32>}, {pipeline_mode = #tpu.pipeline_mode<synchronous>, transform_indices = @transform_9, window_bounds = array<i64: 32, 32>}, {pipeline_mode = #tpu.pipeline_mode<synchronous>, transform_indices = @transform_10, window_bounds = array<i64: 1, 32>}, {pipeline_mode = #tpu.pipeline_mode<synchronous>, transform_indices = @transform_11, window_bounds = array<i64: 32, 32>}, {transform_indices = @transform_12, window_bounds = array<i64: 16, 32>}]} {
    %c0 = arith.constant 0 : index
    %c0_0 = arith.constant 0 : index
    %0 = vector.load %arg1[%c0, %c0_0] : memref<16x32xf32, #tpu.memory_space<vmem>>, vector<16x32xf32>
    %c0_1 = arith.constant 0 : index
    %c0_2 = arith.constant 0 : index
    %1 = vector.load %arg4[%c0_1, %c0_2] : memref<32x32xf32, #tpu.memory_space<vmem>>, vector<32x32xf32>
    %cst = arith.constant dense<0.000000e+00> : vector<16x32xf32>
    %2 = tpu.matmul %0, %1, %cst {dimension_numbers = #tpu.dot_dimension_numbers<[1], [0], [0], [1], [0, 0, 1, 1], [], []>} : vector<16x32xf32>, vector<32x32xf32>, vector<16x32xf32> -> vector<16x32xf32>
    %c0_3 = arith.constant 0 : index
    %c0_4 = arith.constant 0 : index
    %3 = vector.load %arg5[%c0_3, %c0_4] : memref<1x32xf32, #tpu.memory_space<vmem>>, vector<1x32xf32>
    %4 = vector.broadcast %3 : vector<1x32xf32> to vector<16x32xf32>
    %5 = arith.addf %2, %4 : vector<16x32xf32>
    %c0_5 = arith.constant 0 : index
    %c0_6 = arith.constant 0 : index
    %6 = vector.load %arg2[%c0_5, %c0_6] : memref<16x32xf32, #tpu.memory_space<vmem>>, vector<16x32xf32>
    %c0_7 = arith.constant 0 : index
    %c0_8 = arith.constant 0 : index
    %7 = vector.load %arg6[%c0_7, %c0_8] : memref<32x32xf32, #tpu.memory_space<vmem>>, vector<32x32xf32>
    %cst_9 = arith.constant dense<0.000000e+00> : vector<16x32xf32>
    %8 = tpu.matmul %6, %7, %cst_9 {dimension_numbers = #tpu.dot_dimension_numbers<[1], [0], [0], [1], [0, 0, 1, 1], [], []>} : vector<16x32xf32>, vector<32x32xf32>, vector<16x32xf32> -> vector<16x32xf32>
    %c0_10 = arith.constant 0 : index
    %c0_11 = arith.constant 0 : index
    %9 = vector.load %arg7[%c0_10, %c0_11] : memref<1x32xf32, #tpu.memory_space<vmem>>, vector<1x32xf32>
    %10 = vector.broadcast %9 : vector<1x32xf32> to vector<16x32xf32>
    %11 = arith.addf %8, %10 : vector<16x32xf32>
    %c0_12 = arith.constant 0 : index
    %c0_13 = arith.constant 0 : index
    %12 = vector.load %arg3[%c0_12, %c0_13] : memref<16x32xf32, #tpu.memory_space<vmem>>, vector<16x32xf32>
    %c0_14 = arith.constant 0 : index
    %c0_15 = arith.constant 0 : index
    %13 = vector.load %arg8[%c0_14, %c0_15] : memref<32x32xf32, #tpu.memory_space<vmem>>, vector<32x32xf32>
    %cst_16 = arith.constant dense<0.000000e+00> : vector<16x32xf32>
    %14 = tpu.matmul %12, %13, %cst_16 {dimension_numbers = #tpu.dot_dimension_numbers<[1], [0], [0], [1], [0, 0, 1, 1], [], []>} : vector<16x32xf32>, vector<32x32xf32>, vector<16x32xf32> -> vector<16x32xf32>
    %c0_17 = arith.constant 0 : index
    %c0_18 = arith.constant 0 : index
    %15 = vector.load %arg9[%c0_17, %c0_18] : memref<1x32xf32, #tpu.memory_space<vmem>>, vector<1x32xf32>
    %16 = vector.broadcast %15 : vector<1x32xf32> to vector<16x32xf32>
    %17 = arith.addf %14, %16 : vector<16x32xf32>
    %cst_19 = arith.constant 0.000000e+00 : f32
    %18 = vector.broadcast %cst_19 : f32 to vector<16x32xf32>
    %19 = arith.cmpf ogt, %5, %18 : vector<16x32xf32>
    %cst_20 = arith.constant 1.000000e+00 : f32
    %20 = vector.broadcast %cst_20 : f32 to vector<16x32xf32>
    %21 = arith.addf %5, %20 : vector<16x32xf32>
    %22 = math.exp %5 : vector<16x32xf32>
    %23 = arith.select %19, %21, %22 : vector<16x32xi1>, vector<16x32xf32>
    %cst_21 = arith.constant 0.000000e+00 : f32
    %24 = vector.broadcast %cst_21 : f32 to vector<16x32xf32>
    %25 = arith.cmpf ogt, %11, %24 : vector<16x32xf32>
    %cst_22 = arith.constant 1.000000e+00 : f32
    %26 = vector.broadcast %cst_22 : f32 to vector<16x32xf32>
    %27 = arith.addf %11, %26 : vector<16x32xf32>
    %28 = math.exp %11 : vector<16x32xf32>
    %29 = arith.select %25, %27, %28 : vector<16x32xi1>, vector<16x32xf32>
    %30 = vector.shape_cast %23 : vector<16x32xf32> to vector<2x8x32xf32>
    %31 = vector.shape_cast %29 : vector<16x32xf32> to vector<2x8x32xf32>
    %32 = vector.shape_cast %17 : vector<16x32xf32> to vector<2x8x32xf32>
    %cst_23 = arith.constant dense<0.000000e+00> : vector<2x32x32xf32>
    %33 = tpu.matmul %31, %32, %cst_23 {dimension_numbers = #tpu.dot_dimension_numbers<[1], [1], [2], [2], [0, 0, 0, 2, 1, 2], [0], [0]>} : vector<2x8x32xf32>, vector<2x8x32xf32>, vector<2x32x32xf32> -> vector<2x32x32xf32>
    %34 = vector.shape_cast %29 : vector<16x32xf32> to vector<2x8x32xf32>
    %cst_24 = arith.constant dense<0.000000e+00> : vector<2x32xf32>
    %35 = vector.multi_reduction <add>, %34, %cst_24 [1] : vector<2x8x32xf32> to vector<2x32xf32>
    %c0_25 = arith.constant 0 : index
    %c0_26 = arith.constant 0 : index
    %36 = vector.load %arg12[%c0_25, %c0_26] : memref<32x32xf32, #tpu.memory_space<vmem>>, vector<32x32xf32>
    %37 = vector.shape_cast %36 : vector<32x32xf32> to vector<1x32x32xf32>
    %38 = vector.broadcast %37 : vector<1x32x32xf32> to vector<2x32x32xf32>
    %39 = arith.mulf %33, %38 : vector<2x32x32xf32>
    %40 = vector.shape_cast %35 : vector<2x32xf32> to vector<2x32x1xf32>
    %41 = vector.shape_cast %36 : vector<32x32xf32> to vector<1x32x32xf32>
    %42 = vector.broadcast %40 : vector<2x32x1xf32> to vector<2x32x32xf32>
    %43 = vector.broadcast %41 : vector<1x32x32xf32> to vector<2x32x32xf32>
    %44 = arith.mulf %42, %43 : vector<2x32x32xf32>
    %45 = tpu.concatenate %39, %44 in 2 : vector<2x32x32xf32>, vector<2x32x32xf32> -> vector<2x32x64xf32>
    %cst_27 = arith.constant dense<0.000000e+00> : vector<2x8x64xf32>
    %46 = tpu.matmul %30, %45, %cst_27 {dimension_numbers = #tpu.dot_dimension_numbers<[2], [1], [1], [2], [0, 0, 0, 1, 1, 2], [0], [0]>} : vector<2x8x32xf32>, vector<2x32x64xf32>, vector<2x8x64xf32> -> vector<2x8x64xf32>
    %47 = vector.extract_strided_slice %46 {offsets = [0, 0, 0], sizes = [2, 8, 32], strides = [1, 1, 1]} : vector<2x8x64xf32> to vector<2x8x32xf32>
    %48 = vector.extract_strided_slice %46 {offsets = [0, 0, 32], sizes = [2, 8, 32], strides = [1, 1, 1]} : vector<2x8x64xf32> to vector<2x8x32xf32>
    %cst_28 = arith.constant 1.000000e-10 : f32
    %49 = vector.broadcast %cst_28 : f32 to vector<2x8x32xf32>
    %50 = arith.addf %48, %49 : vector<2x8x32xf32>
    %51 = tpu.reciprocal %50 {approx = true} : vector<2x8x32xf32> -> vector<2x8x32xf32>
    %52 = arith.mulf %47, %51 : vector<2x8x32xf32>
    %53 = vector.shape_cast %52 : vector<2x8x32xf32> to vector<16x32xf32>
    %c0_29 = arith.constant 0 : index
    %c0_30 = arith.constant 0 : index
    %54 = vector.load %arg10[%c0_29, %c0_30] : memref<32x32xf32, #tpu.memory_space<vmem>>, vector<32x32xf32>
    %cst_31 = arith.constant dense<0.000000e+00> : vector<16x32xf32>
    %55 = tpu.matmul %53, %54, %cst_31 {dimension_numbers = #tpu.dot_dimension_numbers<[1], [0], [0], [1], [0, 0, 1, 1], [], []>} : vector<16x32xf32>, vector<32x32xf32>, vector<16x32xf32> -> vector<16x32xf32>
    %c0_32 = arith.constant 0 : index
    %c0_33 = arith.constant 0 : index
    %56 = vector.load %arg11[%c0_32, %c0_33] : memref<1x32xf32, #tpu.memory_space<vmem>>, vector<1x32xf32>
    %57 = vector.broadcast %56 : vector<1x32xf32> to vector<16x32xf32>
    %58 = arith.addf %55, %57 : vector<16x32xf32>
    %c0_34 = arith.constant 0 : index
    %c0_35 = arith.constant 0 : index
    %59 = vector.load %arg13[%c0_34, %c0_35] : memref<16x32xf32, #tpu.memory_space<vmem>>, vector<16x32xf32>
    tpu.vector_store %arg13[%c0_34, %c0_35], %58 {strides = array<i32>} : memref<16x32xf32, #tpu.memory_space<vmem>>, vector<16x32xf32>,
    return
  }
  func.func @transform_0(%arg0: i32) -> (i32, i32) {
    %c0_i32 = arith.constant 0 : i32
    %c0_i32_0 = arith.constant 0 : i32
    return %arg0, %c0_i32 : i32, i32
  }
  func.func @transform_1(%arg0: i32) -> (i32, i32) {
    %c0_i32 = arith.constant 0 : i32
    %c0_i32_0 = arith.constant 0 : i32
    return %arg0, %c0_i32 : i32, i32
  }
  func.func @transform_2(%arg0: i32) -> (i32, i32) {
    %c0_i32 = arith.constant 0 : i32
    %c0_i32_0 = arith.constant 0 : i32
    return %arg0, %c0_i32 : i32, i32
  }
  func.func @transform_3(%arg0: i32) -> (i32, i32) {
    %c0_i32 = arith.constant 0 : i32
    %c0_i32_0 = arith.constant 0 : i32
    %c0_i32_1 = arith.constant 0 : i32
    return %c0_i32, %c0_i32_0 : i32, i32
  }
  func.func @transform_4(%arg0: i32) -> (i32, i32) {
    %c0_i32 = arith.constant 0 : i32
    %c0_i32_0 = arith.constant 0 : i32
    %c0_i32_1 = arith.constant 0 : i32
    return %c0_i32, %c0_i32_0 : i32, i32
  }
  func.func @transform_5(%arg0: i32) -> (i32, i32) {
    %c0_i32 = arith.constant 0 : i32
    %c0_i32_0 = arith.constant 0 : i32
    %c0_i32_1 = arith.constant 0 : i32
    return %c0_i32, %c0_i32_0 : i32, i32
  }
  func.func @transform_6(%arg0: i32) -> (i32, i32) {
    %c0_i32 = arith.constant 0 : i32
    %c0_i32_0 = arith.constant 0 : i32
    %c0_i32_1 = arith.constant 0 : i32
    return %c0_i32, %c0_i32_0 : i32, i32
  }
  func.func @transform_7(%arg0: i32) -> (i32, i32) {
    %c0_i32 = arith.constant 0 : i32
    %c0_i32_0 = arith.constant 0 : i32
    %c0_i32_1 = arith.constant 0 : i32
    return %c0_i32, %c0_i32_0 : i32, i32
  }
  func.func @transform_8(%arg0: i32) -> (i32, i32) {
    %c0_i32 = arith.constant 0 : i32
    %c0_i32_0 = arith.constant 0 : i32
    %c0_i32_1 = arith.constant 0 : i32
    return %c0_i32, %c0_i32_0 : i32, i32
  }
  func.func @transform_9(%arg0: i32) -> (i32, i32) {
    %c0_i32 = arith.constant 0 : i32
    %c0_i32_0 = arith.constant 0 : i32
    %c0_i32_1 = arith.constant 0 : i32
    return %c0_i32, %c0_i32_0 : i32, i32
  }
  func.func @transform_10(%arg0: i32) -> (i32, i32) {
    %c0_i32 = arith.constant 0 : i32
    %c0_i32_0 = arith.constant 0 : i32
    %c0_i32_1 = arith.constant 0 : i32
    return %c0_i32, %c0_i32_0 : i32, i32
  }
  func.func @transform_11(%arg0: i32) -> (i32, i32) {
    %c0_i32 = arith.constant 0 : i32
    %c0_i32_0 = arith.constant 0 : i32
    %c0_i32_1 = arith.constant 0 : i32
    return %c0_i32, %c0_i32_0 : i32, i32
  }
  func.func @transform_12(%arg0: i32) -> (i32, i32) {
    %c0_i32 = arith.constant 0 : i32
    %c0_i32_0 = arith.constant 0 : i32
    return %arg0, %c0_i32 : i32, i32
  }
}

module attributes {stable_mosaic.version = 11 : i64} {
  func.func @kernel(%arg0: i32, %arg1: memref<16x32xf32, #tpu.memory_space<vmem>>, %arg2: memref<16x32xf32, #tpu.memory_space<vmem>>, %arg3: memref<16x32xf32, #tpu.memory_space<vmem>>, %arg4: memref<32x32xf32, #tpu.memory_space<vmem>>, %arg5: memref<1x32xf32, #tpu.memory_space<vmem>>, %arg6: memref<32x32xf32, #tpu.memory_space<vmem>>, %arg7: memref<1x32xf32, #tpu.memory_space<vmem>>, %arg8: memref<32x32xf32, #tpu.memory_space<vmem>>, %arg9: memref<1x32xf32, #tpu.memory_space<vmem>>, %arg10: memref<32x32xf32, #tpu.memory_space<vmem>>, %arg11: memref<1x32xf32, #tpu.memory_space<vmem>>, %arg12: memref<32x32xf32, #tpu.memory_space<vmem>>, %arg13: memref<16x32xf32, #tpu.memory_space<vmem>>) attributes {dimension_semantics = [#tpu.dimension_semantics<parallel>], iteration_bounds = array<i64: 2>, scalar_prefetch = 0 : i64, scratch_operands = 0 : i64, tpu.core_type = #tpu.core_type<tc>, window_params = [{transform_indices = @transform_0, window_bounds = array<i64: 16, 32>}, {transform_indices = @transform_1, window_bounds = array<i64: 16, 32>}, {transform_indices = @transform_2, window_bounds = array<i64: 16, 32>}, {pipeline_mode = #tpu.pipeline_mode<synchronous>, transform_indices = @transform_3, window_bounds = array<i64: 32, 32>}, {pipeline_mode = #tpu.pipeline_mode<synchronous>, transform_indices = @transform_4, window_bounds = array<i64: 1, 32>}, {pipeline_mode = #tpu.pipeline_mode<synchronous>, transform_indices = @transform_5, window_bounds = array<i64: 32, 32>}, {pipeline_mode = #tpu.pipeline_mode<synchronous>, transform_indices = @transform_6, window_bounds = array<i64: 1, 32>}, {pipeline_mode = #tpu.pipeline_mode<synchronous>, transform_indices = @transform_7, window_bounds = array<i64: 32, 32>}, {pipeline_mode = #tpu.pipeline_mode<synchronous>, transform_indices = @transform_8, window_bounds = array<i64: 1, 32>}, {pipeline_mode = #tpu.pipeline_mode<synchronous>, transform_indices = @transform_9, window_bounds = array<i64: 32, 32>}, {pipeline_mode = #tpu.pipeline_mode<synchronous>, transform_indices = @transform_10, window_bounds = array<i64: 1, 32>}, {pipeline_mode = #tpu.pipeline_mode<synchronous>, transform_indices = @transform_11, window_bounds = array<i64: 32, 32>}, {transform_indices = @transform_12, window_bounds = array<i64: 16, 32>}]} {
    %c0 = arith.constant 0 : index
    %c0_0 = arith.constant 0 : index
    %0 = vector.load %arg1[%c0, %c0_0] : memref<16x32xf32, #tpu.memory_space<vmem>>, vector<16x32xf32>
    %c0_1 = arith.constant 0 : index
    %c0_2 = arith.constant 0 : index
    %1 = vector.load %arg4[%c0_1, %c0_2] : memref<32x32xf32, #tpu.memory_space<vmem>>, vector<32x32xf32>
    %cst = arith.constant dense<0.000000e+00> : vector<16x32xf32>
    %2 = tpu.matmul %0, %1, %cst {dimension_numbers = #tpu.dot_dimension_numbers<[1], [0], [0], [1], [0, 0, 1, 1], [], []>} : vector<16x32xf32>, vector<32x32xf32>, vector<16x32xf32> -> vector<16x32xf32>
    %c0_3 = arith.constant 0 : index
    %c0_4 = arith.constant 0 : index
    %3 = vector.load %arg5[%c0_3, %c0_4] : memref<1x32xf32, #tpu.memory_space<vmem>>, vector<1x32xf32>
    %4 = vector.broadcast %3 : vector<1x32xf32> to vector<16x32xf32>
    %5 = arith.addf %2, %4 : vector<16x32xf32>
    %c0_5 = arith.constant 0 : index
    %c0_6 = arith.constant 0 : index
    %6 = vector.load %arg2[%c0_5, %c0_6] : memref<16x32xf32, #tpu.memory_space<vmem>>, vector<16x32xf32>
    %c0_7 = arith.constant 0 : index
    %c0_8 = arith.constant 0 : index
    %7 = vector.load %arg6[%c0_7, %c0_8] : memref<32x32xf32, #tpu.memory_space<vmem>>, vector<32x32xf32>
    %cst_9 = arith.constant dense<0.000000e+00> : vector<16x32xf32>
    %8 = tpu.matmul %6, %7, %cst_9 {dimension_numbers = #tpu.dot_dimension_numbers<[1], [0], [0], [1], [0, 0, 1, 1], [], []>} : vector<16x32xf32>, vector<32x32xf32>, vector<16x32xf32> -> vector<16x32xf32>
    %c0_10 = arith.constant 0 : index
    %c0_11 = arith.constant 0 : index
    %9 = vector.load %arg7[%c0_10, %c0_11] : memref<1x32xf32, #tpu.memory_space<vmem>>, vector<1x32xf32>
    %10 = vector.broadcast %9 : vector<1x32xf32> to vector<16x32xf32>
    %11 = arith.addf %8, %10 : vector<16x32xf32>
    %c0_12 = arith.constant 0 : index
    %c0_13 = arith.constant 0 : index
    %12 = vector.load %arg3[%c0_12, %c0_13] : memref<16x32xf32, #tpu.memory_space<vmem>>, vector<16x32xf32>
    %c0_14 = arith.constant 0 : index
    %c0_15 = arith.constant 0 : index
    %13 = vector.load %arg8[%c0_14, %c0_15] : memref<32x32xf32, #tpu.memory_space<vmem>>, vector<32x32xf32>
    %cst_16 = arith.constant dense<0.000000e+00> : vector<16x32xf32>
    %14 = tpu.matmul %12, %13, %cst_16 {dimension_numbers = #tpu.dot_dimension_numbers<[1], [0], [0], [1], [0, 0, 1, 1], [], []>} : vector<16x32xf32>, vector<32x32xf32>, vector<16x32xf32> -> vector<16x32xf32>
    %c0_17 = arith.constant 0 : index
    %c0_18 = arith.constant 0 : index
    %15 = vector.load %arg9[%c0_17, %c0_18] : memref<1x32xf32, #tpu.memory_space<vmem>>, vector<1x32xf32>
    %16 = vector.broadcast %15 : vector<1x32xf32> to vector<16x32xf32>
    %17 = arith.addf %14, %16 : vector<16x32xf32>
    %cst_19 = arith.constant 0.000000e+00 : f32
    %18 = vector.broadcast %cst_19 : f32 to vector<16x32xf32>
    %19 = arith.cmpf ogt, %5, %18 : vector<16x32xf32>
    %cst_20 = arith.constant 1.000000e+00 : f32
    %20 = vector.broadcast %cst_20 : f32 to vector<16x32xf32>
    %21 = arith.addf %5, %20 : vector<16x32xf32>
    %22 = math.exp %5 : vector<16x32xf32>
    %23 = arith.select %19, %21, %22 : vector<16x32xi1>, vector<16x32xf32>
    %cst_21 = arith.constant 0.000000e+00 : f32
    %24 = vector.broadcast %cst_21 : f32 to vector<16x32xf32>
    %25 = arith.cmpf ogt, %11, %24 : vector<16x32xf32>
    %cst_22 = arith.constant 1.000000e+00 : f32
    %26 = vector.broadcast %cst_22 : f32 to vector<16x32xf32>
    %27 = arith.addf %11, %26 : vector<16x32xf32>
    %28 = math.exp %11 : vector<16x32xf32>
    %29 = arith.select %25, %27, %28 : vector<16x32xi1>, vector<16x32xf32>
    %30 = vector.shape_cast %23 : vector<16x32xf32> to vector<2x8x32xf32>
    %31 = vector.shape_cast %29 : vector<16x32xf32> to vector<2x8x32xf32>
    %32 = vector.shape_cast %17 : vector<16x32xf32> to vector<2x8x32xf32>
    %cst_23 = arith.constant dense<0.000000e+00> : vector<2x32x32xf32>
    %33 = tpu.matmul %31, %32, %cst_23 {dimension_numbers = #tpu.dot_dimension_numbers<[1], [1], [2], [2], [0, 0, 0, 2, 1, 2], [0], [0]>} : vector<2x8x32xf32>, vector<2x8x32xf32>, vector<2x32x32xf32> -> vector<2x32x32xf32>
    %34 = vector.shape_cast %29 : vector<16x32xf32> to vector<2x8x32xf32>
    %cst_24 = arith.constant dense<0.000000e+00> : vector<2x32xf32>
    %35 = vector.multi_reduction <add>, %34, %cst_24 [1] : vector<2x8x32xf32> to vector<2x32xf32>
    %c0_25 = arith.constant 0 : index
    %c0_26 = arith.constant 0 : index
    %36 = vector.load %arg12[%c0_25, %c0_26] : memref<32x32xf32, #tpu.memory_space<vmem>>, vector<32x32xf32>
    %37 = vector.shape_cast %36 : vector<32x32xf32> to vector<1x32x32xf32>
    %38 = vector.broadcast %37 : vector<1x32x32xf32> to vector<2x32x32xf32>
    %39 = arith.mulf %33, %38 : vector<2x32x32xf32>
    %40 = vector.shape_cast %35 : vector<2x32xf32> to vector<2x32x1xf32>
    %41 = vector.shape_cast %36 : vector<32x32xf32> to vector<1x32x32xf32>
    %42 = vector.broadcast %40 : vector<2x32x1xf32> to vector<2x32x32xf32>
    %43 = vector.broadcast %41 : vector<1x32x32xf32> to vector<2x32x32xf32>
    %44 = arith.mulf %42, %43 : vector<2x32x32xf32>
    %cst_27 = arith.constant dense<0.000000e+00> : vector<2x8x32xf32>
    %45 = tpu.matmul %30, %39, %cst_27 {dimension_numbers = #tpu.dot_dimension_numbers<[2], [1], [1], [2], [0, 0, 0, 1, 1, 2], [0], [0]>} : vector<2x8x32xf32>, vector<2x32x32xf32>, vector<2x8x32xf32> -> vector<2x8x32xf32>
    %cst_28 = arith.constant dense<0.000000e+00> : vector<2x8x32xf32>
    %46 = tpu.matmul %30, %44, %cst_28 {dimension_numbers = #tpu.dot_dimension_numbers<[2], [1], [1], [2], [0, 0, 0, 1, 1, 2], [0], [0]>} : vector<2x8x32xf32>, vector<2x32x32xf32>, vector<2x8x32xf32> -> vector<2x8x32xf32>
    %cst_29 = arith.constant 1.000000e-10 : f32
    %47 = vector.broadcast %cst_29 : f32 to vector<2x8x32xf32>
    %48 = arith.addf %46, %47 : vector<2x8x32xf32>
    %49 = tpu.reciprocal %48 {approx = true} : vector<2x8x32xf32> -> vector<2x8x32xf32>
    %50 = arith.mulf %45, %49 : vector<2x8x32xf32>
    %51 = vector.shape_cast %50 : vector<2x8x32xf32> to vector<16x32xf32>
    %c0_30 = arith.constant 0 : index
    %c0_31 = arith.constant 0 : index
    %52 = vector.load %arg10[%c0_30, %c0_31] : memref<32x32xf32, #tpu.memory_space<vmem>>, vector<32x32xf32>
    %cst_32 = arith.constant dense<0.000000e+00> : vector<16x32xf32>
    %53 = tpu.matmul %51, %52, %cst_32 {dimension_numbers = #tpu.dot_dimension_numbers<[1], [0], [0], [1], [0, 0, 1, 1], [], []>} : vector<16x32xf32>, vector<32x32xf32>, vector<16x32xf32> -> vector<16x32xf32>
    %c0_33 = arith.constant 0 : index
    %c0_34 = arith.constant 0 : index
    %54 = vector.load %arg11[%c0_33, %c0_34] : memref<1x32xf32, #tpu.memory_space<vmem>>, vector<1x32xf32>
    %55 = vector.broadcast %54 : vector<1x32xf32> to vector<16x32xf32>
    %56 = arith.addf %53, %55 : vector<16x32xf32>
    %c0_35 = arith.constant 0 : index
    %c0_36 = arith.constant 0 : index
    %57 = vector.load %arg13[%c0_35, %c0_36] : memref<16x32xf32, #tpu.memory_space<vmem>>, vector<16x32xf32>
    tpu.vector_store %arg13[%c0_35, %c0_36], %56 {strides = array<i32>} : memref<16x32xf32, #tpu.memory_space<vmem>>, vector<16x32xf32>,
    return
  }
  func.func @transform_0(%arg0: i32) -> (i32, i32) {
    %c0_i32 = arith.constant 0 : i32
    %c0_i32_0 = arith.constant 0 : i32
    return %arg0, %c0_i32 : i32, i32
  }
  func.func @transform_1(%arg0: i32) -> (i32, i32) {
    %c0_i32 = arith.constant 0 : i32
    %c0_i32_0 = arith.constant 0 : i32
    return %arg0, %c0_i32 : i32, i32
  }
  func.func @transform_2(%arg0: i32) -> (i32, i32) {
    %c0_i32 = arith.constant 0 : i32
    %c0_i32_0 = arith.constant 0 : i32
    return %arg0, %c0_i32 : i32, i32
  }
  func.func @transform_3(%arg0: i32) -> (i32, i32) {
    %c0_i32 = arith.constant 0 : i32
    %c0_i32_0 = arith.constant 0 : i32
    %c0_i32_1 = arith.constant 0 : i32
    return %c0_i32, %c0_i32_0 : i32, i32
  }
  func.func @transform_4(%arg0: i32) -> (i32, i32) {
    %c0_i32 = arith.constant 0 : i32
    %c0_i32_0 = arith.constant 0 : i32
    %c0_i32_1 = arith.constant 0 : i32
    return %c0_i32, %c0_i32_0 : i32, i32
  }
  func.func @transform_5(%arg0: i32) -> (i32, i32) {
    %c0_i32 = arith.constant 0 : i32
    %c0_i32_0 = arith.constant 0 : i32
    %c0_i32_1 = arith.constant 0 : i32
    return %c0_i32, %c0_i32_0 : i32, i32
  }
  func.func @transform_6(%arg0: i32) -> (i32, i32) {
    %c0_i32 = arith.constant 0 : i32
    %c0_i32_0 = arith.constant 0 : i32
    %c0_i32_1 = arith.constant 0 : i32
    return %c0_i32, %c0_i32_0 : i32, i32
  }
  func.func @transform_7(%arg0: i32) -> (i32, i32) {
    %c0_i32 = arith.constant 0 : i32
    %c0_i32_0 = arith.constant 0 : i32
    %c0_i32_1 = arith.constant 0 : i32
    return %c0_i32, %c0_i32_0 : i32, i32
  }
  func.func @transform_8(%arg0: i32) -> (i32, i32) {
    %c0_i32 = arith.constant 0 : i32
    %c0_i32_0 = arith.constant 0 : i32
    %c0_i32_1 = arith.constant 0 : i32
    return %c0_i32, %c0_i32_0 : i32, i32
  }
  func.func @transform_9(%arg0: i32) -> (i32, i32) {
    %c0_i32 = arith.constant 0 : i32
    %c0_i32_0 = arith.constant 0 : i32
    %c0_i32_1 = arith.constant 0 : i32
    return %c0_i32, %c0_i32_0 : i32, i32
  }
  func.func @transform_10(%arg0: i32) -> (i32, i32) {
    %c0_i32 = arith.constant 0 : i32
    %c0_i32_0 = arith.constant 0 : i32
    %c0_i32_1 = arith.constant 0 : i32
    return %c0_i32, %c0_i32_0 : i32, i32
  }
  func.func @transform_11(%arg0: i32) -> (i32, i32) {
    %c0_i32 = arith.constant 0 : i32
    %c0_i32_0 = arith.constant 0 : i32
    %c0_i32_1 = arith.constant 0 : i32
    return %c0_i32, %c0_i32_0 : i32, i32
  }
  func.func @transform_12(%arg0: i32) -> (i32, i32) {
    %c0_i32 = arith.constant 0 : i32
    %c0_i32_0 = arith.constant 0 : i32
    return %arg0, %c0_i32 : i32, i32
  }
}

</mosaic_0001>

<llo_original>
// kernel: tpu_custom_call.1
$region0: #{tpu_custom_call.1}
  #allocation0 [shape = 'u32[]', space=smem, size = 0x4, offset = 0x4, fixed_abs, tag = 'smem constant byte address 0x4 - core index']
  #allocation1 [shape = 'u32[144,128]{1,0:T(1,128)}', space=vmem, size = 0x12000, scoped, tag = 'internal scratch']
  %s0 = inlined_call_operand.hbm [shape: f32[32,32], index: 0, kind: input, shape index: {}]
  %s1 = inlined_call_operand.hbm [shape: f32[32,32], index: 1, kind: input, shape index: {}]
  %s2 = inlined_call_operand.hbm [shape: f32[32,32], index: 2, kind: input, shape index: {}]
  %s3 = inlined_call_operand.hbm [shape: f32[32,32], index: 3, kind: input, shape index: {}]
  %s4 = inlined_call_operand.vmem [shape: f32[1,32], index: 4, kind: input, shape index: {}]
  %s5 = inlined_call_operand.hbm [shape: f32[32,32], index: 5, kind: input, shape index: {}]
  %s6 = inlined_call_operand.vmem [shape: f32[1,32], index: 6, kind: input, shape index: {}]
  %s7 = inlined_call_operand.hbm [shape: f32[32,32], index: 7, kind: input, shape index: {}]
  %s8 = inlined_call_operand.vmem [shape: f32[1,32], index: 8, kind: input, shape index: {}]
  %s9 = inlined_call_operand.hbm [shape: f32[32,32], index: 9, kind: input, shape index: {}]
  %s10 = inlined_call_operand.vmem [shape: f32[1,32], index: 10, kind: input, shape index: {}]
  %s11 = inlined_call_operand.hbm [shape: f32[32,32], index: 11, kind: input, shape index: {}]
  %s12 = inlined_call_operand.hbm [shape: f32[32,32], index: 12, kind: output, shape index: {}]
  %s13 = sld [smem:[#allocation0]]
  $region113: #{tpu_custom_call.1} parent=0
    _
  %s15 = ssub.s32 1, %s13
  %s16 = scalar_select 0, %s15, %s13
  $region1: #{tpu_custom_call.1} parent=0
    #allocation2 [shape = 'u8[16384]{0}', space=vmem, size = 0x4000, scoped, tag = 'input window, operand 0']
    #allocation3 [shape = 's32[2]{0}', space=sflag, size = 0x8, scoped, tag = 'scoped memory for tpu_custom_call.1']
    #allocation4 [shape = 's32[2]{0}', space=sflag, size = 0x8, scoped, tag = 'scoped memory for tpu_custom_call.1']
    #allocation5 [shape = 'u8[16384]{0}', space=vmem, size = 0x4000, scoped, tag = 'input window, operand 1']
    #allocation6 [shape = 's32[2]{0}', space=sflag, size = 0x8, scoped, tag = 'scoped memory for tpu_custom_call.1']
    #allocation7 [shape = 'u8[16384]{0}', space=vmem, size = 0x4000, scoped, tag = 'input window, operand 2']
    #allocation8 [shape = 'u8[16384]{0}', space=vmem, size = 0x4000, scoped, tag = 'input window, operand 3, single buffered']
    #allocation9 [shape = 's32[1]{0}', space=sflag, size = 0x4, scoped, tag = 'scoped memory for tpu_custom_call.1']
    #allocation10 [shape = 'u8[16384]{0}', space=vmem, size = 0x4000, scoped, tag = 'input window, operand 5, single buffered']
    #allocation11 [shape = 'u8[16384]{0}', space=vmem, size = 0x4000, scoped, tag = 'input window, operand 7, single buffered']
    #allocation12 [shape = 's32[1]{0}', space=sflag, size = 0x4, scoped, tag = 'scoped memory for tpu_custom_call.1']
    #allocation13 [shape = 'u8[16384]{0}', space=vmem, size = 0x4000, scoped, tag = 'input window, operand 9, single buffered']
    #allocation14 [shape = 'u8[16384]{0}', space=vmem, size = 0x4000, scoped, tag = 'input window, operand 11, single buffered']
    #allocation15 [shape = 's32[1]{0}', space=sflag, size = 0x4, scoped, tag = 'scoped memory for tpu_custom_call.1']
    #allocation16 [shape = 'u8[16384]{0}', space=vmem, size = 0x4000, scoped, tag = 'output window, operand 0']
    %17 = vsyncpa [#allocation3], 0
    %s18 = scalar_lea.sflag [#allocation3], 1
    %19 = vsyncpa %s18, 0
    %20 = vsyncpa [#allocation6], 0
    %s21 = scalar_lea.sflag [#allocation6], 1
    %22 = vsyncpa %s21, 0
    %23 = vsyncpa [#allocation9], 0
    %24 = vsyncpa [#allocation12], 0
    %25 = vsyncpa [#allocation15], 0
    %26 = vsyncpa [#allocation4], 0
    %s27 = scalar_lea.sflag [#allocation4], 1
    %28 = vsyncpa %s27, 0
    loop: start=0, step=1, limit=4
    $region2: #{tpu_custom_call.1} parent=1 // loop_pre_header
      _
    $region3: #{tpu_custom_call.1} parent=1 // loop_header
      %s30 = sphi 0, %s34
      %p31 = scmp.ge.s32.totalorder %s30, 4
      %s40 = sphi 0, %s42
      %s43 = sphi 0, %s40
      %s44 = sphi 0, %s43
      %s60 = sphi 0, %s44
      %s66 = sphi 0, %s68
      %s69 = sphi 0, %s66
      %s70 = sphi 0, %s69
      %s86 = sphi 0, %s70
      %s92 = sphi 0, %s94
      %s95 = sphi 0, %s92
      %s96 = sphi 0, %s95
      %s112 = sphi 0, %s96
      %s116 = sphi 0, %s116
      %s118 = sphi 0, %s116
      %s119 = sphi 0, %s118
      %s133 = sphi 0, %s119
      %s137 = sphi 0, %s137
      %s139 = sphi 0, %s137
      %s140 = sphi 0, %s139
      %s154 = sphi 0, %s140
      %s158 = sphi 0, %s158
      %s160 = sphi 0, %s158
      %s161 = sphi 0, %s160
      %s175 = sphi 0, %s161
      %s179 = sphi 0, %s179
      %s181 = sphi 0, %s179
      %s182 = sphi 0, %s181
      %s196 = sphi 0, %s182
      %s200 = sphi 0, %s200
      %s202 = sphi 0, %s200
      %s203 = sphi 0, %s202
      %s217 = sphi 0, %s203
      %s221 = sphi 0, %s221
      %s223 = sphi 0, %s221
      %s224 = sphi 0, %s223
      %s238 = sphi 0, %s224
      %s242 = sphi 0, %s242
      %s244 = sphi 0, %s242
      %s245 = sphi 0, %s244
      %s259 = sphi 0, %s245
      %s263 = sphi 0, %s263
      %s265 = sphi 0, %s263
      %s266 = sphi 0, %s265
      %s280 = sphi 0, %s266
      %s284 = sphi 0, %s284
      %s286 = sphi 0, %s284
      %s287 = sphi 0, %s286
      %s301 = sphi 0, %s287
      %s307 = sphi 0, %s309
      %s310 = sphi 0, %s307
      %s311 = sphi 0, %s310
      %s327 = sphi 0, %s311
    $region4: #{tpu_custom_call.1} parent=1 // loop_header_branch
      %33 = sbr.rel (%p31) target = $region8
    $region5: #{tpu_custom_call.1} parent=1 // loop_body
      %s35 = ssub.s32 %s30, 1
      %s36 = ssub.s32 %s30, 2
      %s37 = sadd.s32 %s30, 1
      %s38 = ssub.s32 %s30, %s37
      %p39 = scmp.eq.s32.totalorder %s38, 0
      %s41 = sadd.s32 %s40, 1
      %s42 = scalar_select %p39, %s40, %s41
      %p45 = pneg %p39
      %p46 = scmp.eq.s32.totalorder %s30, 1
      %p47 = por %p45, %p46
      %p48 = scmp.ne.s32.totalorder %s40, %s43
      %p49 = scmp.eq.s32.totalorder %s30, 0
      %p50 = por %p48, %p49
      %p51 = scmp.ne.s32.totalorder %s40, %s43
      %p52 = scmp.eq.s32.totalorder %s35, 1
      %p53 = por %p51, %p52
      %p54 = scmp.ne.s32.totalorder %s43, %s44
      %p55 = scmp.eq.s32.totalorder %s35, 0
      %p56 = por %p54, %p55
      %p57 = scmp.ne.s32.totalorder %s43, %s44
      %p58 = scmp.eq.s32.totalorder %s36, 1
      %p59 = por %p57, %p58
      %p61 = scmp.ne.s32.totalorder %s44, %s60
      %p62 = scmp.eq.s32.totalorder %s36, 0
      %p63 = por %p61, %p62
      %s64 = ssub.s32 %s30, %s37
      %p65 = scmp.eq.s32.totalorder %s64, 0
      %s67 = sadd.s32 %s66, 1
      %s68 = scalar_select %p65, %s66, %s67
      %p71 = pneg %p65
      %p72 = scmp.eq.s32.totalorder %s30, 1
      %p73 = por %p71, %p72
      %p74 = scmp.ne.s32.totalorder %s66, %s69
      %p75 = scmp.eq.s32.totalorder %s30, 0
      %p76 = por %p74, %p75
      %p77 = scmp.ne.s32.totalorder %s66, %s69
      %p78 = scmp.eq.s32.totalorder %s35, 1
      %p79 = por %p77, %p78
      %p80 = scmp.ne.s32.totalorder %s69, %s70
      %p81 = scmp.eq.s32.totalorder %s35, 0
      %p82 = por %p80, %p81
      %p83 = scmp.ne.s32.totalorder %s69, %s70
      %p84 = scmp.eq.s32.totalorder %s36, 1
      %p85 = por %p83, %p84
      %p87 = scmp.ne.s32.totalorder %s70, %s86
      %p88 = scmp.eq.s32.totalorder %s36, 0
      %p89 = por %p87, %p88
      %s90 = ssub.s32 %s30, %s37
      %p91 = scmp.eq.s32.totalorder %s90, 0
      %s93 = sadd.s32 %s92, 1
      %s94 = scalar_select %p91, %s92, %s93
      %p97 = pneg %p91
      %p98 = scmp.eq.s32.totalorder %s30, 1
      %p99 = por %p97, %p98
      %p100 = scmp.ne.s32.totalorder %s92, %s95
      %p101 = scmp.eq.s32.totalorder %s30, 0
      %p102 = por %p100, %p101
      %p103 = scmp.ne.s32.totalorder %s92, %s95
      %p104 = scmp.eq.s32.totalorder %s35, 1
      %p105 = por %p103, %p104
      %p106 = scmp.ne.s32.totalorder %s95, %s96
      %p107 = scmp.eq.s32.totalorder %s35, 0
      %p108 = por %p106, %p107
      %p109 = scmp.ne.s32.totalorder %s95, %s96
      %p110 = scmp.eq.s32.totalorder %s36, 1
      %p111 = por %p109, %p110
      %p113 = scmp.ne.s32.totalorder %s96, %s112
      %p114 = scmp.eq.s32.totalorder %s36, 0
      %p115 = por %p113, %p114
      %s117 = sadd.s32 %s116, 1
      %p120 = scmp.eq.s32.totalorder %s30, 1
      %p121 = scmp.ne.s32.totalorder %s116, %s118
      %p122 = scmp.eq.s32.totalorder %s30, 0
      %p123 = por %p121, %p122
      %p124 = scmp.ne.s32.totalorder %s116, %s118
      %p125 = scmp.eq.s32.totalorder %s35, 1
      %p126 = por %p124, %p125
      %p127 = scmp.ne.s32.totalorder %s118, %s119
      %p128 = scmp.eq.s32.totalorder %s35, 0
      %p129 = por %p127, %p128
      %p130 = scmp.ne.s32.totalorder %s118, %s119
      %p131 = scmp.eq.s32.totalorder %s36, 1
      %p132 = por %p130, %p131
      %p134 = scmp.ne.s32.totalorder %s119, %s133
      %p135 = scmp.eq.s32.totalorder %s36, 0
      %p136 = por %p134, %p135
      %s138 = sadd.s32 %s137, 1
      %p141 = scmp.eq.s32.totalorder %s30, 1
      %p142 = scmp.ne.s32.totalorder %s137, %s139
      %p143 = scmp.eq.s32.totalorder %s30, 0
      %p144 = por %p142, %p143
      %p145 = scmp.ne.s32.totalorder %s137, %s139
      %p146 = scmp.eq.s32.totalorder %s35, 1
      %p147 = por %p145, %p146
      %p148 = scmp.ne.s32.totalorder %s139, %s140
      %p149 = scmp.eq.s32.totalorder %s35, 0
      %p150 = por %p148, %p149
      %p151 = scmp.ne.s32.totalorder %s139, %s140
      %p152 = scmp.eq.s32.totalorder %s36, 1
      %p153 = por %p151, %p152
      %p155 = scmp.ne.s32.totalorder %s140, %s154
      %p156 = scmp.eq.s32.totalorder %s36, 0
      %p157 = por %p155, %p156
      %s159 = sadd.s32 %s158, 1
      %p162 = scmp.eq.s32.totalorder %s30, 1
      %p163 = scmp.ne.s32.totalorder %s158, %s160
      %p164 = scmp.eq.s32.totalorder %s30, 0
      %p165 = por %p163, %p164
      %p166 = scmp.ne.s32.totalorder %s158, %s160
      %p167 = scmp.eq.s32.totalorder %s35, 1
      %p168 = por %p166, %p167
      %p169 = scmp.ne.s32.totalorder %s160, %s161
      %p170 = scmp.eq.s32.totalorder %s35, 0
      %p171 = por %p169, %p170
      %p172 = scmp.ne.s32.totalorder %s160, %s161
      %p173 = scmp.eq.s32.totalorder %s36, 1
      %p174 = por %p172, %p173
      %p176 = scmp.ne.s32.totalorder %s161, %s175
      %p177 = scmp.eq.s32.totalorder %s36, 0
      %p178 = por %p176, %p177
      %s180 = sadd.s32 %s179, 1
      %p183 = scmp.eq.s32.totalorder %s30, 1
      %p184 = scmp.ne.s32.totalorder %s179, %s181
      %p185 = scmp.eq.s32.totalorder %s30, 0
      %p186 = por %p184, %p185
      %p187 = scmp.ne.s32.totalorder %s179, %s181
      %p188 = scmp.eq.s32.totalorder %s35, 1
      %p189 = por %p187, %p188
      %p190 = scmp.ne.s32.totalorder %s181, %s182
      %p191 = scmp.eq.s32.totalorder %s35, 0
      %p192 = por %p190, %p191
      %p193 = scmp.ne.s32.totalorder %s181, %s182
      %p194 = scmp.eq.s32.totalorder %s36, 1
      %p195 = por %p193, %p194
      %p197 = scmp.ne.s32.totalorder %s182, %s196
      %p198 = scmp.eq.s32.totalorder %s36, 0
      %p199 = por %p197, %p198
      %s201 = sadd.s32 %s200, 1
      %p204 = scmp.eq.s32.totalorder %s30, 1
      %p205 = scmp.ne.s32.totalorder %s200, %s202
      %p206 = scmp.eq.s32.totalorder %s30, 0
      %p207 = por %p205, %p206
      %p208 = scmp.ne.s32.totalorder %s200, %s202
      %p209 = scmp.eq.s32.totalorder %s35, 1
      %p210 = por %p208, %p209
      %p211 = scmp.ne.s32.totalorder %s202, %s203
      %p212 = scmp.eq.s32.totalorder %s35, 0
      %p213 = por %p211, %p212
      %p214 = scmp.ne.s32.totalorder %s202, %s203
      %p215 = scmp.eq.s32.totalorder %s36, 1
      %p216 = por %p214, %p215
      %p218 = scmp.ne.s32.totalorder %s203, %s217
      %p219 = scmp.eq.s32.totalorder %s36, 0
      %p220 = por %p218, %p219
      %s222 = sadd.s32 %s221, 1
      %p225 = scmp.eq.s32.totalorder %s30, 1
      %p226 = scmp.ne.s32.totalorder %s221, %s223
      %p227 = scmp.eq.s32.totalorder %s30, 0
      %p228 = por %p226, %p227
      %p229 = scmp.ne.s32.totalorder %s221, %s223
      %p230 = scmp.eq.s32.totalorder %s35, 1
      %p231 = por %p229, %p230
      %p232 = scmp.ne.s32.totalorder %s223, %s224
      %p233 = scmp.eq.s32.totalorder %s35, 0
      %p234 = por %p232, %p233
      %p235 = scmp.ne.s32.totalorder %s223, %s224
      %p236 = scmp.eq.s32.totalorder %s36, 1
      %p237 = por %p235, %p236
      %p239 = scmp.ne.s32.totalorder %s224, %s238
      %p240 = scmp.eq.s32.totalorder %s36, 0
      %p241 = por %p239, %p240
      %s243 = sadd.s32 %s242, 1
      %p246 = scmp.eq.s32.totalorder %s30, 1
      %p247 = scmp.ne.s32.totalorder %s242, %s244
      %p248 = scmp.eq.s32.totalorder %s30, 0
      %p249 = por %p247, %p248
      %p250 = scmp.ne.s32.totalorder %s242, %s244
      %p251 = scmp.eq.s32.totalorder %s35, 1
      %p252 = por %p250, %p251
      %p253 = scmp.ne.s32.totalorder %s244, %s245
      %p254 = scmp.eq.s32.totalorder %s35, 0
      %p255 = por %p253, %p254
      %p256 = scmp.ne.s32.totalorder %s244, %s245
      %p257 = scmp.eq.s32.totalorder %s36, 1
      %p258 = por %p256, %p257
      %p260 = scmp.ne.s32.totalorder %s245, %s259
      %p261 = scmp.eq.s32.totalorder %s36, 0
      %p262 = por %p260, %p261
      %s264 = sadd.s32 %s263, 1
      %p267 = scmp.eq.s32.totalorder %s30, 1
      %p268 = scmp.ne.s32.totalorder %s263, %s265
      %p269 = scmp.eq.s32.totalorder %s30, 0
      %p270 = por %p268, %p269
      %p271 = scmp.ne.s32.totalorder %s263, %s265
      %p272 = scmp.eq.s32.totalorder %s35, 1
      %p273 = por %p271, %p272
      %p274 = scmp.ne.s32.totalorder %s265, %s266
      %p275 = scmp.eq.s32.totalorder %s35, 0
      %p276 = por %p274, %p275
      %p277 = scmp.ne.s32.totalorder %s265, %s266
      %p278 = scmp.eq.s32.totalorder %s36, 1
      %p279 = por %p277, %p278
      %p281 = scmp.ne.s32.totalorder %s266, %s280
      %p282 = scmp.eq.s32.totalorder %s36, 0
      %p283 = por %p281, %p282
      %s285 = sadd.s32 %s284, 1
      %p288 = scmp.eq.s32.totalorder %s30, 1
      %p289 = scmp.ne.s32.totalorder %s284, %s286
      %p290 = scmp.eq.s32.totalorder %s30, 0
      %p291 = por %p289, %p290
      %p292 = scmp.ne.s32.totalorder %s284, %s286
      %p293 = scmp.eq.s32.totalorder %s35, 1
      %p294 = por %p292, %p293
      %p295 = scmp.ne.s32.totalorder %s286, %s287
      %p296 = scmp.eq.s32.totalorder %s35, 0
      %p297 = por %p295, %p296
      %p298 = scmp.ne.s32.totalorder %s286, %s287
      %p299 = scmp.eq.s32.totalorder %s36, 1
      %p300 = por %p298, %p299
      %p302 = scmp.ne.s32.totalorder %s287, %s301
      %p303 = scmp.eq.s32.totalorder %s36, 0
      %p304 = por %p302, %p303
      %s305 = ssub.s32 %s30, %s37
      %p306 = scmp.eq.s32.totalorder %s305, 0
      %s308 = sadd.s32 %s307, 1
      %s309 = scalar_select %p306, %s307, %s308
      %p312 = pneg %p306
      %p313 = scmp.eq.s32.totalorder %s30, 1
      %p314 = por %p312, %p313
      %p315 = scmp.ne.s32.totalorder %s307, %s310
      %p316 = scmp.eq.s32.totalorder %s30, 0
      %p317 = por %p315, %p316
      %p318 = scmp.ne.s32.totalorder %s307, %s310
      %p319 = scmp.eq.s32.totalorder %s35, 1
      %p320 = por %p318, %p319
      %p321 = scmp.ne.s32.totalorder %s310, %s311
      %p322 = scmp.eq.s32.totalorder %s35, 0
      %p323 = por %p321, %p322
      %p324 = scmp.ne.s32.totalorder %s310, %s311
      %p325 = scmp.eq.s32.totalorder %s36, 1
      %p326 = por %p324, %p325
      %p328 = scmp.ne.s32.totalorder %s311, %s327
      %p329 = scmp.eq.s32.totalorder %s36, 0
      %p330 = por %p328, %p329
      %p331 = scmp.le.s32.totalorder 1, %s30
      %p332 = scmp.lt.s32.totalorder %s30, 3
      %p333 = pnand %p331, %p332
      %p334 = pneg %p333
      // Predicated region
      $region9: #{tpu_custom_call.1} parent=5 // pred_check
        _
      $region10: #{tpu_custom_call.1} parent=5 // pred_check_branch
        %336 = sbr.rel (%p333) target = $region12
      $region11: #{tpu_custom_call.1} parent=5 // pred_region
        %s337 = ssub.s32 %s30, 1
        // Predicated region
        $region13: #{tpu_custom_call.1} parent=11 // pred_check
          %p338 = pneg %p129
        $region14: #{tpu_custom_call.1} parent=11 // pred_check_branch
          %340 = sbr.rel (%p338) target = $region16
        $region15: #{tpu_custom_call.1} parent=11 // pred_region
          %s342 = ssub.s32 512, 512
          %343 = vsyncadd [#allocation9], %s342
          %s344 = sshll.u32 [#allocation8], 4
          %s345 = int_to_ptr.vmem [resolvable:$true] %s344
          %350 = dma.hbm_to_vmem [thread:$0]  %s3, 512, %s345, [#allocation9], 128, 128, 8
        $region16: #{tpu_custom_call.1} parent=11 // pred_fallthru
          _
        // Predicated region
        $region17: #{tpu_custom_call.1} parent=11 // pred_check
          %p351 = pneg %p150
        $region18: #{tpu_custom_call.1} parent=11 // pred_check_branch
          %353 = sbr.rel (%p351) target = $region20
        $region19: #{tpu_custom_call.1} parent=11 // pred_region
          _
        $region20: #{tpu_custom_call.1} parent=11 // pred_fallthru
          _
        // Predicated region
        $region21: #{tpu_custom_call.1} parent=11 // pred_check
          %p354 = pneg %p171
        $region22: #{tpu_custom_call.1} parent=11 // pred_check_branch
          %356 = sbr.rel (%p354) target = $region24
        $region23: #{tpu_custom_call.1} parent=11 // pred_region
          %s358 = ssub.s32 512, 512
          %359 = vsyncadd [#allocation9], %s358
          %s360 = sshll.u32 [#allocation10], 4
          %s361 = int_to_ptr.vmem [resolvable:$true] %s360
          %366 = dma.hbm_to_vmem [thread:$0]  %s5, 512, %s361, [#allocation9], 128, 128, 8
        $region24: #{tpu_custom_call.1} parent=11 // pred_fallthru
          _
        // Predicated region
        $region25: #{tpu_custom_call.1} parent=11 // pred_check
          %p367 = pneg %p192
        $region26: #{tpu_custom_call.1} parent=11 // pred_check_branch
          %369 = sbr.rel (%p367) target = $region28
        $region27: #{tpu_custom_call.1} parent=11 // pred_region
          _
        $region28: #{tpu_custom_call.1} parent=11 // pred_fallthru
          _
        // Predicated region
        $region29: #{tpu_custom_call.1} parent=11 // pred_check
          %p370 = pneg %p213
        $region30: #{tpu_custom_call.1} parent=11 // pred_check_branch
          %372 = sbr.rel (%p370) target = $region32
        $region31: #{tpu_custom_call.1} parent=11 // pred_region
          %s374 = ssub.s32 512, 512
          %375 = vsyncadd [#allocation12], %s374
          %s376 = sshll.u32 [#allocation11], 4
          %s377 = int_to_ptr.vmem [resolvable:$true] %s376
          %382 = dma.hbm_to_vmem [thread:$0]  %s7, 512, %s377, [#allocation12], 128, 128, 8
        $region32: #{tpu_custom_call.1} parent=11 // pred_fallthru
          _
        // Predicated region
        $region33: #{tpu_custom_call.1} parent=11 // pred_check
          %p383 = pneg %p234
        $region34: #{tpu_custom_call.1} parent=11 // pred_check_branch
          %385 = sbr.rel (%p383) target = $region36
        $region35: #{tpu_custom_call.1} parent=11 // pred_region
          _
        $region36: #{tpu_custom_call.1} parent=11 // pred_fallthru
          _
        // Predicated region
        $region37: #{tpu_custom_call.1} parent=11 // pred_check
          %p386 = pneg %p255
        $region38: #{tpu_custom_call.1} parent=11 // pred_check_branch
          %388 = sbr.rel (%p386) target = $region40
        $region39: #{tpu_custom_call.1} parent=11 // pred_region
          %s390 = ssub.s32 512, 512
          %391 = vsyncadd [#allocation12], %s390
          %s392 = sshll.u32 [#allocation13], 4
          %s393 = int_to_ptr.vmem [resolvable:$true] %s392
          %398 = dma.hbm_to_vmem [thread:$0]  %s9, 512, %s393, [#allocation12], 128, 128, 8
        $region40: #{tpu_custom_call.1} parent=11 // pred_fallthru
          _
        // Predicated region
        $region41: #{tpu_custom_call.1} parent=11 // pred_check
          %p399 = pneg %p276
        $region42: #{tpu_custom_call.1} parent=11 // pred_check_branch
          %401 = sbr.rel (%p399) target = $region44
        $region43: #{tpu_custom_call.1} parent=11 // pred_region
          _
        $region44: #{tpu_custom_call.1} parent=11 // pred_fallthru
          _
        // Predicated region
        $region45: #{tpu_custom_call.1} parent=11 // pred_check
          %p402 = pneg %p297
        $region46: #{tpu_custom_call.1} parent=11 // pred_check_branch
          %404 = sbr.rel (%p402) target = $region48
        $region47: #{tpu_custom_call.1} parent=11 // pred_region
          %s406 = ssub.s32 512, 512
          %407 = vsyncadd [#allocation15], %s406
          %s408 = sshll.u32 [#allocation14], 4
          %s409 = int_to_ptr.vmem [resolvable:$true] %s408
          %414 = dma.hbm_to_vmem [thread:$0]  %s11, 512, %s409, [#allocation15], 128, 128, 8
        $region48: #{tpu_custom_call.1} parent=11 // pred_fallthru
          _
      $region12: #{tpu_custom_call.1} parent=5 // pred_fallthru
        _
      %p415 = scmp.lt.s32.totalorder %s30, 2
      // Predicated region
      $region49: #{tpu_custom_call.1} parent=5 // pred_check
        %p416 = pneg %p415
      $region50: #{tpu_custom_call.1} parent=5 // pred_check_branch
        %418 = sbr.rel (%p416) target = $region52
      $region51: #{tpu_custom_call.1} parent=5 // pred_region
        // Predicated region
        $region53: #{tpu_custom_call.1} parent=51 // pred_check
          %p419 = pneg %p50
        $region54: #{tpu_custom_call.1} parent=51 // pred_check_branch
          %421 = sbr.rel (%p419) target = $region56
        $region55: #{tpu_custom_call.1} parent=51 // pred_region
          %s422 = sand.u32 %s40, 1
          %s423 = scalar_lea.sflag [#allocation3], %s422
          %s424 = sand.u32 %s40, 1
          %s425 = smul.addr %s424, 16
          %s426 = scalar_lea.vmem [#allocation2], %s425
          %s427 = smul.u32 2, %s30
          %s429 = ssub.s32 256, 256
          %430 = vsyncadd %s423, %s429
          %s431 = smul.addr %s427, 128
          %s432 = scalar_lea.hbm %s0, %s431
          %s433 = sshll.u32 %s426, 4
          %s434 = int_to_ptr.vmem [resolvable:$true] %s433
          %439 = dma.hbm_to_vmem [thread:$0]  %s432, 256, %s434, %s423, 128, 128, 8
        $region56: #{tpu_custom_call.1} parent=51 // pred_fallthru
          _
        // Predicated region
        $region57: #{tpu_custom_call.1} parent=51 // pred_check
          %p440 = pneg %p76
        $region58: #{tpu_custom_call.1} parent=51 // pred_check_branch
          %442 = sbr.rel (%p440) target = $region60
        $region59: #{tpu_custom_call.1} parent=51 // pred_region
          %s443 = sand.u32 %s30, 1
          %s444 = scalar_lea.sflag [#allocation6], %s443
          %s445 = sand.u32 %s66, 1
          %s446 = smul.addr %s445, 16
          %s447 = scalar_lea.vmem [#allocation5], %s446
          %s448 = smul.u32 2, %s30
          %s450 = ssub.s32 256, 256
          %451 = vsyncadd %s444, %s450
          %s452 = smul.addr %s448, 128
          %s453 = scalar_lea.hbm %s1, %s452
          %s454 = sshll.u32 %s447, 4
          %s455 = int_to_ptr.vmem [resolvable:$true] %s454
          %460 = dma.hbm_to_vmem [thread:$0]  %s453, 256, %s455, %s444, 128, 128, 8
        $region60: #{tpu_custom_call.1} parent=51 // pred_fallthru
          _
        // Predicated region
        $region61: #{tpu_custom_call.1} parent=51 // pred_check
          %p461 = pneg %p102
        $region62: #{tpu_custom_call.1} parent=51 // pred_check_branch
          %463 = sbr.rel (%p461) target = $region64
        $region63: #{tpu_custom_call.1} parent=51 // pred_region
          %s464 = sand.u32 %s30, 1
          %s465 = scalar_lea.sflag [#allocation6], %s464
          %s466 = sand.u32 %s92, 1
          %s467 = smul.addr %s466, 16
          %s468 = scalar_lea.vmem [#allocation7], %s467
          %s469 = smul.u32 2, %s30
          %s471 = ssub.s32 256, 256
          %472 = vsyncadd %s465, %s471
          %s473 = smul.addr %s469, 128
          %s474 = scalar_lea.hbm %s2, %s473
          %s475 = sshll.u32 %s468, 4
          %s476 = int_to_ptr.vmem [resolvable:$true] %s475
          %481 = dma.hbm_to_vmem [thread:$0]  %s474, 256, %s476, %s465, 128, 128, 8
        $region64: #{tpu_custom_call.1} parent=51 // pred_fallthru
          _
      $region52: #{tpu_custom_call.1} parent=5 // pred_fallthru
        _
      %p482 = scmp.le.s32.totalorder 1, %s30
      %p483 = scmp.lt.s32.totalorder %s30, 3
      %p484 = pnand %p482, %p483
      %p485 = pneg %p484
      // Predicated region
      $region65: #{tpu_custom_call.1} parent=5 // pred_check
        _
      $region66: #{tpu_custom_call.1} parent=5 // pred_check_branch
        %487 = sbr.rel (%p484) target = $region68
      $region67: #{tpu_custom_call.1} parent=5 // pred_region
        %s488 = ssub.s32 %s30, 1
        %s489 = sand.u32 %s43, 1
        %s490 = scalar_lea.sflag [#allocation3], %s489
        %s491 = sand.u32 %s43, 1
        %s492 = smul.addr %s491, 16
        %s493 = scalar_lea.vmem [#allocation2], %s492
        // Predicated region
        $region69: #{tpu_custom_call.1} parent=67 // pred_check
          %p494 = pneg %p56
        $region70: #{tpu_custom_call.1} parent=67 // pred_check_branch
          %496 = sbr.rel (%p494) target = $region72
        $region71: #{tpu_custom_call.1} parent=67 // pred_region
          %497 = dma.done %s490, 256
        $region72: #{tpu_custom_call.1} parent=67 // pred_fallthru
          _
        %s498 = sand.u32 %s35, 1
        %s499 = scalar_lea.sflag [#allocation6], %s498
        %s500 = sand.u32 %s69, 1
        %s501 = smul.addr %s500, 16
        %s502 = scalar_lea.vmem [#allocation5], %s501
        // Predicated region
        $region73: #{tpu_custom_call.1} parent=67 // pred_check
          %p503 = pneg %p82
        $region74: #{tpu_custom_call.1} parent=67 // pred_check_branch
          %505 = sbr.rel (%p503) target = $region76
        $region75: #{tpu_custom_call.1} parent=67 // pred_region
          %506 = dma.done %s499, 256
        $region76: #{tpu_custom_call.1} parent=67 // pred_fallthru
          _
        %s507 = sand.u32 %s35, 1
        %s508 = scalar_lea.sflag [#allocation6], %s507
        %s509 = sand.u32 %s95, 1
        %s510 = smul.addr %s509, 16
        %s511 = scalar_lea.vmem [#allocation7], %s510
        // Predicated region
        $region77: #{tpu_custom_call.1} parent=67 // pred_check
          %p512 = pneg %p108
        $region78: #{tpu_custom_call.1} parent=67 // pred_check_branch
          %514 = sbr.rel (%p512) target = $region80
        $region79: #{tpu_custom_call.1} parent=67 // pred_region
          %515 = dma.done %s508, 256
        $region80: #{tpu_custom_call.1} parent=67 // pred_fallthru
          _
        // Predicated region
        $region81: #{tpu_custom_call.1} parent=67 // pred_check
          %p516 = pneg %p129
        $region82: #{tpu_custom_call.1} parent=67 // pred_check_branch
          %518 = sbr.rel (%p516) target = $region84
        $region83: #{tpu_custom_call.1} parent=67 // pred_region
          %519 = dma.done [#allocation9], 512
        $region84: #{tpu_custom_call.1} parent=67 // pred_fallthru
          _
        // Predicated region
        $region85: #{tpu_custom_call.1} parent=67 // pred_check
          %p520 = pneg %p171
        $region86: #{tpu_custom_call.1} parent=67 // pred_check_branch
          %522 = sbr.rel (%p520) target = $region88
        $region87: #{tpu_custom_call.1} parent=67 // pred_region
          %523 = dma.done [#allocation9], 512
        $region88: #{tpu_custom_call.1} parent=67 // pred_fallthru
          _
        // Predicated region
        $region89: #{tpu_custom_call.1} parent=67 // pred_check
          %p524 = pneg %p213
        $region90: #{tpu_custom_call.1} parent=67 // pred_check_branch
          %526 = sbr.rel (%p524) target = $region92
        $region91: #{tpu_custom_call.1} parent=67 // pred_region
          %527 = dma.done [#allocation12], 512
        $region92: #{tpu_custom_call.1} parent=67 // pred_fallthru
          _
        // Predicated region
        $region93: #{tpu_custom_call.1} parent=67 // pred_check
          %p528 = pneg %p255
        $region94: #{tpu_custom_call.1} parent=67 // pred_check_branch
          %530 = sbr.rel (%p528) target = $region96
        $region95: #{tpu_custom_call.1} parent=67 // pred_region
          %531 = dma.done [#allocation12], 512
        $region96: #{tpu_custom_call.1} parent=67 // pred_fallthru
          _
        // Predicated region
        $region97: #{tpu_custom_call.1} parent=67 // pred_check
          %p532 = pneg %p297
        $region98: #{tpu_custom_call.1} parent=67 // pred_check_branch
          %534 = sbr.rel (%p532) target = $region100
        $region99: #{tpu_custom_call.1} parent=67 // pred_region
          %535 = dma.done [#allocation15], 512
        $region100: #{tpu_custom_call.1} parent=67 // pred_fallthru
          _
        %s536 = sand.u32 %s43, 1
        %s537 = scalar_lea.sflag [#allocation3], %s536
        %s538 = sand.u32 %s43, 1
        %s539 = smul.addr %s538, 16
        %s540 = scalar_lea.vmem [#allocation2], %s539
        %p541 = pneg %p56
        %p542 = pneg %p53
        %s543 = sand.u32 %s35, 1
        %s544 = scalar_lea.sflag [#allocation6], %s543
        %s545 = sand.u32 %s69, 1
        %s546 = smul.addr %s545, 16
        %s547 = scalar_lea.vmem [#allocation5], %s546
        %p548 = pneg %p82
        %p549 = pneg %p79
        %s550 = sand.u32 %s35, 1
        %s551 = scalar_lea.sflag [#allocation6], %s550
        %s552 = sand.u32 %s95, 1
        %s553 = smul.addr %s552, 16
        %s554 = scalar_lea.vmem [#allocation7], %s553
        %p555 = pneg %p108
        %p556 = pneg %p105
        %p557 = pneg %p129
        %p558 = pneg %p126
        %p559 = pneg %p150
        %p560 = pneg %p147
        %p561 = pneg %p171
        %p562 = pneg %p168
        %p563 = pneg %p192
        %p564 = pneg %p189
        %p565 = pneg %p213
        %p566 = pneg %p210
        %p567 = pneg %p234
        %p568 = pneg %p231
        %p569 = pneg %p255
        %p570 = pneg %p252
        %p571 = pneg %p276
        %p572 = pneg %p273
        %p573 = pneg %p297
        %p574 = pneg %p294
        %p575 = pneg %p323
        %p576 = pneg %p320
        %s577 = sand.u32 %s310, 1
        %s578 = scalar_lea.sflag [#allocation4], %s577
        %s579 = sand.u32 %s310, 1
        %s580 = smul.addr %s579, 16
        %s581 = scalar_lea.vmem [#allocation16], %s580
        %s582 = smul.u32 2, %s35
        %s583 = smul.u32 2, %s35
        %s584 = smul.u32 2, %s35
        %s585 = smul.u32 2, %s35
        %v586 = vld [vmem:[%s493] sm:$0xff]
        %v587 = vld [vmem:[%s493 + $0x8] sm:$0xff]
        %v588 = vld [vmem:[#allocation8] sm:$0xff]
        %v589 = vld [vmem:[#allocation8 + $0x8] sm:$0xff]
        %v590 = vld [vmem:[#allocation8 + $0x10] sm:$0xff]
        %v591 = vld [vmem:[#allocation8 + $0x18] sm:$0xff]
        %v592 = vld [vmem:[%s4] sm:$0x1]
        %v594 = vlaneseq
        %v595 = vshrl.u32 %v594, 7
        %v596 = vsub.s32 0, %v595
        %v597 = vrot.slane %v592, %v596
        %vm599 = vcmask 261120
        %v601 = vsel %vm599, %v586, 0
        %v604 = vsel %vm599, %v587, 0
        %606 = vmatprep.subr.mxu0 0.0
        %607 = vmatpush1.msra.mxu0 0.0
        %608 = vmatprep.subr.mxu0 0.0
        %609 = vmatpush1.msra.mxu0 0.0
        %610 = vmatprep.subr.mxu0 0.0
        %611 = vmatpush1.msra.mxu0 0.0
        %612 = vmatprep.subr.mxu0 0.0
        %613 = vmatpush1.msra.mxu0 0.0
        %614 = vmatprep.subr.mxu0 0.0
        %615 = vmatpush1.msra.mxu0 0.0
        %616 = vmatprep.subr.mxu0 0.0
        %617 = vmatpush1.msra.mxu0 0.0
        %618 = vmatprep.subr.mxu0 0.0
        %619 = vmatpush1.msra.mxu0 0.0
        %620 = vmatprep.subr.mxu0 0.0
        %621 = vmatpush1.msra.mxu0 0.0
        %622 = vmatprep.subr.mxu0 0.0
        %623 = vmatpush1.msra.mxu0 0.0
        %624 = vmatprep.subr.mxu0 0.0
        %625 = vmatpush1.msra.mxu0 0.0
        %626 = vmatprep.subr.mxu0 0.0
        %627 = vmatpush1.msra.mxu0 0.0
        %628 = vmatprep.subr.mxu0 0.0
        %629 = vmatpush1.msra.mxu0 0.0
        %630 = vmatprep.subr.mxu0 0.0
        %631 = vmatpush1.msra.mxu0 %v591
        %632 = vmatprep.subr.mxu0 0.0
        %633 = vmatpush1.msra.mxu0 %v590
        %634 = vmatprep.subr.mxu0 0.0
        %635 = vmatpush1.msra.mxu0 %v589
        %636 = vmatprep.subr.mxu0 0.0
        %637 = vmatpush1.msra.mxu0 %v588
        %638 = vmatprep.subr.mxu0 0.0
        %639 = vmatpush2.msra.mxu0 0.0
        %640 = vmatprep.subr.mxu0 0.0
        %641 = vmatpush2.msra.mxu0 0.0
        %642 = vmatprep.subr.mxu0 0.0
        %643 = vmatpush2.msra.mxu0 0.0
        %644 = vmatprep.subr.mxu0 0.0
        %645 = vmatpush2.msra.mxu0 0.0
        %646 = vmatprep.subr.mxu0 0.0
        %647 = vmatpush2.msra.mxu0 0.0
        %648 = vmatprep.subr.mxu0 0.0
        %649 = vmatpush2.msra.mxu0 0.0
        %650 = vmatprep.subr.mxu0 0.0
        %651 = vmatpush2.msra.mxu0 0.0
        %652 = vmatprep.subr.mxu0 0.0
        %653 = vmatpush2.msra.mxu0 0.0
        %654 = vmatprep.subr.mxu0 0.0
        %655 = vmatpush2.msra.mxu0 0.0
        %656 = vmatprep.subr.mxu0 0.0
        %657 = vmatpush2.msra.mxu0 0.0
        %658 = vmatprep.subr.mxu0 0.0
        %659 = vmatpush2.msra.mxu0 0.0
        %660 = vmatprep.subr.mxu0 0.0
        %661 = vmatpush2.msra.mxu0 0.0
        %662 = vmatprep.subr.mxu0 0.0
        %663 = vmatpush2.msra.mxu0 0.0
        %664 = vmatprep.subr.mxu0 0.0
        %665 = vmatpush2.msra.mxu0 0.0
        %666 = vmatprep.subr.mxu0 0.0
        %667 = vmatpush2.msra.mxu0 0.0
        %668 = vmatprep.subr.mxu0 0.0
        %669 = vmatpush2.msra.mxu0 0.0
        %670 = vmatprep.mubr.f32.mxu0 0.0
        %671 = vmatmul.mubr.f32.gmra.mxu0 %v601
        %v672 = vpop.f32.mrf.mxu0
        %v673 = vadd.f32 %v597, %v672
        %v674 = vpop.f32.mrf.mxu0
        %675 = vmatprep.mubr.f32.mxu0 0.0
        %676 = vmatmul.mubr.f32.gmra.mxu0 %v604
        %v677 = vpop.f32.mrf.mxu0
        %v678 = vadd.f32 %v597, %v677
        %v679 = vpop.f32.mrf.mxu0
        %680 = vdwg.mxu0
        %v681 = vld [vmem:[%s502] sm:$0xff]
        %v682 = vld [vmem:[%s502 + $0x8] sm:$0xff]
        %v683 = vld [vmem:[#allocation10] sm:$0xff]
        %v684 = vld [vmem:[#allocation10 + $0x8] sm:$0xff]
        %v685 = vld [vmem:[#allocation10 + $0x10] sm:$0xff]
        %v686 = vld [vmem:[#allocation10 + $0x18] sm:$0xff]
        %v687 = vld [vmem:[%s6] sm:$0x1]
        %v689 = vlaneseq
        %v690 = vshrl.u32 %v689, 7
        %v691 = vsub.s32 0, %v690
        %v692 = vrot.slane %v687, %v691
        %v695 = vsel %vm599, %v681, 0
        %v698 = vsel %vm599, %v682, 0
        %700 = vmatprep.subr.mxu0 0.0
        %701 = vmatpush1.msra.mxu0 0.0
        %702 = vmatprep.subr.mxu0 0.0
        %703 = vmatpush1.msra.mxu0 0.0
        %704 = vmatprep.subr.mxu0 0.0
        %705 = vmatpush1.msra.mxu0 0.0
        %706 = vmatprep.subr.mxu0 0.0
        %707 = vmatpush1.msra.mxu0 0.0
        %708 = vmatprep.subr.mxu0 0.0
        %709 = vmatpush1.msra.mxu0 0.0
        %710 = vmatprep.subr.mxu0 0.0
        %711 = vmatpush1.msra.mxu0 0.0
        %712 = vmatprep.subr.mxu0 0.0
        %713 = vmatpush1.msra.mxu0 0.0
        %714 = vmatprep.subr.mxu0 0.0
        %715 = vmatpush1.msra.mxu0 0.0
        %716 = vmatprep.subr.mxu0 0.0
        %717 = vmatpush1.msra.mxu0 0.0
        %718 = vmatprep.subr.mxu0 0.0
        %719 = vmatpush1.msra.mxu0 0.0
        %720 = vmatprep.subr.mxu0 0.0
        %721 = vmatpush1.msra.mxu0 0.0
        %722 = vmatprep.subr.mxu0 0.0
        %723 = vmatpush1.msra.mxu0 0.0
        %724 = vmatprep.subr.mxu0 0.0
        %725 = vmatpush1.msra.mxu0 %v686
        %726 = vmatprep.subr.mxu0 0.0
        %727 = vmatpush1.msra.mxu0 %v685
        %728 = vmatprep.subr.mxu0 0.0
        %729 = vmatpush1.msra.mxu0 %v684
        %730 = vmatprep.subr.mxu0 0.0
        %731 = vmatpush1.msra.mxu0 %v683
        %732 = vmatprep.subr.mxu0 0.0
        %733 = vmatpush2.msra.mxu0 0.0
        %734 = vmatprep.subr.mxu0 0.0
        %735 = vmatpush2.msra.mxu0 0.0
        %736 = vmatprep.subr.mxu0 0.0
        %737 = vmatpush2.msra.mxu0 0.0
        %738 = vmatprep.subr.mxu0 0.0
        %739 = vmatpush2.msra.mxu0 0.0
        %740 = vmatprep.subr.mxu0 0.0
        %741 = vmatpush2.msra.mxu0 0.0
        %742 = vmatprep.subr.mxu0 0.0
        %743 = vmatpush2.msra.mxu0 0.0
        %744 = vmatprep.subr.mxu0 0.0
        %745 = vmatpush2.msra.mxu0 0.0
        %746 = vmatprep.subr.mxu0 0.0
        %747 = vmatpush2.msra.mxu0 0.0
        %748 = vmatprep.subr.mxu0 0.0
        %749 = vmatpush2.msra.mxu0 0.0
        %750 = vmatprep.subr.mxu0 0.0
        %751 = vmatpush2.msra.mxu0 0.0
        %752 = vmatprep.subr.mxu0 0.0
        %753 = vmatpush2.msra.mxu0 0.0
        %754 = vmatprep.subr.mxu0 0.0
        %755 = vmatpush2.msra.mxu0 0.0
        %756 = vmatprep.subr.mxu0 0.0
        %757 = vmatpush2.msra.mxu0 0.0
        %758 = vmatprep.subr.mxu0 0.0
        %759 = vmatpush2.msra.mxu0 0.0
        %760 = vmatprep.subr.mxu0 0.0
        %761 = vmatpush2.msra.mxu0 0.0
        %762 = vmatprep.subr.mxu0 0.0
        %763 = vmatpush2.msra.mxu0 0.0
        %764 = vmatprep.mubr.f32.mxu0 0.0
        %765 = vmatmul.mubr.f32.gmra.mxu0 %v695
        %v766 = vpop.f32.mrf.mxu0
        %v767 = vadd.f32 %v692, %v766
        %v768 = vpop.f32.mrf.mxu0
        %769 = vmatprep.mubr.f32.mxu0 0.0
        %770 = vmatmul.mubr.f32.gmra.mxu0 %v698
        %v771 = vpop.f32.mrf.mxu0
        %v772 = vadd.f32 %v692, %v771
        %v773 = vpop.f32.mrf.mxu0
        %774 = vdwg.mxu0
        %v775 = vld [vmem:[%s511] sm:$0xff]
        %v776 = vld [vmem:[%s511 + $0x8] sm:$0xff]
        %v777 = vld [vmem:[#allocation11] sm:$0xff]
        %v778 = vld [vmem:[#allocation11 + $0x8] sm:$0xff]
        %v779 = vld [vmem:[#allocation11 + $0x10] sm:$0xff]
        %v780 = vld [vmem:[#allocation11 + $0x18] sm:$0xff]
        %v781 = vld [vmem:[%s8] sm:$0x1]
        %v783 = vlaneseq
        %v784 = vshrl.u32 %v783, 7
        %v785 = vsub.s32 0, %v784
        %v786 = vrot.slane %v781, %v785
        %v789 = vsel %vm599, %v775, 0
        %v792 = vsel %vm599, %v776, 0
        %794 = vmatprep.subr.mxu0 0.0
        %795 = vmatpush1.msra.mxu0 0.0
        %796 = vmatprep.subr.mxu0 0.0
        %797 = vmatpush1.msra.mxu0 0.0
        %798 = vmatprep.subr.mxu0 0.0
        %799 = vmatpush1.msra.mxu0 0.0
        %800 = vmatprep.subr.mxu0 0.0
        %801 = vmatpush1.msra.mxu0 0.0
        %802 = vmatprep.subr.mxu0 0.0
        %803 = vmatpush1.msra.mxu0 0.0
        %804 = vmatprep.subr.mxu0 0.0
        %805 = vmatpush1.msra.mxu0 0.0
        %806 = vmatprep.subr.mxu0 0.0
        %807 = vmatpush1.msra.mxu0 0.0
        %808 = vmatprep.subr.mxu0 0.0
        %809 = vmatpush1.msra.mxu0 0.0
        %810 = vmatprep.subr.mxu0 0.0
        %811 = vmatpush1.msra.mxu0 0.0
        %812 = vmatprep.subr.mxu0 0.0
        %813 = vmatpush1.msra.mxu0 0.0
        %814 = vmatprep.subr.mxu0 0.0
        %815 = vmatpush1.msra.mxu0 0.0
        %816 = vmatprep.subr.mxu0 0.0
        %817 = vmatpush1.msra.mxu0 0.0
        %818 = vmatprep.subr.mxu0 0.0
        %819 = vmatpush1.msra.mxu0 %v780
        %820 = vmatprep.subr.mxu0 0.0
        %821 = vmatpush1.msra.mxu0 %v779
        %822 = vmatprep.subr.mxu0 0.0
        %823 = vmatpush1.msra.mxu0 %v778
        %824 = vmatprep.subr.mxu0 0.0
        %825 = vmatpush1.msra.mxu0 %v777
        %826 = vmatprep.subr.mxu0 0.0
        %827 = vmatpush2.msra.mxu0 0.0
        %828 = vmatprep.subr.mxu0 0.0
        %829 = vmatpush2.msra.mxu0 0.0
        %830 = vmatprep.subr.mxu0 0.0
        %831 = vmatpush2.msra.mxu0 0.0
        %832 = vmatprep.subr.mxu0 0.0
        %833 = vmatpush2.msra.mxu0 0.0
        %834 = vmatprep.subr.mxu0 0.0
        %835 = vmatpush2.msra.mxu0 0.0
        %836 = vmatprep.subr.mxu0 0.0
        %837 = vmatpush2.msra.mxu0 0.0
        %838 = vmatprep.subr.mxu0 0.0
        %839 = vmatpush2.msra.mxu0 0.0
        %840 = vmatprep.subr.mxu0 0.0
        %841 = vmatpush2.msra.mxu0 0.0
        %842 = vmatprep.subr.mxu0 0.0
        %843 = vmatpush2.msra.mxu0 0.0
        %844 = vmatprep.subr.mxu0 0.0
        %845 = vmatpush2.msra.mxu0 0.0
        %846 = vmatprep.subr.mxu0 0.0
        %847 = vmatpush2.msra.mxu0 0.0
        %848 = vmatprep.subr.mxu0 0.0
        %849 = vmatpush2.msra.mxu0 0.0
        %850 = vmatprep.subr.mxu0 0.0
        %851 = vmatpush2.msra.mxu0 0.0
        %852 = vmatprep.subr.mxu0 0.0
        %853 = vmatpush2.msra.mxu0 0.0
        %854 = vmatprep.subr.mxu0 0.0
        %855 = vmatpush2.msra.mxu0 0.0
        %856 = vmatprep.subr.mxu0 0.0
        %857 = vmatpush2.msra.mxu0 0.0
        %858 = vmatprep.mubr.f32.mxu0 0.0
        %859 = vmatmul.mubr.f32.gmra.mxu0 %v789
        %v860 = vpop.f32.mrf.mxu0
        %v861 = vadd.f32 %v786, %v860
        %v862 = vpop.f32.mrf.mxu0
        %863 = vmatprep.mubr.f32.mxu0 0.0
        %864 = vmatmul.mubr.f32.gmra.mxu0 %v792
        %v865 = vpop.f32.mrf.mxu0
        %v866 = vadd.f32 %v786, %v865
        %v867 = vpop.f32.mrf.mxu0
        %868 = vdwg.mxu0
        %vm869 = vcmp.gt.f32.partialorder %v673, 0.0
        %vm870 = vcmp.gt.f32.partialorder %v678, 0.0
        %v871 = vadd.f32 %v673, 1.0
        %v872 = vadd.f32 %v678, 1.0
        %v873 = vmul.f32 %v673, 1.442695
        %v874 = vpow.pop %v873
        %v875 = vmul.f32 %v678, 1.442695
        %v876 = vpow.pop %v875
        %v877 = vsel %vm869, %v871, %v874
        %v878 = vsel %vm870, %v872, %v876
        %vm879 = vcmp.gt.f32.partialorder %v767, 0.0
        %vm880 = vcmp.gt.f32.partialorder %v772, 0.0
        %v881 = vadd.f32 %v767, 1.0
        %v882 = vadd.f32 %v772, 1.0
        %v883 = vmul.f32 %v767, 1.442695
        %v884 = vpow.pop %v883
        %v885 = vmul.f32 %v772, 1.442695
        %v886 = vpow.pop %v885
        %v887 = vsel %vm879, %v881, %v884
        %v888 = vsel %vm880, %v882, %v886
        %889 = vxpose.xlu0.b32.start [1/16] %v887, 128
        %890 = vxpose.xlu0.b32.cont [2/16] 0.0, 128
        %891 = vxpose.xlu0.b32.cont [3/16] 0.0, 128
        %892 = vxpose.xlu0.b32.cont [4/16] 0.0, 128
        %893 = vxpose.xlu0.b32.cont [5/16] 0.0, 128
        %894 = vxpose.xlu0.b32.cont [6/16] 0.0, 128
        %895 = vxpose.xlu0.b32.cont [7/16] 0.0, 128
        %896 = vxpose.xlu0.b32.cont [8/16] 0.0, 128
        %897 = vxpose.xlu0.b32.cont [9/16] 0.0, 128
        %898 = vxpose.xlu0.b32.cont [10/16] 0.0, 128
        %899 = vxpose.xlu0.b32.cont [11/16] 0.0, 128
        %900 = vxpose.xlu0.b32.cont [12/16] 0.0, 128
        %901 = vxpose.xlu0.b32.cont [13/16] 0.0, 128
        %902 = vxpose.xlu0.b32.cont [14/16] 0.0, 128
        %903 = vxpose.xlu0.b32.cont [15/16] 0.0, 128
        %904 = vxpose.xlu0.b32.end [16/16] 0.0, 128
        %v905 = vpop.trf.xlu0
        %v906 = vpop.trf.xlu0
        %v907 = vpop.trf.xlu0
        %v908 = vpop.trf.xlu0
        %v909 = vpop.trf.xlu0
        %v910 = vpop.trf.xlu0
        %v911 = vpop.trf.xlu0
        %v912 = vpop.trf.xlu0
        %v913 = vpop.trf.xlu0
        %v914 = vpop.trf.xlu0
        %v915 = vpop.trf.xlu0
        %v916 = vpop.trf.xlu0
        %v917 = vpop.trf.xlu0
        %v918 = vpop.trf.xlu0
        %v919 = vpop.trf.xlu0
        %v920 = vpop.trf.xlu0
        %vm921 = vcmask 64512
        %v923 = vsel %vm921, %v905, 0
        %v926 = vsel %vm921, %v906, 0
        %v929 = vsel %vm921, %v907, 0
        %v932 = vsel %vm921, %v908, 0
        %934 = vmatprep.subr.mxu0 0.0
        %935 = vmatpush1.msra.mxu0 0.0
        %936 = vmatprep.subr.mxu0 0.0
        %937 = vmatpush1.msra.mxu0 0.0
        %938 = vmatprep.subr.mxu0 0.0
        %939 = vmatpush1.msra.mxu0 0.0
        %940 = vmatprep.subr.mxu0 0.0
        %941 = vmatpush1.msra.mxu0 0.0
        %942 = vmatprep.subr.mxu0 0.0
        %943 = vmatpush1.msra.mxu0 0.0
        %944 = vmatprep.subr.mxu0 0.0
        %945 = vmatpush1.msra.mxu0 0.0
        %946 = vmatprep.subr.mxu0 0.0
        %947 = vmatpush1.msra.mxu0 0.0
        %948 = vmatprep.subr.mxu0 0.0
        %949 = vmatpush1.msra.mxu0 0.0
        %950 = vmatprep.subr.mxu0 0.0
        %951 = vmatpush1.msra.mxu0 0.0
        %952 = vmatprep.subr.mxu0 0.0
        %953 = vmatpush1.msra.mxu0 0.0
        %954 = vmatprep.subr.mxu0 0.0
        %955 = vmatpush1.msra.mxu0 0.0
        %956 = vmatprep.subr.mxu0 0.0
        %957 = vmatpush1.msra.mxu0 0.0
        %958 = vmatprep.subr.mxu0 0.0
        %959 = vmatpush1.msra.mxu0 0.0
        %960 = vmatprep.subr.mxu0 0.0
        %961 = vmatpush1.msra.mxu0 0.0
        %962 = vmatprep.subr.mxu0 0.0
        %963 = vmatpush1.msra.mxu0 0.0
        %964 = vmatprep.subr.mxu0 0.0
        %965 = vmatpush1.msra.mxu0 %v861
        %966 = vmatprep.subr.mxu0 0.0
        %967 = vmatpush2.msra.mxu0 0.0
        %968 = vmatprep.subr.mxu0 0.0
        %969 = vmatpush2.msra.mxu0 0.0
        %970 = vmatprep.subr.mxu0 0.0
        %971 = vmatpush2.msra.mxu0 0.0
        %972 = vmatprep.subr.mxu0 0.0
        %973 = vmatpush2.msra.mxu0 0.0
        %974 = vmatprep.subr.mxu0 0.0
        %975 = vmatpush2.msra.mxu0 0.0
        %976 = vmatprep.subr.mxu0 0.0
        %977 = vmatpush2.msra.mxu0 0.0
        %978 = vmatprep.subr.mxu0 0.0
        %979 = vmatpush2.msra.mxu0 0.0
        %980 = vmatprep.subr.mxu0 0.0
        %981 = vmatpush2.msra.mxu0 0.0
        %982 = vmatprep.subr.mxu0 0.0
        %983 = vmatpush2.msra.mxu0 0.0
        %984 = vmatprep.subr.mxu0 0.0
        %985 = vmatpush2.msra.mxu0 0.0
        %986 = vmatprep.subr.mxu0 0.0
        %987 = vmatpush2.msra.mxu0 0.0
        %988 = vmatprep.subr.mxu0 0.0
        %989 = vmatpush2.msra.mxu0 0.0
        %990 = vmatprep.subr.mxu0 0.0
        %991 = vmatpush2.msra.mxu0 0.0
        %992 = vmatprep.subr.mxu0 0.0
        %993 = vmatpush2.msra.mxu0 0.0
        %994 = vmatprep.subr.mxu0 0.0
        %995 = vmatpush2.msra.mxu0 0.0
        %996 = vmatprep.subr.mxu0 0.0
        %997 = vmatpush2.msra.mxu0 0.0
        %998 = vmatprep.mubr.f32.mxu0 0.0
        %999 = vmatmul.mubr.f32.gmra.mxu0 %v923
        %v1000 = vpop.f32.mrf.mxu0
        %v1001 = vadd.f32 0.0, %v1000
        %v1002 = vpop.f32.mrf.mxu0
        %1003 = vmatprep.mubr.f32.mxu0 0.0
        %1004 = vmatmul.mubr.f32.gmra.mxu0 %v926
        %v1005 = vpop.f32.mrf.mxu0
        %v1006 = vadd.f32 0.0, %v1005
        %v1007 = vpop.f32.mrf.mxu0
        %1008 = vmatprep.mubr.f32.mxu0 0.0
        %1009 = vmatmul.mubr.f32.gmra.mxu0 %v929
        %v1010 = vpop.f32.mrf.mxu0
        %v1011 = vadd.f32 0.0, %v1010
        %v1012 = vpop.f32.mrf.mxu0
        %1013 = vmatprep.mubr.f32.mxu0 0.0
        %1014 = vmatmul.mubr.f32.gmra.mxu0 %v932
        %v1015 = vpop.f32.mrf.mxu0
        %v1016 = vadd.f32 0.0, %v1015
        %v1017 = vpop.f32.mrf.mxu0
        %1018 = vdwg.mxu0
        %1019 = vxpose.xlu0.b32.start [1/16] %v888, 128
        %1020 = vxpose.xlu0.b32.cont [2/16] 0.0, 128
        %1021 = vxpose.xlu0.b32.cont [3/16] 0.0, 128
        %1022 = vxpose.xlu0.b32.cont [4/16] 0.0, 128
        %1023 = vxpose.xlu0.b32.cont [5/16] 0.0, 128
        %1024 = vxpose.xlu0.b32.cont [6/16] 0.0, 128
        %1025 = vxpose.xlu0.b32.cont [7/16] 0.0, 128
        %1026 = vxpose.xlu0.b32.cont [8/16] 0.0, 128
        %1027 = vxpose.xlu0.b32.cont [9/16] 0.0, 128
        %1028 = vxpose.xlu0.b32.cont [10/16] 0.0, 128
        %1029 = vxpose.xlu0.b32.cont [11/16] 0.0, 128
        %1030 = vxpose.xlu0.b32.cont [12/16] 0.0, 128
        %1031 = vxpose.xlu0.b32.cont [13/16] 0.0, 128
        %1032 = vxpose.xlu0.b32.cont [14/16] 0.0, 128
        %1033 = vxpose.xlu0.b32.cont [15/16] 0.0, 128
        %1034 = vxpose.xlu0.b32.end [16/16] 0.0, 128
        %v1035 = vpop.trf.xlu0
        %v1036 = vpop.trf.xlu0
        %v1037 = vpop.trf.xlu0
        %v1038 = vpop.trf.xlu0
        %v1039 = vpop.trf.xlu0
        %v1040 = vpop.trf.xlu0
        %v1041 = vpop.trf.xlu0
        %v1042 = vpop.trf.xlu0
        %v1043 = vpop.trf.xlu0
        %v1044 = vpop.trf.xlu0
        %v1045 = vpop.trf.xlu0
        %v1046 = vpop.trf.xlu0
        %v1047 = vpop.trf.xlu0
        %v1048 = vpop.trf.xlu0
        %v1049 = vpop.trf.xlu0
        %v1050 = vpop.trf.xlu0
        %v1052 = vsel %vm921, %v1035, 0
        %v1055 = vsel %vm921, %v1036, 0
        %v1058 = vsel %vm921, %v1037, 0
        %v1061 = vsel %vm921, %v1038, 0
        %1063 = vmatprep.subr.mxu0 0.0
        %1064 = vmatpush1.msra.mxu0 0.0
        %1065 = vmatprep.subr.mxu0 0.0
        %1066 = vmatpush1.msra.mxu0 0.0
        %1067 = vmatprep.subr.mxu0 0.0
        %1068 = vmatpush1.msra.mxu0 0.0
        %1069 = vmatprep.subr.mxu0 0.0
        %1070 = vmatpush1.msra.mxu0 0.0
        %1071 = vmatprep.subr.mxu0 0.0
        %1072 = vmatpush1.msra.mxu0 0.0
        %1073 = vmatprep.subr.mxu0 0.0
        %1074 = vmatpush1.msra.mxu0 0.0
        %1075 = vmatprep.subr.mxu0 0.0
        %1076 = vmatpush1.msra.mxu0 0.0
        %1077 = vmatprep.subr.mxu0 0.0
        %1078 = vmatpush1.msra.mxu0 0.0
        %1079 = vmatprep.subr.mxu0 0.0
        %1080 = vmatpush1.msra.mxu0 0.0
        %1081 = vmatprep.subr.mxu0 0.0
        %1082 = vmatpush1.msra.mxu0 0.0
        %1083 = vmatprep.subr.mxu0 0.0
        %1084 = vmatpush1.msra.mxu0 0.0
        %1085 = vmatprep.subr.mxu0 0.0
        %1086 = vmatpush1.msra.mxu0 0.0
        %1087 = vmatprep.subr.mxu0 0.0
        %1088 = vmatpush1.msra.mxu0 0.0
        %1089 = vmatprep.subr.mxu0 0.0
        %1090 = vmatpush1.msra.mxu0 0.0
        %1091 = vmatprep.subr.mxu0 0.0
        %1092 = vmatpush1.msra.mxu0 0.0
        %1093 = vmatprep.subr.mxu0 0.0
        %1094 = vmatpush1.msra.mxu0 %v866
        %1095 = vmatprep.subr.mxu0 0.0
        %1096 = vmatpush2.msra.mxu0 0.0
        %1097 = vmatprep.subr.mxu0 0.0
        %1098 = vmatpush2.msra.mxu0 0.0
        %1099 = vmatprep.subr.mxu0 0.0
        %1100 = vmatpush2.msra.mxu0 0.0
        %1101 = vmatprep.subr.mxu0 0.0
        %1102 = vmatpush2.msra.mxu0 0.0
        %1103 = vmatprep.subr.mxu0 0.0
        %1104 = vmatpush2.msra.mxu0 0.0
        %1105 = vmatprep.subr.mxu0 0.0
        %1106 = vmatpush2.msra.mxu0 0.0
        %1107 = vmatprep.subr.mxu0 0.0
        %1108 = vmatpush2.msra.mxu0 0.0
        %1109 = vmatprep.subr.mxu0 0.0
        %1110 = vmatpush2.msra.mxu0 0.0
        %1111 = vmatprep.subr.mxu0 0.0
        %1112 = vmatpush2.msra.mxu0 0.0
        %1113 = vmatprep.subr.mxu0 0.0
        %1114 = vmatpush2.msra.mxu0 0.0
        %1115 = vmatprep.subr.mxu0 0.0
        %1116 = vmatpush2.msra.mxu0 0.0
        %1117 = vmatprep.subr.mxu0 0.0
        %1118 = vmatpush2.msra.mxu0 0.0
        %1119 = vmatprep.subr.mxu0 0.0
        %1120 = vmatpush2.msra.mxu0 0.0
        %1121 = vmatprep.subr.mxu0 0.0
        %1122 = vmatpush2.msra.mxu0 0.0
        %1123 = vmatprep.subr.mxu0 0.0
        %1124 = vmatpush2.msra.mxu0 0.0
        %1125 = vmatprep.subr.mxu0 0.0
        %1126 = vmatpush2.msra.mxu0 0.0
        %1127 = vmatprep.mubr.f32.mxu0 0.0
        %1128 = vmatmul.mubr.f32.gmra.mxu0 %v1052
        %v1129 = vpop.f32.mrf.mxu0
        %v1130 = vadd.f32 0.0, %v1129
        %v1131 = vpop.f32.mrf.mxu0
        %1132 = vmatprep.mubr.f32.mxu0 0.0
        %1133 = vmatmul.mubr.f32.gmra.mxu0 %v1055
        %v1134 = vpop.f32.mrf.mxu0
        %v1135 = vadd.f32 0.0, %v1134
        %v1136 = vpop.f32.mrf.mxu0
        %1137 = vmatprep.mubr.f32.mxu0 0.0
        %1138 = vmatmul.mubr.f32.gmra.mxu0 %v1058
        %v1139 = vpop.f32.mrf.mxu0
        %v1140 = vadd.f32 0.0, %v1139
        %v1141 = vpop.f32.mrf.mxu0
        %1142 = vmatprep.mubr.f32.mxu0 0.0
        %1143 = vmatmul.mubr.f32.gmra.mxu0 %v1061
        %v1144 = vpop.f32.mrf.mxu0
        %v1145 = vadd.f32 0.0, %v1144
        %v1146 = vpop.f32.mrf.mxu0
        %1147 = vdwg.mxu0
        %v1148 = vsel %vm599, %v887, 0.0
        %v1149 = vrot.slane %v1148, 4
        %v1150 = vadd.f32 %v1148, %v1149
        %v1151 = vrot.slane %v1150, 2
        %v1152 = vadd.f32 %v1150, %v1151
        %v1153 = vrot.slane %v1152, 1
        %v1154 = vadd.f32 %v1152, %v1153
        %v1155 = vsel %vm599, %v888, 0.0
        %v1156 = vrot.slane %v1155, 4
        %v1157 = vadd.f32 %v1155, %v1156
        %v1158 = vrot.slane %v1157, 2
        %v1159 = vadd.f32 %v1157, %v1158
        %v1160 = vrot.slane %v1159, 1
        %v1161 = vadd.f32 %v1159, %v1160
        %v1162 = vld [vmem:[#allocation14] sm:$0xff]
        %v1163 = vld [vmem:[#allocation14 + $0x8] sm:$0xff]
        %v1164 = vld [vmem:[#allocation14 + $0x10] sm:$0xff]
        %v1165 = vld [vmem:[#allocation14 + $0x18] sm:$0xff]
        %v1166 = vmul.f32 %v1001, %v1162
        %v1167 = vmul.f32 %v1006, %v1163
        %v1168 = vmul.f32 %v1011, %v1164
        %v1169 = vmul.f32 %v1016, %v1165
        %v1170 = vmul.f32 %v1130, %v1162
        %v1171 = vmul.f32 %v1135, %v1163
        %v1172 = vmul.f32 %v1140, %v1164
        %v1173 = vmul.f32 %v1145, %v1165
        %1175 = vbcast.lane.b32.xlu0 %v1154, 256
        %v1176 = vpop.permute.xlu0 %1175
        %s1178 = sor.u32 256, 8
        %1179 = vbcast.lane.b32.xlu0 %v1154, %s1178
        %v1180 = vpop.permute.xlu0 %1179
        %s1182 = sor.u32 256, 16
        %1183 = vbcast.lane.b32.xlu0 %v1154, %s1182
        %v1184 = vpop.permute.xlu0 %1183
        %s1186 = sor.u32 256, 24
        %1187 = vbcast.lane.b32.xlu0 %v1154, %s1186
        %v1188 = vpop.permute.xlu0 %1187
        %1190 = vbcast.lane.b32.xlu0 %v1161, 256
        %v1191 = vpop.permute.xlu0 %1190
        %s1193 = sor.u32 256, 8
        %1194 = vbcast.lane.b32.xlu0 %v1161, %s1193
        %v1195 = vpop.permute.xlu0 %1194
        %s1197 = sor.u32 256, 16
        %1198 = vbcast.lane.b32.xlu0 %v1161, %s1197
        %v1199 = vpop.permute.xlu0 %1198
        %s1201 = sor.u32 256, 24
        %1202 = vbcast.lane.b32.xlu0 %v1161, %s1201
        %v1203 = vpop.permute.xlu0 %1202
        %v1204 = vmul.f32 %v1176, %v1162
        %v1205 = vmul.f32 %v1180, %v1163
        %v1206 = vmul.f32 %v1184, %v1164
        %v1207 = vmul.f32 %v1188, %v1165
        %v1208 = vmul.f32 %v1191, %v1162
        %v1209 = vmul.f32 %v1195, %v1163
        %v1210 = vmul.f32 %v1199, %v1164
        %v1211 = vmul.f32 %v1203, %v1165
        %1220 = vrot.lane.b32.xlu0 %v1204, 32
        %v1221 = vpop.permute.xlu0 %1220
        %1222 = vrot.lane.b32.xlu0 %v1205, 32
        %v1223 = vpop.permute.xlu0 %1222
        %1224 = vrot.lane.b32.xlu0 %v1206, 32
        %v1225 = vpop.permute.xlu0 %1224
        %1226 = vrot.lane.b32.xlu0 %v1207, 32
        %v1227 = vpop.permute.xlu0 %1226
        %1228 = vrot.lane.b32.xlu0 %v1208, 32
        %v1229 = vpop.permute.xlu0 %1228
        %1230 = vrot.lane.b32.xlu0 %v1209, 32
        %v1231 = vpop.permute.xlu0 %1230
        %1232 = vrot.lane.b32.xlu0 %v1210, 32
        %v1233 = vpop.permute.xlu0 %1232
        %1234 = vrot.lane.b32.xlu0 %v1211, 32
        %v1235 = vpop.permute.xlu0 %1234
        %v1244 = vsel %vm599, %v1166, %v1221
        %v1245 = vsel %vm599, %v1167, %v1223
        %v1246 = vsel %vm599, %v1168, %v1225
        %v1247 = vsel %vm599, %v1169, %v1227
        %v1248 = vsel %vm599, %v1170, %v1229
        %v1249 = vsel %vm599, %v1171, %v1231
        %v1250 = vsel %vm599, %v1172, %v1233
        %v1251 = vsel %vm599, %v1173, %v1235
        %v1253 = vsel %vm599, %v877, 0
        %1255 = vmatprep.subr.mxu0 0.0
        %1256 = vmatpush1.msra.mxu0 0.0
        %1257 = vmatprep.subr.mxu0 0.0
        %1258 = vmatpush1.msra.mxu0 0.0
        %1259 = vmatprep.subr.mxu0 0.0
        %1260 = vmatpush1.msra.mxu0 0.0
        %1261 = vmatprep.subr.mxu0 0.0
        %1262 = vmatpush1.msra.mxu0 0.0
        %1263 = vmatprep.subr.mxu0 0.0
        %1264 = vmatpush1.msra.mxu0 0.0
        %1265 = vmatprep.subr.mxu0 0.0
        %1266 = vmatpush1.msra.mxu0 0.0
        %1267 = vmatprep.subr.mxu0 0.0
        %1268 = vmatpush1.msra.mxu0 0.0
        %1269 = vmatprep.subr.mxu0 0.0
        %1270 = vmatpush1.msra.mxu0 0.0
        %1271 = vmatprep.subr.mxu0 0.0
        %1272 = vmatpush1.msra.mxu0 0.0
        %1273 = vmatprep.subr.mxu0 0.0
        %1274 = vmatpush1.msra.mxu0 0.0
        %1275 = vmatprep.subr.mxu0 0.0
        %1276 = vmatpush1.msra.mxu0 0.0
        %1277 = vmatprep.subr.mxu0 0.0
        %1278 = vmatpush1.msra.mxu0 0.0
        %1279 = vmatprep.subr.mxu0 0.0
        %1280 = vmatpush1.msra.mxu0 %v1247
        %1281 = vmatprep.subr.mxu0 0.0
        %1282 = vmatpush1.msra.mxu0 %v1246
        %1283 = vmatprep.subr.mxu0 0.0
        %1284 = vmatpush1.msra.mxu0 %v1245
        %1285 = vmatprep.subr.mxu0 0.0
        %1286 = vmatpush1.msra.mxu0 %v1244
        %1287 = vmatprep.subr.mxu0 0.0
        %1288 = vmatpush2.msra.mxu0 0.0
        %1289 = vmatprep.subr.mxu0 0.0
        %1290 = vmatpush2.msra.mxu0 0.0
        %1291 = vmatprep.subr.mxu0 0.0
        %1292 = vmatpush2.msra.mxu0 0.0
        %1293 = vmatprep.subr.mxu0 0.0
        %1294 = vmatpush2.msra.mxu0 0.0
        %1295 = vmatprep.subr.mxu0 0.0
        %1296 = vmatpush2.msra.mxu0 0.0
        %1297 = vmatprep.subr.mxu0 0.0
        %1298 = vmatpush2.msra.mxu0 0.0
        %1299 = vmatprep.subr.mxu0 0.0
        %1300 = vmatpush2.msra.mxu0 0.0
        %1301 = vmatprep.subr.mxu0 0.0
        %1302 = vmatpush2.msra.mxu0 0.0
        %1303 = vmatprep.subr.mxu0 0.0
        %1304 = vmatpush2.msra.mxu0 0.0
        %1305 = vmatprep.subr.mxu0 0.0
        %1306 = vmatpush2.msra.mxu0 0.0
        %1307 = vmatprep.subr.mxu0 0.0
        %1308 = vmatpush2.msra.mxu0 0.0
        %1309 = vmatprep.subr.mxu0 0.0
        %1310 = vmatpush2.msra.mxu0 0.0
        %1311 = vmatprep.subr.mxu0 0.0
        %1312 = vmatpush2.msra.mxu0 0.0
        %1313 = vmatprep.subr.mxu0 0.0
        %1314 = vmatpush2.msra.mxu0 0.0
        %1315 = vmatprep.subr.mxu0 0.0
        %1316 = vmatpush2.msra.mxu0 0.0
        %1317 = vmatprep.subr.mxu0 0.0
        %1318 = vmatpush2.msra.mxu0 0.0
        %1319 = vmatprep.mubr.f32.mxu0 0.0
        %1320 = vmatmul.mubr.f32.gmra.mxu0 %v1253
        %v1321 = vpop.f32.mrf.mxu0
        %v1322 = vadd.f32 0.0, %v1321
        %v1323 = vpop.f32.mrf.mxu0
        %1324 = vdwg.mxu0
        %v1326 = vsel %vm599, %v878, 0
        %1328 = vmatprep.subr.mxu0 0.0
        %1329 = vmatpush1.msra.mxu0 0.0
        %1330 = vmatprep.subr.mxu0 0.0
        %1331 = vmatpush1.msra.mxu0 0.0
        %1332 = vmatprep.subr.mxu0 0.0
        %1333 = vmatpush1.msra.mxu0 0.0
        %1334 = vmatprep.subr.mxu0 0.0
        %1335 = vmatpush1.msra.mxu0 0.0
        %1336 = vmatprep.subr.mxu0 0.0
        %1337 = vmatpush1.msra.mxu0 0.0
        %1338 = vmatprep.subr.mxu0 0.0
        %1339 = vmatpush1.msra.mxu0 0.0
        %1340 = vmatprep.subr.mxu0 0.0
        %1341 = vmatpush1.msra.mxu0 0.0
        %1342 = vmatprep.subr.mxu0 0.0
        %1343 = vmatpush1.msra.mxu0 0.0
        %1344 = vmatprep.subr.mxu0 0.0
        %1345 = vmatpush1.msra.mxu0 0.0
        %1346 = vmatprep.subr.mxu0 0.0
        %1347 = vmatpush1.msra.mxu0 0.0
        %1348 = vmatprep.subr.mxu0 0.0
        %1349 = vmatpush1.msra.mxu0 0.0
        %1350 = vmatprep.subr.mxu0 0.0
        %1351 = vmatpush1.msra.mxu0 0.0
        %1352 = vmatprep.subr.mxu0 0.0
        %1353 = vmatpush1.msra.mxu0 %v1251
        %1354 = vmatprep.subr.mxu0 0.0
        %1355 = vmatpush1.msra.mxu0 %v1250
        %1356 = vmatprep.subr.mxu0 0.0
        %1357 = vmatpush1.msra.mxu0 %v1249
        %1358 = vmatprep.subr.mxu0 0.0
        %1359 = vmatpush1.msra.mxu0 %v1248
        %1360 = vmatprep.subr.mxu0 0.0
        %1361 = vmatpush2.msra.mxu0 0.0
        %1362 = vmatprep.subr.mxu0 0.0
        %1363 = vmatpush2.msra.mxu0 0.0
        %1364 = vmatprep.subr.mxu0 0.0
        %1365 = vmatpush2.msra.mxu0 0.0
        %1366 = vmatprep.subr.mxu0 0.0
        %1367 = vmatpush2.msra.mxu0 0.0
        %1368 = vmatprep.subr.mxu0 0.0
        %1369 = vmatpush2.msra.mxu0 0.0
        %1370 = vmatprep.subr.mxu0 0.0
        %1371 = vmatpush2.msra.mxu0 0.0
        %1372 = vmatprep.subr.mxu0 0.0
        %1373 = vmatpush2.msra.mxu0 0.0
        %1374 = vmatprep.subr.mxu0 0.0
        %1375 = vmatpush2.msra.mxu0 0.0
        %1376 = vmatprep.subr.mxu0 0.0
        %1377 = vmatpush2.msra.mxu0 0.0
        %1378 = vmatprep.subr.mxu0 0.0
        %1379 = vmatpush2.msra.mxu0 0.0
        %1380 = vmatprep.subr.mxu0 0.0
        %1381 = vmatpush2.msra.mxu0 0.0
        %1382 = vmatprep.subr.mxu0 0.0
        %1383 = vmatpush2.msra.mxu0 0.0
        %1384 = vmatprep.subr.mxu0 0.0
        %1385 = vmatpush2.msra.mxu0 0.0
        %1386 = vmatprep.subr.mxu0 0.0
        %1387 = vmatpush2.msra.mxu0 0.0
        %1388 = vmatprep.subr.mxu0 0.0
        %1389 = vmatpush2.msra.mxu0 0.0
        %1390 = vmatprep.subr.mxu0 0.0
        %1391 = vmatpush2.msra.mxu0 0.0
        %1392 = vmatprep.mubr.f32.mxu0 0.0
        %1393 = vmatmul.mubr.f32.gmra.mxu0 %v1326
        %v1394 = vpop.f32.mrf.mxu0
        %v1395 = vadd.f32 0.0, %v1394
        %v1396 = vpop.f32.mrf.mxu0
        %1397 = vdwg.mxu0
        %v1398 = vadd.f32 %v1322, 1e-10
        %v1399 = vadd.f32 %v1395, 1e-10
        %v1400 = vrcp.pop %v1398
        %v1401 = vrcp.pop %v1399
        %1404 = vrot.lane.b32.xlu0 %v1400, 96
        %v1405 = vpop.permute.xlu0 %1404
        %1406 = vrot.lane.b32.xlu0 %v1401, 96
        %v1407 = vpop.permute.xlu0 %1406
        %v1410 = vmul.f32 %v1322, %v1405
        %v1411 = vmul.f32 %v1395, %v1407
        %v1412 = vld [vmem:[#allocation13] sm:$0xff]
        %v1413 = vld [vmem:[#allocation13 + $0x8] sm:$0xff]
        %v1414 = vld [vmem:[#allocation13 + $0x10] sm:$0xff]
        %v1415 = vld [vmem:[#allocation13 + $0x18] sm:$0xff]
        %v1416 = vld [vmem:[%s10] sm:$0x1]
        %v1418 = vlaneseq
        %v1419 = vshrl.u32 %v1418, 7
        %v1420 = vsub.s32 0, %v1419
        %v1421 = vrot.slane %v1416, %v1420
        %v1424 = vsel %vm599, %v1410, 0
        %v1427 = vsel %vm599, %v1411, 0
        %1429 = vmatprep.subr.mxu0 0.0
        %1430 = vmatpush1.msra.mxu0 0.0
        %1431 = vmatprep.subr.mxu0 0.0
        %1432 = vmatpush1.msra.mxu0 0.0
        %1433 = vmatprep.subr.mxu0 0.0
        %1434 = vmatpush1.msra.mxu0 0.0
        %1435 = vmatprep.subr.mxu0 0.0
        %1436 = vmatpush1.msra.mxu0 0.0
        %1437 = vmatprep.subr.mxu0 0.0
        %1438 = vmatpush1.msra.mxu0 0.0
        %1439 = vmatprep.subr.mxu0 0.0
        %1440 = vmatpush1.msra.mxu0 0.0
        %1441 = vmatprep.subr.mxu0 0.0
        %1442 = vmatpush1.msra.mxu0 0.0
        %1443 = vmatprep.subr.mxu0 0.0
        %1444 = vmatpush1.msra.mxu0 0.0
        %1445 = vmatprep.subr.mxu0 0.0
        %1446 = vmatpush1.msra.mxu0 0.0
        %1447 = vmatprep.subr.mxu0 0.0
        %1448 = vmatpush1.msra.mxu0 0.0
        %1449 = vmatprep.subr.mxu0 0.0
        %1450 = vmatpush1.msra.mxu0 0.0
        %1451 = vmatprep.subr.mxu0 0.0
        %1452 = vmatpush1.msra.mxu0 0.0
        %1453 = vmatprep.subr.mxu0 0.0
        %1454 = vmatpush1.msra.mxu0 %v1415
        %1455 = vmatprep.subr.mxu0 0.0
        %1456 = vmatpush1.msra.mxu0 %v1414
        %1457 = vmatprep.subr.mxu0 0.0
        %1458 = vmatpush1.msra.mxu0 %v1413
        %1459 = vmatprep.subr.mxu0 0.0
        %1460 = vmatpush1.msra.mxu0 %v1412
        %1461 = vmatprep.subr.mxu0 0.0
        %1462 = vmatpush2.msra.mxu0 0.0
        %1463 = vmatprep.subr.mxu0 0.0
        %1464 = vmatpush2.msra.mxu0 0.0
        %1465 = vmatprep.subr.mxu0 0.0
        %1466 = vmatpush2.msra.mxu0 0.0
        %1467 = vmatprep.subr.mxu0 0.0
        %1468 = vmatpush2.msra.mxu0 0.0
        %1469 = vmatprep.subr.mxu0 0.0
        %1470 = vmatpush2.msra.mxu0 0.0
        %1471 = vmatprep.subr.mxu0 0.0
        %1472 = vmatpush2.msra.mxu0 0.0
        %1473 = vmatprep.subr.mxu0 0.0
        %1474 = vmatpush2.msra.mxu0 0.0
        %1475 = vmatprep.subr.mxu0 0.0
        %1476 = vmatpush2.msra.mxu0 0.0
        %1477 = vmatprep.subr.mxu0 0.0
        %1478 = vmatpush2.msra.mxu0 0.0
        %1479 = vmatprep.subr.mxu0 0.0
        %1480 = vmatpush2.msra.mxu0 0.0
        %1481 = vmatprep.subr.mxu0 0.0
        %1482 = vmatpush2.msra.mxu0 0.0
        %1483 = vmatprep.subr.mxu0 0.0
        %1484 = vmatpush2.msra.mxu0 0.0
        %1485 = vmatprep.subr.mxu0 0.0
        %1486 = vmatpush2.msra.mxu0 0.0
        %1487 = vmatprep.subr.mxu0 0.0
        %1488 = vmatpush2.msra.mxu0 0.0
        %1489 = vmatprep.subr.mxu0 0.0
        %1490 = vmatpush2.msra.mxu0 0.0
        %1491 = vmatprep.subr.mxu0 0.0
        %1492 = vmatpush2.msra.mxu0 0.0
        %1493 = vmatprep.mubr.f32.mxu0 0.0
        %1494 = vmatmul.mubr.f32.gmra.mxu0 %v1424
        %v1495 = vpop.f32.mrf.mxu0
        %v1496 = vadd.f32 %v1421, %v1495
        %v1497 = vpop.f32.mrf.mxu0
        %1498 = vmatprep.mubr.f32.mxu0 0.0
        %1499 = vmatmul.mubr.f32.gmra.mxu0 %v1427
        %v1500 = vpop.f32.mrf.mxu0
        %v1501 = vadd.f32 %v1421, %v1500
        %v1502 = vpop.f32.mrf.mxu0
        %1503 = vdwg.mxu0
        %1504 = vst.msk [vmem:[%s581] sm:$0xff] %vm599, %v1496
        %1505 = vst.msk [vmem:[%s581 + $0x8] sm:$0xff] %vm599, %v1501
        %s1506 = sand.u32 %s310, 1
        %s1507 = scalar_lea.sflag [#allocation4], %s1506
        %s1508 = sand.u32 %s310, 1
        %s1509 = smul.addr %s1508, 16
        %s1510 = scalar_lea.vmem [#allocation16], %s1509
        // Predicated region
        $region101: #{tpu_custom_call.1} parent=67 // pred_check
          %p1511 = pneg %p320
        $region102: #{tpu_custom_call.1} parent=67 // pred_check_branch
          %1513 = sbr.rel (%p1511) target = $region104
        $region103: #{tpu_custom_call.1} parent=67 // pred_region
          %s1514 = smul.u32 2, %s35
          %s1516 = ssub.s32 256, 256
          %1517 = vsyncadd %s1507, %s1516
          %s1518 = smul.addr %s1514, 128
          %s1519 = scalar_lea.hbm %s12, %s1518
          %s1520 = sshll.u32 %s1510, 4
          %s1521 = int_to_ptr.vmem [resolvable:$true] %s1520
          %1526 = dma.vmem_to_hbm [thread:$0]  %s1521, 256, %s1519, %s1507, 128, 128, 8
        $region104: #{tpu_custom_call.1} parent=67 // pred_fallthru
          _
      $region68: #{tpu_custom_call.1} parent=5 // pred_fallthru
        _
      %p1527 = scmp.le.s32.totalorder 2, %s30
      // Predicated region
      $region105: #{tpu_custom_call.1} parent=5 // pred_check
        %p1528 = pneg %p1527
      $region106: #{tpu_custom_call.1} parent=5 // pred_check_branch
        %1530 = sbr.rel (%p1528) target = $region108
      $region107: #{tpu_custom_call.1} parent=5 // pred_region
        %s1531 = ssub.s32 %s30, 2
        // Predicated region
        $region109: #{tpu_custom_call.1} parent=107 // pred_check
          %p1532 = pneg %p326
        $region110: #{tpu_custom_call.1} parent=107 // pred_check_branch
          %1534 = sbr.rel (%p1532) target = $region112
        $region111: #{tpu_custom_call.1} parent=107 // pred_region
          %s1535 = sand.u32 %s311, 1
          %s1536 = scalar_lea.sflag [#allocation4], %s1535
          %s1537 = sand.u32 %s311, 1
          %s1538 = smul.addr %s1537, 16
          %s1539 = scalar_lea.vmem [#allocation16], %s1538
          %1540 = dma.done %s1536, 256
        $region112: #{tpu_custom_call.1} parent=107 // pred_fallthru
          _
      $region108: #{tpu_custom_call.1} parent=5 // pred_fallthru
        _
    $region6: #{tpu_custom_call.1} parent=1 // loop_footer
      %s34 = sadd.s32 1, %s30
    $region7: #{tpu_custom_call.1} parent=1 // loop_footer_branch
      %29 = sbr.rel target = $region3
    $region8: #{tpu_custom_call.1} parent=1 // loop_exit
      _
    %1541 = vsyncpa [#allocation3], 1
    %s1542 = scalar_lea.sflag [#allocation3], 1
    %1543 = vsyncpa %s1542, 1
    %1544 = vsyncpa [#allocation6], 1
    %s1545 = scalar_lea.sflag [#allocation6], 1
    %1546 = vsyncpa %s1545, 1
    %1547 = vsyncpa [#allocation9], 1
    %1548 = vsyncpa [#allocation12], 1
    %1549 = vsyncpa [#allocation15], 1
    %1550 = vsyncpa [#allocation4], 1
    %s1551 = scalar_lea.sflag [#allocation4], 1
    %1552 = vsyncpa %s1551, 1

// kernel: tpu_custom_call.1
$region0: #{tpu_custom_call.1}
  #allocation0 [shape = 'u32[]', space=smem, size = 0x4, offset = 0x4, fixed_abs, tag = 'smem constant byte address 0x4 - core index']
  #allocation1 [shape = 'u32[144,128]{1,0:T(1,128)}', space=vmem, size = 0x12000, scoped, tag = 'internal scratch']
  %s0 = inlined_call_operand.hbm [shape: f32[32,32], index: 0, kind: input, shape index: {}]
  %s1 = inlined_call_operand.hbm [shape: f32[32,32], index: 1, kind: input, shape index: {}]
  %s2 = inlined_call_operand.hbm [shape: f32[32,32], index: 2, kind: input, shape index: {}]
  %s3 = inlined_call_operand.hbm [shape: f32[32,32], index: 3, kind: input, shape index: {}]
  %s4 = inlined_call_operand.vmem [shape: f32[1,32], index: 4, kind: input, shape index: {}]
  %s5 = inlined_call_operand.hbm [shape: f32[32,32], index: 5, kind: input, shape index: {}]
  %s6 = inlined_call_operand.vmem [shape: f32[1,32], index: 6, kind: input, shape index: {}]
  %s7 = inlined_call_operand.hbm [shape: f32[32,32], index: 7, kind: input, shape index: {}]
  %s8 = inlined_call_operand.vmem [shape: f32[1,32], index: 8, kind: input, shape index: {}]
  %s9 = inlined_call_operand.hbm [shape: f32[32,32], index: 9, kind: input, shape index: {}]
  %s10 = inlined_call_operand.vmem [shape: f32[1,32], index: 10, kind: input, shape index: {}]
  %s11 = inlined_call_operand.hbm [shape: f32[32,32], index: 11, kind: input, shape index: {}]
  %s12 = inlined_call_operand.hbm [shape: f32[32,32], index: 12, kind: output, shape index: {}]
  %s13 = sld [smem:[#allocation0]]
  $region113: #{tpu_custom_call.1} parent=0
    _
  %s15 = ssub.s32 1, %s13
  %s16 = scalar_select 0, %s15, %s13
  $region1: #{tpu_custom_call.1} parent=0
    #allocation2 [shape = 'u8[16384]{0}', space=vmem, size = 0x4000, scoped, tag = 'input window, operand 0']
    #allocation3 [shape = 's32[2]{0}', space=sflag, size = 0x8, scoped, tag = 'scoped memory for tpu_custom_call.1']
    #allocation4 [shape = 's32[2]{0}', space=sflag, size = 0x8, scoped, tag = 'scoped memory for tpu_custom_call.1']
    #allocation5 [shape = 'u8[16384]{0}', space=vmem, size = 0x4000, scoped, tag = 'input window, operand 1']
    #allocation6 [shape = 's32[2]{0}', space=sflag, size = 0x8, scoped, tag = 'scoped memory for tpu_custom_call.1']
    #allocation7 [shape = 'u8[16384]{0}', space=vmem, size = 0x4000, scoped, tag = 'input window, operand 2']
    #allocation8 [shape = 'u8[16384]{0}', space=vmem, size = 0x4000, scoped, tag = 'input window, operand 3, single buffered']
    #allocation9 [shape = 's32[1]{0}', space=sflag, size = 0x4, scoped, tag = 'scoped memory for tpu_custom_call.1']
    #allocation10 [shape = 'u8[16384]{0}', space=vmem, size = 0x4000, scoped, tag = 'input window, operand 5, single buffered']
    #allocation11 [shape = 'u8[16384]{0}', space=vmem, size = 0x4000, scoped, tag = 'input window, operand 7, single buffered']
    #allocation12 [shape = 's32[1]{0}', space=sflag, size = 0x4, scoped, tag = 'scoped memory for tpu_custom_call.1']
    #allocation13 [shape = 'u8[16384]{0}', space=vmem, size = 0x4000, scoped, tag = 'input window, operand 9, single buffered']
    #allocation14 [shape = 'u8[16384]{0}', space=vmem, size = 0x4000, scoped, tag = 'input window, operand 11, single buffered']
    #allocation15 [shape = 's32[1]{0}', space=sflag, size = 0x4, scoped, tag = 'scoped memory for tpu_custom_call.1']
    #allocation16 [shape = 'u8[16384]{0}', space=vmem, size = 0x4000, scoped, tag = 'output window, operand 0']
    %17 = vsyncpa [#allocation3], 0
    %s18 = scalar_lea.sflag [#allocation3], 1
    %19 = vsyncpa %s18, 0
    %20 = vsyncpa [#allocation6], 0
    %s21 = scalar_lea.sflag [#allocation6], 1
    %22 = vsyncpa %s21, 0
    %23 = vsyncpa [#allocation9], 0
    %24 = vsyncpa [#allocation12], 0
    %25 = vsyncpa [#allocation15], 0
    %26 = vsyncpa [#allocation4], 0
    %s27 = scalar_lea.sflag [#allocation4], 1
    %28 = vsyncpa %s27, 0
    loop: start=0, step=1, limit=4
    $region2: #{tpu_custom_call.1} parent=1 // loop_pre_header
      _
    $region3: #{tpu_custom_call.1} parent=1 // loop_header
      %s30 = sphi 0, %s34
      %p31 = scmp.ge.s32.totalorder %s30, 4
      %s40 = sphi 0, %s42
      %s43 = sphi 0, %s40
      %s44 = sphi 0, %s43
      %s60 = sphi 0, %s44
      %s66 = sphi 0, %s68
      %s69 = sphi 0, %s66
      %s70 = sphi 0, %s69
      %s86 = sphi 0, %s70
      %s92 = sphi 0, %s94
      %s95 = sphi 0, %s92
      %s96 = sphi 0, %s95
      %s112 = sphi 0, %s96
      %s116 = sphi 0, %s116
      %s118 = sphi 0, %s116
      %s119 = sphi 0, %s118
      %s133 = sphi 0, %s119
      %s137 = sphi 0, %s137
      %s139 = sphi 0, %s137
      %s140 = sphi 0, %s139
      %s154 = sphi 0, %s140
      %s158 = sphi 0, %s158
      %s160 = sphi 0, %s158
      %s161 = sphi 0, %s160
      %s175 = sphi 0, %s161
      %s179 = sphi 0, %s179
      %s181 = sphi 0, %s179
      %s182 = sphi 0, %s181
      %s196 = sphi 0, %s182
      %s200 = sphi 0, %s200
      %s202 = sphi 0, %s200
      %s203 = sphi 0, %s202
      %s217 = sphi 0, %s203
      %s221 = sphi 0, %s221
      %s223 = sphi 0, %s221
      %s224 = sphi 0, %s223
      %s238 = sphi 0, %s224
      %s242 = sphi 0, %s242
      %s244 = sphi 0, %s242
      %s245 = sphi 0, %s244
      %s259 = sphi 0, %s245
      %s263 = sphi 0, %s263
      %s265 = sphi 0, %s263
      %s266 = sphi 0, %s265
      %s280 = sphi 0, %s266
      %s284 = sphi 0, %s284
      %s286 = sphi 0, %s284
      %s287 = sphi 0, %s286
      %s301 = sphi 0, %s287
      %s307 = sphi 0, %s309
      %s310 = sphi 0, %s307
      %s311 = sphi 0, %s310
      %s327 = sphi 0, %s311
    $region4: #{tpu_custom_call.1} parent=1 // loop_header_branch
      %33 = sbr.rel (%p31) target = $region8
    $region5: #{tpu_custom_call.1} parent=1 // loop_body
      %s35 = ssub.s32 %s30, 1
      %s36 = ssub.s32 %s30, 2
      %s37 = sadd.s32 %s30, 1
      %s38 = ssub.s32 %s30, %s37
      %p39 = scmp.eq.s32.totalorder %s38, 0
      %s41 = sadd.s32 %s40, 1
      %s42 = scalar_select %p39, %s40, %s41
      %p45 = pneg %p39
      %p46 = scmp.eq.s32.totalorder %s30, 1
      %p47 = por %p45, %p46
      %p48 = scmp.ne.s32.totalorder %s40, %s43
      %p49 = scmp.eq.s32.totalorder %s30, 0
      %p50 = por %p48, %p49
      %p51 = scmp.ne.s32.totalorder %s40, %s43
      %p52 = scmp.eq.s32.totalorder %s35, 1
      %p53 = por %p51, %p52
      %p54 = scmp.ne.s32.totalorder %s43, %s44
      %p55 = scmp.eq.s32.totalorder %s35, 0
      %p56 = por %p54, %p55
      %p57 = scmp.ne.s32.totalorder %s43, %s44
      %p58 = scmp.eq.s32.totalorder %s36, 1
      %p59 = por %p57, %p58
      %p61 = scmp.ne.s32.totalorder %s44, %s60
      %p62 = scmp.eq.s32.totalorder %s36, 0
      %p63 = por %p61, %p62
      %s64 = ssub.s32 %s30, %s37
      %p65 = scmp.eq.s32.totalorder %s64, 0
      %s67 = sadd.s32 %s66, 1
      %s68 = scalar_select %p65, %s66, %s67
      %p71 = pneg %p65
      %p72 = scmp.eq.s32.totalorder %s30, 1
      %p73 = por %p71, %p72
      %p74 = scmp.ne.s32.totalorder %s66, %s69
      %p75 = scmp.eq.s32.totalorder %s30, 0
      %p76 = por %p74, %p75
      %p77 = scmp.ne.s32.totalorder %s66, %s69
      %p78 = scmp.eq.s32.totalorder %s35, 1
      %p79 = por %p77, %p78
      %p80 = scmp.ne.s32.totalorder %s69, %s70
      %p81 = scmp.eq.s32.totalorder %s35, 0
      %p82 = por %p80, %p81
      %p83 = scmp.ne.s32.totalorder %s69, %s70
      %p84 = scmp.eq.s32.totalorder %s36, 1
      %p85 = por %p83, %p84
      %p87 = scmp.ne.s32.totalorder %s70, %s86
      %p88 = scmp.eq.s32.totalorder %s36, 0
      %p89 = por %p87, %p88
      %s90 = ssub.s32 %s30, %s37
      %p91 = scmp.eq.s32.totalorder %s90, 0
      %s93 = sadd.s32 %s92, 1
      %s94 = scalar_select %p91, %s92, %s93
      %p97 = pneg %p91
      %p98 = scmp.eq.s32.totalorder %s30, 1
      %p99 = por %p97, %p98
      %p100 = scmp.ne.s32.totalorder %s92, %s95
      %p101 = scmp.eq.s32.totalorder %s30, 0
      %p102 = por %p100, %p101
      %p103 = scmp.ne.s32.totalorder %s92, %s95
      %p104 = scmp.eq.s32.totalorder %s35, 1
      %p105 = por %p103, %p104
      %p106 = scmp.ne.s32.totalorder %s95, %s96
      %p107 = scmp.eq.s32.totalorder %s35, 0
      %p108 = por %p106, %p107
      %p109 = scmp.ne.s32.totalorder %s95, %s96
      %p110 = scmp.eq.s32.totalorder %s36, 1
      %p111 = por %p109, %p110
      %p113 = scmp.ne.s32.totalorder %s96, %s112
      %p114 = scmp.eq.s32.totalorder %s36, 0
      %p115 = por %p113, %p114
      %s117 = sadd.s32 %s116, 1
      %p120 = scmp.eq.s32.totalorder %s30, 1
      %p121 = scmp.ne.s32.totalorder %s116, %s118
      %p122 = scmp.eq.s32.totalorder %s30, 0
      %p123 = por %p121, %p122
      %p124 = scmp.ne.s32.totalorder %s116, %s118
      %p125 = scmp.eq.s32.totalorder %s35, 1
      %p126 = por %p124, %p125
      %p127 = scmp.ne.s32.totalorder %s118, %s119
      %p128 = scmp.eq.s32.totalorder %s35, 0
      %p129 = por %p127, %p128
      %p130 = scmp.ne.s32.totalorder %s118, %s119
      %p131 = scmp.eq.s32.totalorder %s36, 1
      %p132 = por %p130, %p131
      %p134 = scmp.ne.s32.totalorder %s119, %s133
      %p135 = scmp.eq.s32.totalorder %s36, 0
      %p136 = por %p134, %p135
      %s138 = sadd.s32 %s137, 1
      %p141 = scmp.eq.s32.totalorder %s30, 1
      %p142 = scmp.ne.s32.totalorder %s137, %s139
      %p143 = scmp.eq.s32.totalorder %s30, 0
      %p144 = por %p142, %p143
      %p145 = scmp.ne.s32.totalorder %s137, %s139
      %p146 = scmp.eq.s32.totalorder %s35, 1
      %p147 = por %p145, %p146
      %p148 = scmp.ne.s32.totalorder %s139, %s140
      %p149 = scmp.eq.s32.totalorder %s35, 0
      %p150 = por %p148, %p149
      %p151 = scmp.ne.s32.totalorder %s139, %s140
      %p152 = scmp.eq.s32.totalorder %s36, 1
      %p153 = por %p151, %p152
      %p155 = scmp.ne.s32.totalorder %s140, %s154
      %p156 = scmp.eq.s32.totalorder %s36, 0
      %p157 = por %p155, %p156
      %s159 = sadd.s32 %s158, 1
      %p162 = scmp.eq.s32.totalorder %s30, 1
      %p163 = scmp.ne.s32.totalorder %s158, %s160
      %p164 = scmp.eq.s32.totalorder %s30, 0
      %p165 = por %p163, %p164
      %p166 = scmp.ne.s32.totalorder %s158, %s160
      %p167 = scmp.eq.s32.totalorder %s35, 1
      %p168 = por %p166, %p167
      %p169 = scmp.ne.s32.totalorder %s160, %s161
      %p170 = scmp.eq.s32.totalorder %s35, 0
      %p171 = por %p169, %p170
      %p172 = scmp.ne.s32.totalorder %s160, %s161
      %p173 = scmp.eq.s32.totalorder %s36, 1
      %p174 = por %p172, %p173
      %p176 = scmp.ne.s32.totalorder %s161, %s175
      %p177 = scmp.eq.s32.totalorder %s36, 0
      %p178 = por %p176, %p177
      %s180 = sadd.s32 %s179, 1
      %p183 = scmp.eq.s32.totalorder %s30, 1
      %p184 = scmp.ne.s32.totalorder %s179, %s181
      %p185 = scmp.eq.s32.totalorder %s30, 0
      %p186 = por %p184, %p185
      %p187 = scmp.ne.s32.totalorder %s179, %s181
      %p188 = scmp.eq.s32.totalorder %s35, 1
      %p189 = por %p187, %p188
      %p190 = scmp.ne.s32.totalorder %s181, %s182
      %p191 = scmp.eq.s32.totalorder %s35, 0
      %p192 = por %p190, %p191
      %p193 = scmp.ne.s32.totalorder %s181, %s182
      %p194 = scmp.eq.s32.totalorder %s36, 1
      %p195 = por %p193, %p194
      %p197 = scmp.ne.s32.totalorder %s182, %s196
      %p198 = scmp.eq.s32.totalorder %s36, 0
      %p199 = por %p197, %p198
      %s201 = sadd.s32 %s200, 1
      %p204 = scmp.eq.s32.totalorder %s30, 1
      %p205 = scmp.ne.s32.totalorder %s200, %s202
      %p206 = scmp.eq.s32.totalorder %s30, 0
      %p207 = por %p205, %p206
      %p208 = scmp.ne.s32.totalorder %s200, %s202
      %p209 = scmp.eq.s32.totalorder %s35, 1
      %p210 = por %p208, %p209
      %p211 = scmp.ne.s32.totalorder %s202, %s203
      %p212 = scmp.eq.s32.totalorder %s35, 0
      %p213 = por %p211, %p212
      %p214 = scmp.ne.s32.totalorder %s202, %s203
      %p215 = scmp.eq.s32.totalorder %s36, 1
      %p216 = por %p214, %p215
      %p218 = scmp.ne.s32.totalorder %s203, %s217
      %p219 = scmp.eq.s32.totalorder %s36, 0
      %p220 = por %p218, %p219
      %s222 = sadd.s32 %s221, 1
      %p225 = scmp.eq.s32.totalorder %s30, 1
      %p226 = scmp.ne.s32.totalorder %s221, %s223
      %p227 = scmp.eq.s32.totalorder %s30, 0
      %p228 = por %p226, %p227
      %p229 = scmp.ne.s32.totalorder %s221, %s223
      %p230 = scmp.eq.s32.totalorder %s35, 1
      %p231 = por %p229, %p230
      %p232 = scmp.ne.s32.totalorder %s223, %s224
      %p233 = scmp.eq.s32.totalorder %s35, 0
      %p234 = por %p232, %p233
      %p235 = scmp.ne.s32.totalorder %s223, %s224
      %p236 = scmp.eq.s32.totalorder %s36, 1
      %p237 = por %p235, %p236
      %p239 = scmp.ne.s32.totalorder %s224, %s238
      %p240 = scmp.eq.s32.totalorder %s36, 0
      %p241 = por %p239, %p240
      %s243 = sadd.s32 %s242, 1
      %p246 = scmp.eq.s32.totalorder %s30, 1
      %p247 = scmp.ne.s32.totalorder %s242, %s244
      %p248 = scmp.eq.s32.totalorder %s30, 0
      %p249 = por %p247, %p248
      %p250 = scmp.ne.s32.totalorder %s242, %s244
      %p251 = scmp.eq.s32.totalorder %s35, 1
      %p252 = por %p250, %p251
      %p253 = scmp.ne.s32.totalorder %s244, %s245
      %p254 = scmp.eq.s32.totalorder %s35, 0
      %p255 = por %p253, %p254
      %p256 = scmp.ne.s32.totalorder %s244, %s245
      %p257 = scmp.eq.s32.totalorder %s36, 1
      %p258 = por %p256, %p257
      %p260 = scmp.ne.s32.totalorder %s245, %s259
      %p261 = scmp.eq.s32.totalorder %s36, 0
      %p262 = por %p260, %p261
      %s264 = sadd.s32 %s263, 1
      %p267 = scmp.eq.s32.totalorder %s30, 1
      %p268 = scmp.ne.s32.totalorder %s263, %s265
      %p269 = scmp.eq.s32.totalorder %s30, 0
      %p270 = por %p268, %p269
      %p271 = scmp.ne.s32.totalorder %s263, %s265
      %p272 = scmp.eq.s32.totalorder %s35, 1
      %p273 = por %p271, %p272
      %p274 = scmp.ne.s32.totalorder %s265, %s266
      %p275 = scmp.eq.s32.totalorder %s35, 0
      %p276 = por %p274, %p275
      %p277 = scmp.ne.s32.totalorder %s265, %s266
      %p278 = scmp.eq.s32.totalorder %s36, 1
      %p279 = por %p277, %p278
      %p281 = scmp.ne.s32.totalorder %s266, %s280
      %p282 = scmp.eq.s32.totalorder %s36, 0
      %p283 = por %p281, %p282
      %s285 = sadd.s32 %s284, 1
      %p288 = scmp.eq.s32.totalorder %s30, 1
      %p289 = scmp.ne.s32.totalorder %s284, %s286
      %p290 = scmp.eq.s32.totalorder %s30, 0
      %p291 = por %p289, %p290
      %p292 = scmp.ne.s32.totalorder %s284, %s286
      %p293 = scmp.eq.s32.totalorder %s35, 1
      %p294 = por %p292, %p293
      %p295 = scmp.ne.s32.totalorder %s286, %s287
      %p296 = scmp.eq.s32.totalorder %s35, 0
      %p297 = por %p295, %p296
      %p298 = scmp.ne.s32.totalorder %s286, %s287
      %p299 = scmp.eq.s32.totalorder %s36, 1
      %p300 = por %p298, %p299
      %p302 = scmp.ne.s32.totalorder %s287, %s301
      %p303 = scmp.eq.s32.totalorder %s36, 0
      %p304 = por %p302, %p303
      %s305 = ssub.s32 %s30, %s37
      %p306 = scmp.eq.s32.totalorder %s305, 0
      %s308 = sadd.s32 %s307, 1
      %s309 = scalar_select %p306, %s307, %s308
      %p312 = pneg %p306
      %p313 = scmp.eq.s32.totalorder %s30, 1
      %p314 = por %p312, %p313
      %p315 = scmp.ne.s32.totalorder %s307, %s310
      %p316 = scmp.eq.s32.totalorder %s30, 0
      %p317 = por %p315, %p316
      %p318 = scmp.ne.s32.totalorder %s307, %s310
      %p319 = scmp.eq.s32.totalorder %s35, 1
      %p320 = por %p318, %p319
      %p321 = scmp.ne.s32.totalorder %s310, %s311
      %p322 = scmp.eq.s32.totalorder %s35, 0
      %p323 = por %p321, %p322
      %p324 = scmp.ne.s32.totalorder %s310, %s311
      %p325 = scmp.eq.s32.totalorder %s36, 1
      %p326 = por %p324, %p325
      %p328 = scmp.ne.s32.totalorder %s311, %s327
      %p329 = scmp.eq.s32.totalorder %s36, 0
      %p330 = por %p328, %p329
      %p331 = scmp.le.s32.totalorder 1, %s30
      %p332 = scmp.lt.s32.totalorder %s30, 3
      %p333 = pnand %p331, %p332
      %p334 = pneg %p333
      // Predicated region
      $region9: #{tpu_custom_call.1} parent=5 // pred_check
        _
      $region10: #{tpu_custom_call.1} parent=5 // pred_check_branch
        %336 = sbr.rel (%p333) target = $region12
      $region11: #{tpu_custom_call.1} parent=5 // pred_region
        %s337 = ssub.s32 %s30, 1
        // Predicated region
        $region13: #{tpu_custom_call.1} parent=11 // pred_check
          %p338 = pneg %p129
        $region14: #{tpu_custom_call.1} parent=11 // pred_check_branch
          %340 = sbr.rel (%p338) target = $region16
        $region15: #{tpu_custom_call.1} parent=11 // pred_region
          %s342 = ssub.s32 512, 512
          %343 = vsyncadd [#allocation9], %s342
          %s344 = sshll.u32 [#allocation8], 4
          %s345 = int_to_ptr.vmem [resolvable:$true] %s344
          %350 = dma.hbm_to_vmem [thread:$0]  %s3, 512, %s345, [#allocation9], 128, 128, 8
        $region16: #{tpu_custom_call.1} parent=11 // pred_fallthru
          _
        // Predicated region
        $region17: #{tpu_custom_call.1} parent=11 // pred_check
          %p351 = pneg %p150
        $region18: #{tpu_custom_call.1} parent=11 // pred_check_branch
          %353 = sbr.rel (%p351) target = $region20
        $region19: #{tpu_custom_call.1} parent=11 // pred_region
          _
        $region20: #{tpu_custom_call.1} parent=11 // pred_fallthru
          _
        // Predicated region
        $region21: #{tpu_custom_call.1} parent=11 // pred_check
          %p354 = pneg %p171
        $region22: #{tpu_custom_call.1} parent=11 // pred_check_branch
          %356 = sbr.rel (%p354) target = $region24
        $region23: #{tpu_custom_call.1} parent=11 // pred_region
          %s358 = ssub.s32 512, 512
          %359 = vsyncadd [#allocation9], %s358
          %s360 = sshll.u32 [#allocation10], 4
          %s361 = int_to_ptr.vmem [resolvable:$true] %s360
          %366 = dma.hbm_to_vmem [thread:$0]  %s5, 512, %s361, [#allocation9], 128, 128, 8
        $region24: #{tpu_custom_call.1} parent=11 // pred_fallthru
          _
        // Predicated region
        $region25: #{tpu_custom_call.1} parent=11 // pred_check
          %p367 = pneg %p192
        $region26: #{tpu_custom_call.1} parent=11 // pred_check_branch
          %369 = sbr.rel (%p367) target = $region28
        $region27: #{tpu_custom_call.1} parent=11 // pred_region
          _
        $region28: #{tpu_custom_call.1} parent=11 // pred_fallthru
          _
        // Predicated region
        $region29: #{tpu_custom_call.1} parent=11 // pred_check
          %p370 = pneg %p213
        $region30: #{tpu_custom_call.1} parent=11 // pred_check_branch
          %372 = sbr.rel (%p370) target = $region32
        $region31: #{tpu_custom_call.1} parent=11 // pred_region
          %s374 = ssub.s32 512, 512
          %375 = vsyncadd [#allocation12], %s374
          %s376 = sshll.u32 [#allocation11], 4
          %s377 = int_to_ptr.vmem [resolvable:$true] %s376
          %382 = dma.hbm_to_vmem [thread:$0]  %s7, 512, %s377, [#allocation12], 128, 128, 8
        $region32: #{tpu_custom_call.1} parent=11 // pred_fallthru
          _
        // Predicated region
        $region33: #{tpu_custom_call.1} parent=11 // pred_check
          %p383 = pneg %p234
        $region34: #{tpu_custom_call.1} parent=11 // pred_check_branch
          %385 = sbr.rel (%p383) target = $region36
        $region35: #{tpu_custom_call.1} parent=11 // pred_region
          _
        $region36: #{tpu_custom_call.1} parent=11 // pred_fallthru
          _
        // Predicated region
        $region37: #{tpu_custom_call.1} parent=11 // pred_check
          %p386 = pneg %p255
        $region38: #{tpu_custom_call.1} parent=11 // pred_check_branch
          %388 = sbr.rel (%p386) target = $region40
        $region39: #{tpu_custom_call.1} parent=11 // pred_region
          %s390 = ssub.s32 512, 512
          %391 = vsyncadd [#allocation12], %s390
          %s392 = sshll.u32 [#allocation13], 4
          %s393 = int_to_ptr.vmem [resolvable:$true] %s392
          %398 = dma.hbm_to_vmem [thread:$0]  %s9, 512, %s393, [#allocation12], 128, 128, 8
        $region40: #{tpu_custom_call.1} parent=11 // pred_fallthru
          _
        // Predicated region
        $region41: #{tpu_custom_call.1} parent=11 // pred_check
          %p399 = pneg %p276
        $region42: #{tpu_custom_call.1} parent=11 // pred_check_branch
          %401 = sbr.rel (%p399) target = $region44
        $region43: #{tpu_custom_call.1} parent=11 // pred_region
          _
        $region44: #{tpu_custom_call.1} parent=11 // pred_fallthru
          _
        // Predicated region
        $region45: #{tpu_custom_call.1} parent=11 // pred_check
          %p402 = pneg %p297
        $region46: #{tpu_custom_call.1} parent=11 // pred_check_branch
          %404 = sbr.rel (%p402) target = $region48
        $region47: #{tpu_custom_call.1} parent=11 // pred_region
          %s406 = ssub.s32 512, 512
          %407 = vsyncadd [#allocation15], %s406
          %s408 = sshll.u32 [#allocation14], 4
          %s409 = int_to_ptr.vmem [resolvable:$true] %s408
          %414 = dma.hbm_to_vmem [thread:$0]  %s11, 512, %s409, [#allocation15], 128, 128, 8
        $region48: #{tpu_custom_call.1} parent=11 // pred_fallthru
          _
      $region12: #{tpu_custom_call.1} parent=5 // pred_fallthru
        _
      %p415 = scmp.lt.s32.totalorder %s30, 2
      // Predicated region
      $region49: #{tpu_custom_call.1} parent=5 // pred_check
        %p416 = pneg %p415
      $region50: #{tpu_custom_call.1} parent=5 // pred_check_branch
        %418 = sbr.rel (%p416) target = $region52
      $region51: #{tpu_custom_call.1} parent=5 // pred_region
        // Predicated region
        $region53: #{tpu_custom_call.1} parent=51 // pred_check
          %p419 = pneg %p50
        $region54: #{tpu_custom_call.1} parent=51 // pred_check_branch
          %421 = sbr.rel (%p419) target = $region56
        $region55: #{tpu_custom_call.1} parent=51 // pred_region
          %s422 = sand.u32 %s40, 1
          %s423 = scalar_lea.sflag [#allocation3], %s422
          %s424 = sand.u32 %s40, 1
          %s425 = smul.addr %s424, 16
          %s426 = scalar_lea.vmem [#allocation2], %s425
          %s427 = smul.u32 2, %s30
          %s429 = ssub.s32 256, 256
          %430 = vsyncadd %s423, %s429
          %s431 = smul.addr %s427, 128
          %s432 = scalar_lea.hbm %s0, %s431
          %s433 = sshll.u32 %s426, 4
          %s434 = int_to_ptr.vmem [resolvable:$true] %s433
          %439 = dma.hbm_to_vmem [thread:$0]  %s432, 256, %s434, %s423, 128, 128, 8
        $region56: #{tpu_custom_call.1} parent=51 // pred_fallthru
          _
        // Predicated region
        $region57: #{tpu_custom_call.1} parent=51 // pred_check
          %p440 = pneg %p76
        $region58: #{tpu_custom_call.1} parent=51 // pred_check_branch
          %442 = sbr.rel (%p440) target = $region60
        $region59: #{tpu_custom_call.1} parent=51 // pred_region
          %s443 = sand.u32 %s30, 1
          %s444 = scalar_lea.sflag [#allocation6], %s443
          %s445 = sand.u32 %s66, 1
          %s446 = smul.addr %s445, 16
          %s447 = scalar_lea.vmem [#allocation5], %s446
          %s448 = smul.u32 2, %s30
          %s450 = ssub.s32 256, 256
          %451 = vsyncadd %s444, %s450
          %s452 = smul.addr %s448, 128
          %s453 = scalar_lea.hbm %s1, %s452
          %s454 = sshll.u32 %s447, 4
          %s455 = int_to_ptr.vmem [resolvable:$true] %s454
          %460 = dma.hbm_to_vmem [thread:$0]  %s453, 256, %s455, %s444, 128, 128, 8
        $region60: #{tpu_custom_call.1} parent=51 // pred_fallthru
          _
        // Predicated region
        $region61: #{tpu_custom_call.1} parent=51 // pred_check
          %p461 = pneg %p102
        $region62: #{tpu_custom_call.1} parent=51 // pred_check_branch
          %463 = sbr.rel (%p461) target = $region64
        $region63: #{tpu_custom_call.1} parent=51 // pred_region
          %s464 = sand.u32 %s30, 1
          %s465 = scalar_lea.sflag [#allocation6], %s464
          %s466 = sand.u32 %s92, 1
          %s467 = smul.addr %s466, 16
          %s468 = scalar_lea.vmem [#allocation7], %s467
          %s469 = smul.u32 2, %s30
          %s471 = ssub.s32 256, 256
          %472 = vsyncadd %s465, %s471
          %s473 = smul.addr %s469, 128
          %s474 = scalar_lea.hbm %s2, %s473
          %s475 = sshll.u32 %s468, 4
          %s476 = int_to_ptr.vmem [resolvable:$true] %s475
          %481 = dma.hbm_to_vmem [thread:$0]  %s474, 256, %s476, %s465, 128, 128, 8
        $region64: #{tpu_custom_call.1} parent=51 // pred_fallthru
          _
      $region52: #{tpu_custom_call.1} parent=5 // pred_fallthru
        _
      %p482 = scmp.le.s32.totalorder 1, %s30
      %p483 = scmp.lt.s32.totalorder %s30, 3
      %p484 = pnand %p482, %p483
      %p485 = pneg %p484
      // Predicated region
      $region65: #{tpu_custom_call.1} parent=5 // pred_check
        _
      $region66: #{tpu_custom_call.1} parent=5 // pred_check_branch
        %487 = sbr.rel (%p484) target = $region68
      $region67: #{tpu_custom_call.1} parent=5 // pred_region
        %s488 = ssub.s32 %s30, 1
        %s489 = sand.u32 %s43, 1
        %s490 = scalar_lea.sflag [#allocation3], %s489
        %s491 = sand.u32 %s43, 1
        %s492 = smul.addr %s491, 16
        %s493 = scalar_lea.vmem [#allocation2], %s492
        // Predicated region
        $region69: #{tpu_custom_call.1} parent=67 // pred_check
          %p494 = pneg %p56
        $region70: #{tpu_custom_call.1} parent=67 // pred_check_branch
          %496 = sbr.rel (%p494) target = $region72
        $region71: #{tpu_custom_call.1} parent=67 // pred_region
          %497 = dma.done %s490, 256
        $region72: #{tpu_custom_call.1} parent=67 // pred_fallthru
          _
        %s498 = sand.u32 %s35, 1
        %s499 = scalar_lea.sflag [#allocation6], %s498
        %s500 = sand.u32 %s69, 1
        %s501 = smul.addr %s500, 16
        %s502 = scalar_lea.vmem [#allocation5], %s501
        // Predicated region
        $region73: #{tpu_custom_call.1} parent=67 // pred_check
          %p503 = pneg %p82
        $region74: #{tpu_custom_call.1} parent=67 // pred_check_branch
          %505 = sbr.rel (%p503) target = $region76
        $region75: #{tpu_custom_call.1} parent=67 // pred_region
          %506 = dma.done %s499, 256
        $region76: #{tpu_custom_call.1} parent=67 // pred_fallthru
          _
        %s507 = sand.u32 %s35, 1
        %s508 = scalar_lea.sflag [#allocation6], %s507
        %s509 = sand.u32 %s95, 1
        %s510 = smul.addr %s509, 16
        %s511 = scalar_lea.vmem [#allocation7], %s510
        // Predicated region
        $region77: #{tpu_custom_call.1} parent=67 // pred_check
          %p512 = pneg %p108
        $region78: #{tpu_custom_call.1} parent=67 // pred_check_branch
          %514 = sbr.rel (%p512) target = $region80
        $region79: #{tpu_custom_call.1} parent=67 // pred_region
          %515 = dma.done %s508, 256
        $region80: #{tpu_custom_call.1} parent=67 // pred_fallthru
          _
        // Predicated region
        $region81: #{tpu_custom_call.1} parent=67 // pred_check
          %p516 = pneg %p129
        $region82: #{tpu_custom_call.1} parent=67 // pred_check_branch
          %518 = sbr.rel (%p516) target = $region84
        $region83: #{tpu_custom_call.1} parent=67 // pred_region
          %519 = dma.done [#allocation9], 512
        $region84: #{tpu_custom_call.1} parent=67 // pred_fallthru
          _
        // Predicated region
        $region85: #{tpu_custom_call.1} parent=67 // pred_check
          %p520 = pneg %p171
        $region86: #{tpu_custom_call.1} parent=67 // pred_check_branch
          %522 = sbr.rel (%p520) target = $region88
        $region87: #{tpu_custom_call.1} parent=67 // pred_region
          %523 = dma.done [#allocation9], 512
        $region88: #{tpu_custom_call.1} parent=67 // pred_fallthru
          _
        // Predicated region
        $region89: #{tpu_custom_call.1} parent=67 // pred_check
          %p524 = pneg %p213
        $region90: #{tpu_custom_call.1} parent=67 // pred_check_branch
          %526 = sbr.rel (%p524) target = $region92
        $region91: #{tpu_custom_call.1} parent=67 // pred_region
          %527 = dma.done [#allocation12], 512
        $region92: #{tpu_custom_call.1} parent=67 // pred_fallthru
          _
        // Predicated region
        $region93: #{tpu_custom_call.1} parent=67 // pred_check
          %p528 = pneg %p255
        $region94: #{tpu_custom_call.1} parent=67 // pred_check_branch
          %530 = sbr.rel (%p528) target = $region96
        $region95: #{tpu_custom_call.1} parent=67 // pred_region
          %531 = dma.done [#allocation12], 512
        $region96: #{tpu_custom_call.1} parent=67 // pred_fallthru
          _
        // Predicated region
        $region97: #{tpu_custom_call.1} parent=67 // pred_check
          %p532 = pneg %p297
        $region98: #{tpu_custom_call.1} parent=67 // pred_check_branch
          %534 = sbr.rel (%p532) target = $region100
        $region99: #{tpu_custom_call.1} parent=67 // pred_region
          %535 = dma.done [#allocation15], 512
        $region100: #{tpu_custom_call.1} parent=67 // pred_fallthru
          _
        %s536 = sand.u32 %s43, 1
        %s537 = scalar_lea.sflag [#allocation3], %s536
        %s538 = sand.u32 %s43, 1
        %s539 = smul.addr %s538, 16
        %s540 = scalar_lea.vmem [#allocation2], %s539
        %p541 = pneg %p56
        %p542 = pneg %p53
        %s543 = sand.u32 %s35, 1
        %s544 = scalar_lea.sflag [#allocation6], %s543
        %s545 = sand.u32 %s69, 1
        %s546 = smul.addr %s545, 16
        %s547 = scalar_lea.vmem [#allocation5], %s546
        %p548 = pneg %p82
        %p549 = pneg %p79
        %s550 = sand.u32 %s35, 1
        %s551 = scalar_lea.sflag [#allocation6], %s550
        %s552 = sand.u32 %s95, 1
        %s553 = smul.addr %s552, 16
        %s554 = scalar_lea.vmem [#allocation7], %s553
        %p555 = pneg %p108
        %p556 = pneg %p105
        %p557 = pneg %p129
        %p558 = pneg %p126
        %p559 = pneg %p150
        %p560 = pneg %p147
        %p561 = pneg %p171
        %p562 = pneg %p168
        %p563 = pneg %p192
        %p564 = pneg %p189
        %p565 = pneg %p213
        %p566 = pneg %p210
        %p567 = pneg %p234
        %p568 = pneg %p231
        %p569 = pneg %p255
        %p570 = pneg %p252
        %p571 = pneg %p276
        %p572 = pneg %p273
        %p573 = pneg %p297
        %p574 = pneg %p294
        %p575 = pneg %p323
        %p576 = pneg %p320
        %s577 = sand.u32 %s310, 1
        %s578 = scalar_lea.sflag [#allocation4], %s577
        %s579 = sand.u32 %s310, 1
        %s580 = smul.addr %s579, 16
        %s581 = scalar_lea.vmem [#allocation16], %s580
        %s582 = smul.u32 2, %s35
        %s583 = smul.u32 2, %s35
        %s584 = smul.u32 2, %s35
        %s585 = smul.u32 2, %s35
        %v586 = vld [vmem:[%s493] sm:$0xff]
        %v587 = vld [vmem:[%s493 + $0x8] sm:$0xff]
        %v588 = vld [vmem:[#allocation8] sm:$0xff]
        %v589 = vld [vmem:[#allocation8 + $0x8] sm:$0xff]
        %v590 = vld [vmem:[#allocation8 + $0x10] sm:$0xff]
        %v591 = vld [vmem:[#allocation8 + $0x18] sm:$0xff]
        %v592 = vld [vmem:[%s4] sm:$0x1]
        %v594 = vlaneseq
        %v595 = vshrl.u32 %v594, 7
        %v596 = vsub.s32 0, %v595
        %v597 = vrot.slane %v592, %v596
        %vm599 = vcmask 261120
        %v601 = vsel %vm599, %v586, 0
        %v604 = vsel %vm599, %v587, 0
        %606 = vmatprep.subr.mxu0 0.0
        %607 = vmatpush1.msra.mxu0 0.0
        %608 = vmatprep.subr.mxu0 0.0
        %609 = vmatpush1.msra.mxu0 0.0
        %610 = vmatprep.subr.mxu0 0.0
        %611 = vmatpush1.msra.mxu0 0.0
        %612 = vmatprep.subr.mxu0 0.0
        %613 = vmatpush1.msra.mxu0 0.0
        %614 = vmatprep.subr.mxu0 0.0
        %615 = vmatpush1.msra.mxu0 0.0
        %616 = vmatprep.subr.mxu0 0.0
        %617 = vmatpush1.msra.mxu0 0.0
        %618 = vmatprep.subr.mxu0 0.0
        %619 = vmatpush1.msra.mxu0 0.0
        %620 = vmatprep.subr.mxu0 0.0
        %621 = vmatpush1.msra.mxu0 0.0
        %622 = vmatprep.subr.mxu0 0.0
        %623 = vmatpush1.msra.mxu0 0.0
        %624 = vmatprep.subr.mxu0 0.0
        %625 = vmatpush1.msra.mxu0 0.0
        %626 = vmatprep.subr.mxu0 0.0
        %627 = vmatpush1.msra.mxu0 0.0
        %628 = vmatprep.subr.mxu0 0.0
        %629 = vmatpush1.msra.mxu0 0.0
        %630 = vmatprep.subr.mxu0 0.0
        %631 = vmatpush1.msra.mxu0 %v591
        %632 = vmatprep.subr.mxu0 0.0
        %633 = vmatpush1.msra.mxu0 %v590
        %634 = vmatprep.subr.mxu0 0.0
        %635 = vmatpush1.msra.mxu0 %v589
        %636 = vmatprep.subr.mxu0 0.0
        %637 = vmatpush1.msra.mxu0 %v588
        %638 = vmatprep.subr.mxu0 0.0
        %639 = vmatpush2.msra.mxu0 0.0
        %640 = vmatprep.subr.mxu0 0.0
        %641 = vmatpush2.msra.mxu0 0.0
        %642 = vmatprep.subr.mxu0 0.0
        %643 = vmatpush2.msra.mxu0 0.0
        %644 = vmatprep.subr.mxu0 0.0
        %645 = vmatpush2.msra.mxu0 0.0
        %646 = vmatprep.subr.mxu0 0.0
        %647 = vmatpush2.msra.mxu0 0.0
        %648 = vmatprep.subr.mxu0 0.0
        %649 = vmatpush2.msra.mxu0 0.0
        %650 = vmatprep.subr.mxu0 0.0
        %651 = vmatpush2.msra.mxu0 0.0
        %652 = vmatprep.subr.mxu0 0.0
        %653 = vmatpush2.msra.mxu0 0.0
        %654 = vmatprep.subr.mxu0 0.0
        %655 = vmatpush2.msra.mxu0 0.0
        %656 = vmatprep.subr.mxu0 0.0
        %657 = vmatpush2.msra.mxu0 0.0
        %658 = vmatprep.subr.mxu0 0.0
        %659 = vmatpush2.msra.mxu0 0.0
        %660 = vmatprep.subr.mxu0 0.0
        %661 = vmatpush2.msra.mxu0 0.0
        %662 = vmatprep.subr.mxu0 0.0
        %663 = vmatpush2.msra.mxu0 0.0
        %664 = vmatprep.subr.mxu0 0.0
        %665 = vmatpush2.msra.mxu0 0.0
        %666 = vmatprep.subr.mxu0 0.0
        %667 = vmatpush2.msra.mxu0 0.0
        %668 = vmatprep.subr.mxu0 0.0
        %669 = vmatpush2.msra.mxu0 0.0
        %670 = vmatprep.mubr.f32.mxu0 0.0
        %671 = vmatmul.mubr.f32.gmra.mxu0 %v601
        %v672 = vpop.f32.mrf.mxu0
        %v673 = vadd.f32 %v597, %v672
        %v674 = vpop.f32.mrf.mxu0
        %675 = vmatprep.mubr.f32.mxu0 0.0
        %676 = vmatmul.mubr.f32.gmra.mxu0 %v604
        %v677 = vpop.f32.mrf.mxu0
        %v678 = vadd.f32 %v597, %v677
        %v679 = vpop.f32.mrf.mxu0
        %680 = vdwg.mxu0
        %v681 = vld [vmem:[%s502] sm:$0xff]
        %v682 = vld [vmem:[%s502 + $0x8] sm:$0xff]
        %v683 = vld [vmem:[#allocation10] sm:$0xff]
        %v684 = vld [vmem:[#allocation10 + $0x8] sm:$0xff]
        %v685 = vld [vmem:[#allocation10 + $0x10] sm:$0xff]
        %v686 = vld [vmem:[#allocation10 + $0x18] sm:$0xff]
        %v687 = vld [vmem:[%s6] sm:$0x1]
        %v689 = vlaneseq
        %v690 = vshrl.u32 %v689, 7
        %v691 = vsub.s32 0, %v690
        %v692 = vrot.slane %v687, %v691
        %v695 = vsel %vm599, %v681, 0
        %v698 = vsel %vm599, %v682, 0
        %700 = vmatprep.subr.mxu0 0.0
        %701 = vmatpush1.msra.mxu0 0.0
        %702 = vmatprep.subr.mxu0 0.0
        %703 = vmatpush1.msra.mxu0 0.0
        %704 = vmatprep.subr.mxu0 0.0
        %705 = vmatpush1.msra.mxu0 0.0
        %706 = vmatprep.subr.mxu0 0.0
        %707 = vmatpush1.msra.mxu0 0.0
        %708 = vmatprep.subr.mxu0 0.0
        %709 = vmatpush1.msra.mxu0 0.0
        %710 = vmatprep.subr.mxu0 0.0
        %711 = vmatpush1.msra.mxu0 0.0
        %712 = vmatprep.subr.mxu0 0.0
        %713 = vmatpush1.msra.mxu0 0.0
        %714 = vmatprep.subr.mxu0 0.0
        %715 = vmatpush1.msra.mxu0 0.0
        %716 = vmatprep.subr.mxu0 0.0
        %717 = vmatpush1.msra.mxu0 0.0
        %718 = vmatprep.subr.mxu0 0.0
        %719 = vmatpush1.msra.mxu0 0.0
        %720 = vmatprep.subr.mxu0 0.0
        %721 = vmatpush1.msra.mxu0 0.0
        %722 = vmatprep.subr.mxu0 0.0
        %723 = vmatpush1.msra.mxu0 0.0
        %724 = vmatprep.subr.mxu0 0.0
        %725 = vmatpush1.msra.mxu0 %v686
        %726 = vmatprep.subr.mxu0 0.0
        %727 = vmatpush1.msra.mxu0 %v685
        %728 = vmatprep.subr.mxu0 0.0
        %729 = vmatpush1.msra.mxu0 %v684
        %730 = vmatprep.subr.mxu0 0.0
        %731 = vmatpush1.msra.mxu0 %v683
        %732 = vmatprep.subr.mxu0 0.0
        %733 = vmatpush2.msra.mxu0 0.0
        %734 = vmatprep.subr.mxu0 0.0
        %735 = vmatpush2.msra.mxu0 0.0
        %736 = vmatprep.subr.mxu0 0.0
        %737 = vmatpush2.msra.mxu0 0.0
        %738 = vmatprep.subr.mxu0 0.0
        %739 = vmatpush2.msra.mxu0 0.0
        %740 = vmatprep.subr.mxu0 0.0
        %741 = vmatpush2.msra.mxu0 0.0
        %742 = vmatprep.subr.mxu0 0.0
        %743 = vmatpush2.msra.mxu0 0.0
        %744 = vmatprep.subr.mxu0 0.0
        %745 = vmatpush2.msra.mxu0 0.0
        %746 = vmatprep.subr.mxu0 0.0
        %747 = vmatpush2.msra.mxu0 0.0
        %748 = vmatprep.subr.mxu0 0.0
        %749 = vmatpush2.msra.mxu0 0.0
        %750 = vmatprep.subr.mxu0 0.0
        %751 = vmatpush2.msra.mxu0 0.0
        %752 = vmatprep.subr.mxu0 0.0
        %753 = vmatpush2.msra.mxu0 0.0
        %754 = vmatprep.subr.mxu0 0.0
        %755 = vmatpush2.msra.mxu0 0.0
        %756 = vmatprep.subr.mxu0 0.0
        %757 = vmatpush2.msra.mxu0 0.0
        %758 = vmatprep.subr.mxu0 0.0
        %759 = vmatpush2.msra.mxu0 0.0
        %760 = vmatprep.subr.mxu0 0.0
        %761 = vmatpush2.msra.mxu0 0.0
        %762 = vmatprep.subr.mxu0 0.0
        %763 = vmatpush2.msra.mxu0 0.0
        %764 = vmatprep.mubr.f32.mxu0 0.0
        %765 = vmatmul.mubr.f32.gmra.mxu0 %v695
        %v766 = vpop.f32.mrf.mxu0
        %v767 = vadd.f32 %v692, %v766
        %v768 = vpop.f32.mrf.mxu0
        %769 = vmatprep.mubr.f32.mxu0 0.0
        %770 = vmatmul.mubr.f32.gmra.mxu0 %v698
        %v771 = vpop.f32.mrf.mxu0
        %v772 = vadd.f32 %v692, %v771
        %v773 = vpop.f32.mrf.mxu0
        %774 = vdwg.mxu0
        %v775 = vld [vmem:[%s511] sm:$0xff]
        %v776 = vld [vmem:[%s511 + $0x8] sm:$0xff]
        %v777 = vld [vmem:[#allocation11] sm:$0xff]
        %v778 = vld [vmem:[#allocation11 + $0x8] sm:$0xff]
        %v779 = vld [vmem:[#allocation11 + $0x10] sm:$0xff]
        %v780 = vld [vmem:[#allocation11 + $0x18] sm:$0xff]
        %v781 = vld [vmem:[%s8] sm:$0x1]
        %v783 = vlaneseq
        %v784 = vshrl.u32 %v783, 7
        %v785 = vsub.s32 0, %v784
        %v786 = vrot.slane %v781, %v785
        %v789 = vsel %vm599, %v775, 0
        %v792 = vsel %vm599, %v776, 0
        %794 = vmatprep.subr.mxu0 0.0
        %795 = vmatpush1.msra.mxu0 0.0
        %796 = vmatprep.subr.mxu0 0.0
        %797 = vmatpush1.msra.mxu0 0.0
        %798 = vmatprep.subr.mxu0 0.0
        %799 = vmatpush1.msra.mxu0 0.0
        %800 = vmatprep.subr.mxu0 0.0
        %801 = vmatpush1.msra.mxu0 0.0
        %802 = vmatprep.subr.mxu0 0.0
        %803 = vmatpush1.msra.mxu0 0.0
        %804 = vmatprep.subr.mxu0 0.0
        %805 = vmatpush1.msra.mxu0 0.0
        %806 = vmatprep.subr.mxu0 0.0
        %807 = vmatpush1.msra.mxu0 0.0
        %808 = vmatprep.subr.mxu0 0.0
        %809 = vmatpush1.msra.mxu0 0.0
        %810 = vmatprep.subr.mxu0 0.0
        %811 = vmatpush1.msra.mxu0 0.0
        %812 = vmatprep.subr.mxu0 0.0
        %813 = vmatpush1.msra.mxu0 0.0
        %814 = vmatprep.subr.mxu0 0.0
        %815 = vmatpush1.msra.mxu0 0.0
        %816 = vmatprep.subr.mxu0 0.0
        %817 = vmatpush1.msra.mxu0 0.0
        %818 = vmatprep.subr.mxu0 0.0
        %819 = vmatpush1.msra.mxu0 %v780
        %820 = vmatprep.subr.mxu0 0.0
        %821 = vmatpush1.msra.mxu0 %v779
        %822 = vmatprep.subr.mxu0 0.0
        %823 = vmatpush1.msra.mxu0 %v778
        %824 = vmatprep.subr.mxu0 0.0
        %825 = vmatpush1.msra.mxu0 %v777
        %826 = vmatprep.subr.mxu0 0.0
        %827 = vmatpush2.msra.mxu0 0.0
        %828 = vmatprep.subr.mxu0 0.0
        %829 = vmatpush2.msra.mxu0 0.0
        %830 = vmatprep.subr.mxu0 0.0
        %831 = vmatpush2.msra.mxu0 0.0
        %832 = vmatprep.subr.mxu0 0.0
        %833 = vmatpush2.msra.mxu0 0.0
        %834 = vmatprep.subr.mxu0 0.0
        %835 = vmatpush2.msra.mxu0 0.0
        %836 = vmatprep.subr.mxu0 0.0
        %837 = vmatpush2.msra.mxu0 0.0
        %838 = vmatprep.subr.mxu0 0.0
        %839 = vmatpush2.msra.mxu0 0.0
        %840 = vmatprep.subr.mxu0 0.0
        %841 = vmatpush2.msra.mxu0 0.0
        %842 = vmatprep.subr.mxu0 0.0
        %843 = vmatpush2.msra.mxu0 0.0
        %844 = vmatprep.subr.mxu0 0.0
        %845 = vmatpush2.msra.mxu0 0.0
        %846 = vmatprep.subr.mxu0 0.0
        %847 = vmatpush2.msra.mxu0 0.0
        %848 = vmatprep.subr.mxu0 0.0
        %849 = vmatpush2.msra.mxu0 0.0
        %850 = vmatprep.subr.mxu0 0.0
        %851 = vmatpush2.msra.mxu0 0.0
        %852 = vmatprep.subr.mxu0 0.0
        %853 = vmatpush2.msra.mxu0 0.0
        %854 = vmatprep.subr.mxu0 0.0
        %855 = vmatpush2.msra.mxu0 0.0
        %856 = vmatprep.subr.mxu0 0.0
        %857 = vmatpush2.msra.mxu0 0.0
        %858 = vmatprep.mubr.f32.mxu0 0.0
        %859 = vmatmul.mubr.f32.gmra.mxu0 %v789
        %v860 = vpop.f32.mrf.mxu0
        %v861 = vadd.f32 %v786, %v860
        %v862 = vpop.f32.mrf.mxu0
        %863 = vmatprep.mubr.f32.mxu0 0.0
        %864 = vmatmul.mubr.f32.gmra.mxu0 %v792
        %v865 = vpop.f32.mrf.mxu0
        %v866 = vadd.f32 %v786, %v865
        %v867 = vpop.f32.mrf.mxu0
        %868 = vdwg.mxu0
        %vm869 = vcmp.gt.f32.partialorder %v673, 0.0
        %vm870 = vcmp.gt.f32.partialorder %v678, 0.0
        %v871 = vadd.f32 %v673, 1.0
        %v872 = vadd.f32 %v678, 1.0
        %v873 = vmul.f32 %v673, 1.442695
        %v874 = vpow.pop %v873
        %v875 = vmul.f32 %v678, 1.442695
        %v876 = vpow.pop %v875
        %v877 = vsel %vm869, %v871, %v874
        %v878 = vsel %vm870, %v872, %v876
        %vm879 = vcmp.gt.f32.partialorder %v767, 0.0
        %vm880 = vcmp.gt.f32.partialorder %v772, 0.0
        %v881 = vadd.f32 %v767, 1.0
        %v882 = vadd.f32 %v772, 1.0
        %v883 = vmul.f32 %v767, 1.442695
        %v884 = vpow.pop %v883
        %v885 = vmul.f32 %v772, 1.442695
        %v886 = vpow.pop %v885
        %v887 = vsel %vm879, %v881, %v884
        %v888 = vsel %vm880, %v882, %v886
        %889 = vxpose.xlu0.b32.start [1/16] %v887, 128
        %890 = vxpose.xlu0.b32.cont [2/16] 0.0, 128
        %891 = vxpose.xlu0.b32.cont [3/16] 0.0, 128
        %892 = vxpose.xlu0.b32.cont [4/16] 0.0, 128
        %893 = vxpose.xlu0.b32.cont [5/16] 0.0, 128
        %894 = vxpose.xlu0.b32.cont [6/16] 0.0, 128
        %895 = vxpose.xlu0.b32.cont [7/16] 0.0, 128
        %896 = vxpose.xlu0.b32.cont [8/16] 0.0, 128
        %897 = vxpose.xlu0.b32.cont [9/16] 0.0, 128
        %898 = vxpose.xlu0.b32.cont [10/16] 0.0, 128
        %899 = vxpose.xlu0.b32.cont [11/16] 0.0, 128
        %900 = vxpose.xlu0.b32.cont [12/16] 0.0, 128
        %901 = vxpose.xlu0.b32.cont [13/16] 0.0, 128
        %902 = vxpose.xlu0.b32.cont [14/16] 0.0, 128
        %903 = vxpose.xlu0.b32.cont [15/16] 0.0, 128
        %904 = vxpose.xlu0.b32.end [16/16] 0.0, 128
        %v905 = vpop.trf.xlu0
        %v906 = vpop.trf.xlu0
        %v907 = vpop.trf.xlu0
        %v908 = vpop.trf.xlu0
        %v909 = vpop.trf.xlu0
        %v910 = vpop.trf.xlu0
        %v911 = vpop.trf.xlu0
        %v912 = vpop.trf.xlu0
        %v913 = vpop.trf.xlu0
        %v914 = vpop.trf.xlu0
        %v915 = vpop.trf.xlu0
        %v916 = vpop.trf.xlu0
        %v917 = vpop.trf.xlu0
        %v918 = vpop.trf.xlu0
        %v919 = vpop.trf.xlu0
        %v920 = vpop.trf.xlu0
        %vm921 = vcmask 64512
        %v923 = vsel %vm921, %v905, 0
        %v926 = vsel %vm921, %v906, 0
        %v929 = vsel %vm921, %v907, 0
        %v932 = vsel %vm921, %v908, 0
        %934 = vmatprep.subr.mxu0 0.0
        %935 = vmatpush1.msra.mxu0 0.0
        %936 = vmatprep.subr.mxu0 0.0
        %937 = vmatpush1.msra.mxu0 0.0
        %938 = vmatprep.subr.mxu0 0.0
        %939 = vmatpush1.msra.mxu0 0.0
        %940 = vmatprep.subr.mxu0 0.0
        %941 = vmatpush1.msra.mxu0 0.0
        %942 = vmatprep.subr.mxu0 0.0
        %943 = vmatpush1.msra.mxu0 0.0
        %944 = vmatprep.subr.mxu0 0.0
        %945 = vmatpush1.msra.mxu0 0.0
        %946 = vmatprep.subr.mxu0 0.0
        %947 = vmatpush1.msra.mxu0 0.0
        %948 = vmatprep.subr.mxu0 0.0
        %949 = vmatpush1.msra.mxu0 0.0
        %950 = vmatprep.subr.mxu0 0.0
        %951 = vmatpush1.msra.mxu0 0.0
        %952 = vmatprep.subr.mxu0 0.0
        %953 = vmatpush1.msra.mxu0 0.0
        %954 = vmatprep.subr.mxu0 0.0
        %955 = vmatpush1.msra.mxu0 0.0
        %956 = vmatprep.subr.mxu0 0.0
        %957 = vmatpush1.msra.mxu0 0.0
        %958 = vmatprep.subr.mxu0 0.0
        %959 = vmatpush1.msra.mxu0 0.0
        %960 = vmatprep.subr.mxu0 0.0
        %961 = vmatpush1.msra.mxu0 0.0
        %962 = vmatprep.subr.mxu0 0.0
        %963 = vmatpush1.msra.mxu0 0.0
        %964 = vmatprep.subr.mxu0 0.0
        %965 = vmatpush1.msra.mxu0 %v861
        %966 = vmatprep.subr.mxu0 0.0
        %967 = vmatpush2.msra.mxu0 0.0
        %968 = vmatprep.subr.mxu0 0.0
        %969 = vmatpush2.msra.mxu0 0.0
        %970 = vmatprep.subr.mxu0 0.0
        %971 = vmatpush2.msra.mxu0 0.0
        %972 = vmatprep.subr.mxu0 0.0
        %973 = vmatpush2.msra.mxu0 0.0
        %974 = vmatprep.subr.mxu0 0.0
        %975 = vmatpush2.msra.mxu0 0.0
        %976 = vmatprep.subr.mxu0 0.0
        %977 = vmatpush2.msra.mxu0 0.0
        %978 = vmatprep.subr.mxu0 0.0
        %979 = vmatpush2.msra.mxu0 0.0
        %980 = vmatprep.subr.mxu0 0.0
        %981 = vmatpush2.msra.mxu0 0.0
        %982 = vmatprep.subr.mxu0 0.0
        %983 = vmatpush2.msra.mxu0 0.0
        %984 = vmatprep.subr.mxu0 0.0
        %985 = vmatpush2.msra.mxu0 0.0
        %986 = vmatprep.subr.mxu0 0.0
        %987 = vmatpush2.msra.mxu0 0.0
        %988 = vmatprep.subr.mxu0 0.0
        %989 = vmatpush2.msra.mxu0 0.0
        %990 = vmatprep.subr.mxu0 0.0
        %991 = vmatpush2.msra.mxu0 0.0
        %992 = vmatprep.subr.mxu0 0.0
        %993 = vmatpush2.msra.mxu0 0.0
        %994 = vmatprep.subr.mxu0 0.0
        %995 = vmatpush2.msra.mxu0 0.0
        %996 = vmatprep.subr.mxu0 0.0
        %997 = vmatpush2.msra.mxu0 0.0
        %998 = vmatprep.mubr.f32.mxu0 0.0
        %999 = vmatmul.mubr.f32.gmra.mxu0 %v923
        %v1000 = vpop.f32.mrf.mxu0
        %v1001 = vadd.f32 0.0, %v1000
        %v1002 = vpop.f32.mrf.mxu0
        %1003 = vmatprep.mubr.f32.mxu0 0.0
        %1004 = vmatmul.mubr.f32.gmra.mxu0 %v926
        %v1005 = vpop.f32.mrf.mxu0
        %v1006 = vadd.f32 0.0, %v1005
        %v1007 = vpop.f32.mrf.mxu0
        %1008 = vmatprep.mubr.f32.mxu0 0.0
        %1009 = vmatmul.mubr.f32.gmra.mxu0 %v929
        %v1010 = vpop.f32.mrf.mxu0
        %v1011 = vadd.f32 0.0, %v1010
        %v1012 = vpop.f32.mrf.mxu0
        %1013 = vmatprep.mubr.f32.mxu0 0.0
        %1014 = vmatmul.mubr.f32.gmra.mxu0 %v932
        %v1015 = vpop.f32.mrf.mxu0
        %v1016 = vadd.f32 0.0, %v1015
        %v1017 = vpop.f32.mrf.mxu0
        %1018 = vdwg.mxu0
        %1019 = vxpose.xlu0.b32.start [1/16] %v888, 128
        %1020 = vxpose.xlu0.b32.cont [2/16] 0.0, 128
        %1021 = vxpose.xlu0.b32.cont [3/16] 0.0, 128
        %1022 = vxpose.xlu0.b32.cont [4/16] 0.0, 128
        %1023 = vxpose.xlu0.b32.cont [5/16] 0.0, 128
        %1024 = vxpose.xlu0.b32.cont [6/16] 0.0, 128
        %1025 = vxpose.xlu0.b32.cont [7/16] 0.0, 128
        %1026 = vxpose.xlu0.b32.cont [8/16] 0.0, 128
        %1027 = vxpose.xlu0.b32.cont [9/16] 0.0, 128
        %1028 = vxpose.xlu0.b32.cont [10/16] 0.0, 128
        %1029 = vxpose.xlu0.b32.cont [11/16] 0.0, 128
        %1030 = vxpose.xlu0.b32.cont [12/16] 0.0, 128
        %1031 = vxpose.xlu0.b32.cont [13/16] 0.0, 128
        %1032 = vxpose.xlu0.b32.cont [14/16] 0.0, 128
        %1033 = vxpose.xlu0.b32.cont [15/16] 0.0, 128
        %1034 = vxpose.xlu0.b32.end [16/16] 0.0, 128
        %v1035 = vpop.trf.xlu0
        %v1036 = vpop.trf.xlu0
        %v1037 = vpop.trf.xlu0
        %v1038 = vpop.trf.xlu0
        %v1039 = vpop.trf.xlu0
        %v1040 = vpop.trf.xlu0
        %v1041 = vpop.trf.xlu0
        %v1042 = vpop.trf.xlu0
        %v1043 = vpop.trf.xlu0
        %v1044 = vpop.trf.xlu0
        %v1045 = vpop.trf.xlu0
        %v1046 = vpop.trf.xlu0
        %v1047 = vpop.trf.xlu0
        %v1048 = vpop.trf.xlu0
        %v1049 = vpop.trf.xlu0
        %v1050 = vpop.trf.xlu0
        %v1052 = vsel %vm921, %v1035, 0
        %v1055 = vsel %vm921, %v1036, 0
        %v1058 = vsel %vm921, %v1037, 0
        %v1061 = vsel %vm921, %v1038, 0
        %1063 = vmatprep.subr.mxu0 0.0
        %1064 = vmatpush1.msra.mxu0 0.0
        %1065 = vmatprep.subr.mxu0 0.0
        %1066 = vmatpush1.msra.mxu0 0.0
        %1067 = vmatprep.subr.mxu0 0.0
        %1068 = vmatpush1.msra.mxu0 0.0
        %1069 = vmatprep.subr.mxu0 0.0
        %1070 = vmatpush1.msra.mxu0 0.0
        %1071 = vmatprep.subr.mxu0 0.0
        %1072 = vmatpush1.msra.mxu0 0.0
        %1073 = vmatprep.subr.mxu0 0.0
        %1074 = vmatpush1.msra.mxu0 0.0
        %1075 = vmatprep.subr.mxu0 0.0
        %1076 = vmatpush1.msra.mxu0 0.0
        %1077 = vmatprep.subr.mxu0 0.0
        %1078 = vmatpush1.msra.mxu0 0.0
        %1079 = vmatprep.subr.mxu0 0.0
        %1080 = vmatpush1.msra.mxu0 0.0
        %1081 = vmatprep.subr.mxu0 0.0
        %1082 = vmatpush1.msra.mxu0 0.0
        %1083 = vmatprep.subr.mxu0 0.0
        %1084 = vmatpush1.msra.mxu0 0.0
        %1085 = vmatprep.subr.mxu0 0.0
        %1086 = vmatpush1.msra.mxu0 0.0
        %1087 = vmatprep.subr.mxu0 0.0
        %1088 = vmatpush1.msra.mxu0 0.0
        %1089 = vmatprep.subr.mxu0 0.0
        %1090 = vmatpush1.msra.mxu0 0.0
        %1091 = vmatprep.subr.mxu0 0.0
        %1092 = vmatpush1.msra.mxu0 0.0
        %1093 = vmatprep.subr.mxu0 0.0
        %1094 = vmatpush1.msra.mxu0 %v866
        %1095 = vmatprep.subr.mxu0 0.0
        %1096 = vmatpush2.msra.mxu0 0.0
        %1097 = vmatprep.subr.mxu0 0.0
        %1098 = vmatpush2.msra.mxu0 0.0
        %1099 = vmatprep.subr.mxu0 0.0
        %1100 = vmatpush2.msra.mxu0 0.0
        %1101 = vmatprep.subr.mxu0 0.0
        %1102 = vmatpush2.msra.mxu0 0.0
        %1103 = vmatprep.subr.mxu0 0.0
        %1104 = vmatpush2.msra.mxu0 0.0
        %1105 = vmatprep.subr.mxu0 0.0
        %1106 = vmatpush2.msra.mxu0 0.0
        %1107 = vmatprep.subr.mxu0 0.0
        %1108 = vmatpush2.msra.mxu0 0.0
        %1109 = vmatprep.subr.mxu0 0.0
        %1110 = vmatpush2.msra.mxu0 0.0
        %1111 = vmatprep.subr.mxu0 0.0
        %1112 = vmatpush2.msra.mxu0 0.0
        %1113 = vmatprep.subr.mxu0 0.0
        %1114 = vmatpush2.msra.mxu0 0.0
        %1115 = vmatprep.subr.mxu0 0.0
        %1116 = vmatpush2.msra.mxu0 0.0
        %1117 = vmatprep.subr.mxu0 0.0
        %1118 = vmatpush2.msra.mxu0 0.0
        %1119 = vmatprep.subr.mxu0 0.0
        %1120 = vmatpush2.msra.mxu0 0.0
        %1121 = vmatprep.subr.mxu0 0.0
        %1122 = vmatpush2.msra.mxu0 0.0
        %1123 = vmatprep.subr.mxu0 0.0
        %1124 = vmatpush2.msra.mxu0 0.0
        %1125 = vmatprep.subr.mxu0 0.0
        %1126 = vmatpush2.msra.mxu0 0.0
        %1127 = vmatprep.mubr.f32.mxu0 0.0
        %1128 = vmatmul.mubr.f32.gmra.mxu0 %v1052
        %v1129 = vpop.f32.mrf.mxu0
        %v1130 = vadd.f32 0.0, %v1129
        %v1131 = vpop.f32.mrf.mxu0
        %1132 = vmatprep.mubr.f32.mxu0 0.0
        %1133 = vmatmul.mubr.f32.gmra.mxu0 %v1055
        %v1134 = vpop.f32.mrf.mxu0
        %v1135 = vadd.f32 0.0, %v1134
        %v1136 = vpop.f32.mrf.mxu0
        %1137 = vmatprep.mubr.f32.mxu0 0.0
        %1138 = vmatmul.mubr.f32.gmra.mxu0 %v1058
        %v1139 = vpop.f32.mrf.mxu0
        %v1140 = vadd.f32 0.0, %v1139
        %v1141 = vpop.f32.mrf.mxu0
        %1142 = vmatprep.mubr.f32.mxu0 0.0
        %1143 = vmatmul.mubr.f32.gmra.mxu0 %v1061
        %v1144 = vpop.f32.mrf.mxu0
        %v1145 = vadd.f32 0.0, %v1144
        %v1146 = vpop.f32.mrf.mxu0
        %1147 = vdwg.mxu0
        %v1148 = vsel %vm599, %v887, 0.0
        %v1149 = vrot.slane %v1148, 4
        %v1150 = vadd.f32 %v1148, %v1149
        %v1151 = vrot.slane %v1150, 2
        %v1152 = vadd.f32 %v1150, %v1151
        %v1153 = vrot.slane %v1152, 1
        %v1154 = vadd.f32 %v1152, %v1153
        %v1155 = vsel %vm599, %v888, 0.0
        %v1156 = vrot.slane %v1155, 4
        %v1157 = vadd.f32 %v1155, %v1156
        %v1158 = vrot.slane %v1157, 2
        %v1159 = vadd.f32 %v1157, %v1158
        %v1160 = vrot.slane %v1159, 1
        %v1161 = vadd.f32 %v1159, %v1160
        %v1162 = vld [vmem:[#allocation14] sm:$0xff]
        %v1163 = vld [vmem:[#allocation14 + $0x8] sm:$0xff]
        %v1164 = vld [vmem:[#allocation14 + $0x10] sm:$0xff]
        %v1165 = vld [vmem:[#allocation14 + $0x18] sm:$0xff]
        %v1166 = vmul.f32 %v1001, %v1162
        %v1167 = vmul.f32 %v1006, %v1163
        %v1168 = vmul.f32 %v1011, %v1164
        %v1169 = vmul.f32 %v1016, %v1165
        %v1170 = vmul.f32 %v1130, %v1162
        %v1171 = vmul.f32 %v1135, %v1163
        %v1172 = vmul.f32 %v1140, %v1164
        %v1173 = vmul.f32 %v1145, %v1165
        %1175 = vbcast.lane.b32.xlu0 %v1154, 256
        %v1176 = vpop.permute.xlu0 %1175
        %s1178 = sor.u32 256, 8
        %1179 = vbcast.lane.b32.xlu0 %v1154, %s1178
        %v1180 = vpop.permute.xlu0 %1179
        %s1182 = sor.u32 256, 16
        %1183 = vbcast.lane.b32.xlu0 %v1154, %s1182
        %v1184 = vpop.permute.xlu0 %1183
        %s1186 = sor.u32 256, 24
        %1187 = vbcast.lane.b32.xlu0 %v1154, %s1186
        %v1188 = vpop.permute.xlu0 %1187
        %1190 = vbcast.lane.b32.xlu0 %v1161, 256
        %v1191 = vpop.permute.xlu0 %1190
        %s1193 = sor.u32 256, 8
        %1194 = vbcast.lane.b32.xlu0 %v1161, %s1193
        %v1195 = vpop.permute.xlu0 %1194
        %s1197 = sor.u32 256, 16
        %1198 = vbcast.lane.b32.xlu0 %v1161, %s1197
        %v1199 = vpop.permute.xlu0 %1198
        %s1201 = sor.u32 256, 24
        %1202 = vbcast.lane.b32.xlu0 %v1161, %s1201
        %v1203 = vpop.permute.xlu0 %1202
        %v1204 = vmul.f32 %v1176, %v1162
        %v1205 = vmul.f32 %v1180, %v1163
        %v1206 = vmul.f32 %v1184, %v1164
        %v1207 = vmul.f32 %v1188, %v1165
        %v1208 = vmul.f32 %v1191, %v1162
        %v1209 = vmul.f32 %v1195, %v1163
        %v1210 = vmul.f32 %v1199, %v1164
        %v1211 = vmul.f32 %v1203, %v1165
        %v1213 = vsel %vm599, %v877, 0
        %1215 = vmatprep.subr.mxu0 0.0
        %1216 = vmatpush1.msra.mxu0 0.0
        %1217 = vmatprep.subr.mxu0 0.0
        %1218 = vmatpush1.msra.mxu0 0.0
        %1219 = vmatprep.subr.mxu0 0.0
        %1220 = vmatpush1.msra.mxu0 0.0
        %1221 = vmatprep.subr.mxu0 0.0
        %1222 = vmatpush1.msra.mxu0 0.0
        %1223 = vmatprep.subr.mxu0 0.0
        %1224 = vmatpush1.msra.mxu0 0.0
        %1225 = vmatprep.subr.mxu0 0.0
        %1226 = vmatpush1.msra.mxu0 0.0
        %1227 = vmatprep.subr.mxu0 0.0
        %1228 = vmatpush1.msra.mxu0 0.0
        %1229 = vmatprep.subr.mxu0 0.0
        %1230 = vmatpush1.msra.mxu0 0.0
        %1231 = vmatprep.subr.mxu0 0.0
        %1232 = vmatpush1.msra.mxu0 0.0
        %1233 = vmatprep.subr.mxu0 0.0
        %1234 = vmatpush1.msra.mxu0 0.0
        %1235 = vmatprep.subr.mxu0 0.0
        %1236 = vmatpush1.msra.mxu0 0.0
        %1237 = vmatprep.subr.mxu0 0.0
        %1238 = vmatpush1.msra.mxu0 0.0
        %1239 = vmatprep.subr.mxu0 0.0
        %1240 = vmatpush1.msra.mxu0 %v1169
        %1241 = vmatprep.subr.mxu0 0.0
        %1242 = vmatpush1.msra.mxu0 %v1168
        %1243 = vmatprep.subr.mxu0 0.0
        %1244 = vmatpush1.msra.mxu0 %v1167
        %1245 = vmatprep.subr.mxu0 0.0
        %1246 = vmatpush1.msra.mxu0 %v1166
        %1247 = vmatprep.subr.mxu0 0.0
        %1248 = vmatpush2.msra.mxu0 0.0
        %1249 = vmatprep.subr.mxu0 0.0
        %1250 = vmatpush2.msra.mxu0 0.0
        %1251 = vmatprep.subr.mxu0 0.0
        %1252 = vmatpush2.msra.mxu0 0.0
        %1253 = vmatprep.subr.mxu0 0.0
        %1254 = vmatpush2.msra.mxu0 0.0
        %1255 = vmatprep.subr.mxu0 0.0
        %1256 = vmatpush2.msra.mxu0 0.0
        %1257 = vmatprep.subr.mxu0 0.0
        %1258 = vmatpush2.msra.mxu0 0.0
        %1259 = vmatprep.subr.mxu0 0.0
        %1260 = vmatpush2.msra.mxu0 0.0
        %1261 = vmatprep.subr.mxu0 0.0
        %1262 = vmatpush2.msra.mxu0 0.0
        %1263 = vmatprep.subr.mxu0 0.0
        %1264 = vmatpush2.msra.mxu0 0.0
        %1265 = vmatprep.subr.mxu0 0.0
        %1266 = vmatpush2.msra.mxu0 0.0
        %1267 = vmatprep.subr.mxu0 0.0
        %1268 = vmatpush2.msra.mxu0 0.0
        %1269 = vmatprep.subr.mxu0 0.0
        %1270 = vmatpush2.msra.mxu0 0.0
        %1271 = vmatprep.subr.mxu0 0.0
        %1272 = vmatpush2.msra.mxu0 0.0
        %1273 = vmatprep.subr.mxu0 0.0
        %1274 = vmatpush2.msra.mxu0 0.0
        %1275 = vmatprep.subr.mxu0 0.0
        %1276 = vmatpush2.msra.mxu0 0.0
        %1277 = vmatprep.subr.mxu0 0.0
        %1278 = vmatpush2.msra.mxu0 0.0
        %1279 = vmatprep.mubr.f32.mxu0 0.0
        %1280 = vmatmul.mubr.f32.gmra.mxu0 %v1213
        %v1281 = vpop.f32.mrf.mxu0
        %v1282 = vadd.f32 0.0, %v1281
        %v1283 = vpop.f32.mrf.mxu0
        %1284 = vdwg.mxu0
        %v1286 = vsel %vm599, %v878, 0
        %1288 = vmatprep.subr.mxu0 0.0
        %1289 = vmatpush1.msra.mxu0 0.0
        %1290 = vmatprep.subr.mxu0 0.0
        %1291 = vmatpush1.msra.mxu0 0.0
        %1292 = vmatprep.subr.mxu0 0.0
        %1293 = vmatpush1.msra.mxu0 0.0
        %1294 = vmatprep.subr.mxu0 0.0
        %1295 = vmatpush1.msra.mxu0 0.0
        %1296 = vmatprep.subr.mxu0 0.0
        %1297 = vmatpush1.msra.mxu0 0.0
        %1298 = vmatprep.subr.mxu0 0.0
        %1299 = vmatpush1.msra.mxu0 0.0
        %1300 = vmatprep.subr.mxu0 0.0
        %1301 = vmatpush1.msra.mxu0 0.0
        %1302 = vmatprep.subr.mxu0 0.0
        %1303 = vmatpush1.msra.mxu0 0.0
        %1304 = vmatprep.subr.mxu0 0.0
        %1305 = vmatpush1.msra.mxu0 0.0
        %1306 = vmatprep.subr.mxu0 0.0
        %1307 = vmatpush1.msra.mxu0 0.0
        %1308 = vmatprep.subr.mxu0 0.0
        %1309 = vmatpush1.msra.mxu0 0.0
        %1310 = vmatprep.subr.mxu0 0.0
        %1311 = vmatpush1.msra.mxu0 0.0
        %1312 = vmatprep.subr.mxu0 0.0
        %1313 = vmatpush1.msra.mxu0 %v1173
        %1314 = vmatprep.subr.mxu0 0.0
        %1315 = vmatpush1.msra.mxu0 %v1172
        %1316 = vmatprep.subr.mxu0 0.0
        %1317 = vmatpush1.msra.mxu0 %v1171
        %1318 = vmatprep.subr.mxu0 0.0
        %1319 = vmatpush1.msra.mxu0 %v1170
        %1320 = vmatprep.subr.mxu0 0.0
        %1321 = vmatpush2.msra.mxu0 0.0
        %1322 = vmatprep.subr.mxu0 0.0
        %1323 = vmatpush2.msra.mxu0 0.0
        %1324 = vmatprep.subr.mxu0 0.0
        %1325 = vmatpush2.msra.mxu0 0.0
        %1326 = vmatprep.subr.mxu0 0.0
        %1327 = vmatpush2.msra.mxu0 0.0
        %1328 = vmatprep.subr.mxu0 0.0
        %1329 = vmatpush2.msra.mxu0 0.0
        %1330 = vmatprep.subr.mxu0 0.0
        %1331 = vmatpush2.msra.mxu0 0.0
        %1332 = vmatprep.subr.mxu0 0.0
        %1333 = vmatpush2.msra.mxu0 0.0
        %1334 = vmatprep.subr.mxu0 0.0
        %1335 = vmatpush2.msra.mxu0 0.0
        %1336 = vmatprep.subr.mxu0 0.0
        %1337 = vmatpush2.msra.mxu0 0.0
        %1338 = vmatprep.subr.mxu0 0.0
        %1339 = vmatpush2.msra.mxu0 0.0
        %1340 = vmatprep.subr.mxu0 0.0
        %1341 = vmatpush2.msra.mxu0 0.0
        %1342 = vmatprep.subr.mxu0 0.0
        %1343 = vmatpush2.msra.mxu0 0.0
        %1344 = vmatprep.subr.mxu0 0.0
        %1345 = vmatpush2.msra.mxu0 0.0
        %1346 = vmatprep.subr.mxu0 0.0
        %1347 = vmatpush2.msra.mxu0 0.0
        %1348 = vmatprep.subr.mxu0 0.0
        %1349 = vmatpush2.msra.mxu0 0.0
        %1350 = vmatprep.subr.mxu0 0.0
        %1351 = vmatpush2.msra.mxu0 0.0
        %1352 = vmatprep.mubr.f32.mxu0 0.0
        %1353 = vmatmul.mubr.f32.gmra.mxu0 %v1286
        %v1354 = vpop.f32.mrf.mxu0
        %v1355 = vadd.f32 0.0, %v1354
        %v1356 = vpop.f32.mrf.mxu0
        %1357 = vdwg.mxu0
        %1358 = vmatprep.subr.mxu0 0.0
        %1359 = vmatpush1.msra.mxu0 0.0
        %1360 = vmatprep.subr.mxu0 0.0
        %1361 = vmatpush1.msra.mxu0 0.0
        %1362 = vmatprep.subr.mxu0 0.0
        %1363 = vmatpush1.msra.mxu0 0.0
        %1364 = vmatprep.subr.mxu0 0.0
        %1365 = vmatpush1.msra.mxu0 0.0
        %1366 = vmatprep.subr.mxu0 0.0
        %1367 = vmatpush1.msra.mxu0 0.0
        %1368 = vmatprep.subr.mxu0 0.0
        %1369 = vmatpush1.msra.mxu0 0.0
        %1370 = vmatprep.subr.mxu0 0.0
        %1371 = vmatpush1.msra.mxu0 0.0
        %1372 = vmatprep.subr.mxu0 0.0
        %1373 = vmatpush1.msra.mxu0 0.0
        %1374 = vmatprep.subr.mxu0 0.0
        %1375 = vmatpush1.msra.mxu0 0.0
        %1376 = vmatprep.subr.mxu0 0.0
        %1377 = vmatpush1.msra.mxu0 0.0
        %1378 = vmatprep.subr.mxu0 0.0
        %1379 = vmatpush1.msra.mxu0 0.0
        %1380 = vmatprep.subr.mxu0 0.0
        %1381 = vmatpush1.msra.mxu0 0.0
        %1382 = vmatprep.subr.mxu0 0.0
        %1383 = vmatpush1.msra.mxu0 %v1207
        %1384 = vmatprep.subr.mxu0 0.0
        %1385 = vmatpush1.msra.mxu0 %v1206
        %1386 = vmatprep.subr.mxu0 0.0
        %1387 = vmatpush1.msra.mxu0 %v1205
        %1388 = vmatprep.subr.mxu0 0.0
        %1389 = vmatpush1.msra.mxu0 %v1204
        %1390 = vmatprep.subr.mxu0 0.0
        %1391 = vmatpush2.msra.mxu0 0.0
        %1392 = vmatprep.subr.mxu0 0.0
        %1393 = vmatpush2.msra.mxu0 0.0
        %1394 = vmatprep.subr.mxu0 0.0
        %1395 = vmatpush2.msra.mxu0 0.0
        %1396 = vmatprep.subr.mxu0 0.0
        %1397 = vmatpush2.msra.mxu0 0.0
        %1398 = vmatprep.subr.mxu0 0.0
        %1399 = vmatpush2.msra.mxu0 0.0
        %1400 = vmatprep.subr.mxu0 0.0
        %1401 = vmatpush2.msra.mxu0 0.0
        %1402 = vmatprep.subr.mxu0 0.0
        %1403 = vmatpush2.msra.mxu0 0.0
        %1404 = vmatprep.subr.mxu0 0.0
        %1405 = vmatpush2.msra.mxu0 0.0
        %1406 = vmatprep.subr.mxu0 0.0
        %1407 = vmatpush2.msra.mxu0 0.0
        %1408 = vmatprep.subr.mxu0 0.0
        %1409 = vmatpush2.msra.mxu0 0.0
        %1410 = vmatprep.subr.mxu0 0.0
        %1411 = vmatpush2.msra.mxu0 0.0
        %1412 = vmatprep.subr.mxu0 0.0
        %1413 = vmatpush2.msra.mxu0 0.0
        %1414 = vmatprep.subr.mxu0 0.0
        %1415 = vmatpush2.msra.mxu0 0.0
        %1416 = vmatprep.subr.mxu0 0.0
        %1417 = vmatpush2.msra.mxu0 0.0
        %1418 = vmatprep.subr.mxu0 0.0
        %1419 = vmatpush2.msra.mxu0 0.0
        %1420 = vmatprep.subr.mxu0 0.0
        %1421 = vmatpush2.msra.mxu0 0.0
        %1422 = vmatprep.mubr.f32.mxu0 0.0
        %1423 = vmatmul.mubr.f32.gmra.mxu0 %v1213
        %v1424 = vpop.f32.mrf.mxu0
        %v1425 = vadd.f32 1e-10, %v1424
        %v1426 = vpop.f32.mrf.mxu0
        %1427 = vdwg.mxu0
        %1428 = vmatprep.subr.mxu0 0.0
        %1429 = vmatpush1.msra.mxu0 0.0
        %1430 = vmatprep.subr.mxu0 0.0
        %1431 = vmatpush1.msra.mxu0 0.0
        %1432 = vmatprep.subr.mxu0 0.0
        %1433 = vmatpush1.msra.mxu0 0.0
        %1434 = vmatprep.subr.mxu0 0.0
        %1435 = vmatpush1.msra.mxu0 0.0
        %1436 = vmatprep.subr.mxu0 0.0
        %1437 = vmatpush1.msra.mxu0 0.0
        %1438 = vmatprep.subr.mxu0 0.0
        %1439 = vmatpush1.msra.mxu0 0.0
        %1440 = vmatprep.subr.mxu0 0.0
        %1441 = vmatpush1.msra.mxu0 0.0
        %1442 = vmatprep.subr.mxu0 0.0
        %1443 = vmatpush1.msra.mxu0 0.0
        %1444 = vmatprep.subr.mxu0 0.0
        %1445 = vmatpush1.msra.mxu0 0.0
        %1446 = vmatprep.subr.mxu0 0.0
        %1447 = vmatpush1.msra.mxu0 0.0
        %1448 = vmatprep.subr.mxu0 0.0
        %1449 = vmatpush1.msra.mxu0 0.0
        %1450 = vmatprep.subr.mxu0 0.0
        %1451 = vmatpush1.msra.mxu0 0.0
        %1452 = vmatprep.subr.mxu0 0.0
        %1453 = vmatpush1.msra.mxu0 %v1211
        %1454 = vmatprep.subr.mxu0 0.0
        %1455 = vmatpush1.msra.mxu0 %v1210
        %1456 = vmatprep.subr.mxu0 0.0
        %1457 = vmatpush1.msra.mxu0 %v1209
        %1458 = vmatprep.subr.mxu0 0.0
        %1459 = vmatpush1.msra.mxu0 %v1208
        %1460 = vmatprep.subr.mxu0 0.0
        %1461 = vmatpush2.msra.mxu0 0.0
        %1462 = vmatprep.subr.mxu0 0.0
        %1463 = vmatpush2.msra.mxu0 0.0
        %1464 = vmatprep.subr.mxu0 0.0
        %1465 = vmatpush2.msra.mxu0 0.0
        %1466 = vmatprep.subr.mxu0 0.0
        %1467 = vmatpush2.msra.mxu0 0.0
        %1468 = vmatprep.subr.mxu0 0.0
        %1469 = vmatpush2.msra.mxu0 0.0
        %1470 = vmatprep.subr.mxu0 0.0
        %1471 = vmatpush2.msra.mxu0 0.0
        %1472 = vmatprep.subr.mxu0 0.0
        %1473 = vmatpush2.msra.mxu0 0.0
        %1474 = vmatprep.subr.mxu0 0.0
        %1475 = vmatpush2.msra.mxu0 0.0
        %1476 = vmatprep.subr.mxu0 0.0
        %1477 = vmatpush2.msra.mxu0 0.0
        %1478 = vmatprep.subr.mxu0 0.0
        %1479 = vmatpush2.msra.mxu0 0.0
        %1480 = vmatprep.subr.mxu0 0.0
        %1481 = vmatpush2.msra.mxu0 0.0
        %1482 = vmatprep.subr.mxu0 0.0
        %1483 = vmatpush2.msra.mxu0 0.0
        %1484 = vmatprep.subr.mxu0 0.0
        %1485 = vmatpush2.msra.mxu0 0.0
        %1486 = vmatprep.subr.mxu0 0.0
        %1487 = vmatpush2.msra.mxu0 0.0
        %1488 = vmatprep.subr.mxu0 0.0
        %1489 = vmatpush2.msra.mxu0 0.0
        %1490 = vmatprep.subr.mxu0 0.0
        %1491 = vmatpush2.msra.mxu0 0.0
        %1492 = vmatprep.mubr.f32.mxu0 0.0
        %1493 = vmatmul.mubr.f32.gmra.mxu0 %v1286
        %v1494 = vpop.f32.mrf.mxu0
        %v1495 = vadd.f32 1e-10, %v1494
        %v1496 = vpop.f32.mrf.mxu0
        %1497 = vdwg.mxu0
        %v1498 = vrcp.pop %v1425
        %v1499 = vrcp.pop %v1495
        %v1500 = vmul.f32 %v1282, %v1498
        %v1501 = vmul.f32 %v1355, %v1499
        %v1502 = vld [vmem:[#allocation13] sm:$0xff]
        %v1503 = vld [vmem:[#allocation13 + $0x8] sm:$0xff]
        %v1504 = vld [vmem:[#allocation13 + $0x10] sm:$0xff]
        %v1505 = vld [vmem:[#allocation13 + $0x18] sm:$0xff]
        %v1506 = vld [vmem:[%s10] sm:$0x1]
        %v1508 = vlaneseq
        %v1509 = vshrl.u32 %v1508, 7
        %v1510 = vsub.s32 0, %v1509
        %v1511 = vrot.slane %v1506, %v1510
        %v1514 = vsel %vm599, %v1500, 0
        %v1517 = vsel %vm599, %v1501, 0
        %1519 = vmatprep.subr.mxu0 0.0
        %1520 = vmatpush1.msra.mxu0 0.0
        %1521 = vmatprep.subr.mxu0 0.0
        %1522 = vmatpush1.msra.mxu0 0.0
        %1523 = vmatprep.subr.mxu0 0.0
        %1524 = vmatpush1.msra.mxu0 0.0
        %1525 = vmatprep.subr.mxu0 0.0
        %1526 = vmatpush1.msra.mxu0 0.0
        %1527 = vmatprep.subr.mxu0 0.0
        %1528 = vmatpush1.msra.mxu0 0.0
        %1529 = vmatprep.subr.mxu0 0.0
        %1530 = vmatpush1.msra.mxu0 0.0
        %1531 = vmatprep.subr.mxu0 0.0
        %1532 = vmatpush1.msra.mxu0 0.0
        %1533 = vmatprep.subr.mxu0 0.0
        %1534 = vmatpush1.msra.mxu0 0.0
        %1535 = vmatprep.subr.mxu0 0.0
        %1536 = vmatpush1.msra.mxu0 0.0
        %1537 = vmatprep.subr.mxu0 0.0
        %1538 = vmatpush1.msra.mxu0 0.0
        %1539 = vmatprep.subr.mxu0 0.0
        %1540 = vmatpush1.msra.mxu0 0.0
        %1541 = vmatprep.subr.mxu0 0.0
        %1542 = vmatpush1.msra.mxu0 0.0
        %1543 = vmatprep.subr.mxu0 0.0
        %1544 = vmatpush1.msra.mxu0 %v1505
        %1545 = vmatprep.subr.mxu0 0.0
        %1546 = vmatpush1.msra.mxu0 %v1504
        %1547 = vmatprep.subr.mxu0 0.0
        %1548 = vmatpush1.msra.mxu0 %v1503
        %1549 = vmatprep.subr.mxu0 0.0
        %1550 = vmatpush1.msra.mxu0 %v1502
        %1551 = vmatprep.subr.mxu0 0.0
        %1552 = vmatpush2.msra.mxu0 0.0
        %1553 = vmatprep.subr.mxu0 0.0
        %1554 = vmatpush2.msra.mxu0 0.0
        %1555 = vmatprep.subr.mxu0 0.0
        %1556 = vmatpush2.msra.mxu0 0.0
        %1557 = vmatprep.subr.mxu0 0.0
        %1558 = vmatpush2.msra.mxu0 0.0
        %1559 = vmatprep.subr.mxu0 0.0
        %1560 = vmatpush2.msra.mxu0 0.0
        %1561 = vmatprep.subr.mxu0 0.0
        %1562 = vmatpush2.msra.mxu0 0.0
        %1563 = vmatprep.subr.mxu0 0.0
        %1564 = vmatpush2.msra.mxu0 0.0
        %1565 = vmatprep.subr.mxu0 0.0
        %1566 = vmatpush2.msra.mxu0 0.0
        %1567 = vmatprep.subr.mxu0 0.0
        %1568 = vmatpush2.msra.mxu0 0.0
        %1569 = vmatprep.subr.mxu0 0.0
        %1570 = vmatpush2.msra.mxu0 0.0
        %1571 = vmatprep.subr.mxu0 0.0
        %1572 = vmatpush2.msra.mxu0 0.0
        %1573 = vmatprep.subr.mxu0 0.0
        %1574 = vmatpush2.msra.mxu0 0.0
        %1575 = vmatprep.subr.mxu0 0.0
        %1576 = vmatpush2.msra.mxu0 0.0
        %1577 = vmatprep.subr.mxu0 0.0
        %1578 = vmatpush2.msra.mxu0 0.0
        %1579 = vmatprep.subr.mxu0 0.0
        %1580 = vmatpush2.msra.mxu0 0.0
        %1581 = vmatprep.subr.mxu0 0.0
        %1582 = vmatpush2.msra.mxu0 0.0
        %1583 = vmatprep.mubr.f32.mxu0 0.0
        %1584 = vmatmul.mubr.f32.gmra.mxu0 %v1514
        %v1585 = vpop.f32.mrf.mxu0
        %v1586 = vadd.f32 %v1511, %v1585
        %v1587 = vpop.f32.mrf.mxu0
        %1588 = vmatprep.mubr.f32.mxu0 0.0
        %1589 = vmatmul.mubr.f32.gmra.mxu0 %v1517
        %v1590 = vpop.f32.mrf.mxu0
        %v1591 = vadd.f32 %v1511, %v1590
        %v1592 = vpop.f32.mrf.mxu0
        %1593 = vdwg.mxu0
        %1594 = vst.msk [vmem:[%s581] sm:$0xff] %vm599, %v1586
        %1595 = vst.msk [vmem:[%s581 + $0x8] sm:$0xff] %vm599, %v1591
        %s1596 = sand.u32 %s310, 1
        %s1597 = scalar_lea.sflag [#allocation4], %s1596
        %s1598 = sand.u32 %s310, 1
        %s1599 = smul.addr %s1598, 16
        %s1600 = scalar_lea.vmem [#allocation16], %s1599
        // Predicated region
        $region101: #{tpu_custom_call.1} parent=67 // pred_check
          %p1601 = pneg %p320
        $region102: #{tpu_custom_call.1} parent=67 // pred_check_branch
          %1603 = sbr.rel (%p1601) target = $region104
        $region103: #{tpu_custom_call.1} parent=67 // pred_region
          %s1604 = smul.u32 2, %s35
          %s1606 = ssub.s32 256, 256
          %1607 = vsyncadd %s1597, %s1606
          %s1608 = smul.addr %s1604, 128
          %s1609 = scalar_lea.hbm %s12, %s1608
          %s1610 = sshll.u32 %s1600, 4
          %s1611 = int_to_ptr.vmem [resolvable:$true] %s1610
          %1616 = dma.vmem_to_hbm [thread:$0]  %s1611, 256, %s1609, %s1597, 128, 128, 8
        $region104: #{tpu_custom_call.1} parent=67 // pred_fallthru
          _
      $region68: #{tpu_custom_call.1} parent=5 // pred_fallthru
        _
      %p1617 = scmp.le.s32.totalorder 2, %s30
      // Predicated region
      $region105: #{tpu_custom_call.1} parent=5 // pred_check
        %p1618 = pneg %p1617
      $region106: #{tpu_custom_call.1} parent=5 // pred_check_branch
        %1620 = sbr.rel (%p1618) target = $region108
      $region107: #{tpu_custom_call.1} parent=5 // pred_region
        %s1621 = ssub.s32 %s30, 2
        // Predicated region
        $region109: #{tpu_custom_call.1} parent=107 // pred_check
          %p1622 = pneg %p326
        $region110: #{tpu_custom_call.1} parent=107 // pred_check_branch
          %1624 = sbr.rel (%p1622) target = $region112
        $region111: #{tpu_custom_call.1} parent=107 // pred_region
          %s1625 = sand.u32 %s311, 1
          %s1626 = scalar_lea.sflag [#allocation4], %s1625
          %s1627 = sand.u32 %s311, 1
          %s1628 = smul.addr %s1627, 16
          %s1629 = scalar_lea.vmem [#allocation16], %s1628
          %1630 = dma.done %s1626, 256
        $region112: #{tpu_custom_call.1} parent=107 // pred_fallthru
          _
      $region108: #{tpu_custom_call.1} parent=5 // pred_fallthru
        _
    $region6: #{tpu_custom_call.1} parent=1 // loop_footer
      %s34 = sadd.s32 1, %s30
    $region7: #{tpu_custom_call.1} parent=1 // loop_footer_branch
      %29 = sbr.rel target = $region3
    $region8: #{tpu_custom_call.1} parent=1 // loop_exit
      _
    %1631 = vsyncpa [#allocation3], 1
    %s1632 = scalar_lea.sflag [#allocation3], 1
    %1633 = vsyncpa %s1632, 1
    %1634 = vsyncpa [#allocation6], 1
    %s1635 = scalar_lea.sflag [#allocation6], 1
    %1636 = vsyncpa %s1635, 1
    %1637 = vsyncpa [#allocation9], 1
    %1638 = vsyncpa [#allocation12], 1
    %1639 = vsyncpa [#allocation15], 1
    %1640 = vsyncpa [#allocation4], 1
    %s1641 = scalar_lea.sflag [#allocation4], 1
    %1642 = vsyncpa %s1641, 1

</llo_original>
